<compile_context>
chip_gen: v7x
topology: tpu7x:2x2x1
jax: 0.10.0
libtpu: 0.0.40
codegen_flags: <defaults>
</compile_context>

<pallas_src>
import functools

import numpy as np
import jax
import jax.numpy as jnp
from jax.experimental import pallas as pl
from jax.experimental.pallas import tpu as pltpu


def _cdiv(a, b):
    return (a + b - 1) // b


def _round_up(a, b):
    return _cdiv(a, b) * b


def _gather_kernel(nb_start_ref, cnt_ref, idx_ref, x_ref, o_ref, acc_ref,
                   *, n_total, mask_tail):
    # nb_start_ref, cnt_ref : (num_k_tiles,) int32 in SMEM (scalar prefetch)
    # idx_ref : (1, tk) int32   -- this K-tile's (sorted) flat indices
    # x_ref   : (B, tn) values  -- one N-block of the flattened parameters
    # o_ref   : (B, tk)         -- gathered values for this K-tile
    # acc_ref : (B, tk) f32     -- accumulator scratch
    j = pl.program_id(0)          # K-tile (output axis, "parallel")
    s = pl.program_id(1)          # local step over this tile's N-block span

    @pl.when(s == 0)
    def _init():
        acc_ref[...] = jnp.zeros_like(acc_ref)

    @pl.when(s < cnt_ref[j])      # skip padding steps (span shorter than max span)
    def _accumulate():
        tn = x_ref.shape[-1]
        tk = idx_ref.shape[-1]
        col0 = (nb_start_ref[j] + s) * tn          # global flat offset of this block
        # One-hot ONLY for the current (tn, tk) tile, in LOCAL coordinates:
        # local targets are a (1, tk) subtract; indices belonging to other
        # blocks fall outside [0, tn) and compare false.  Exact 0/1 in x dtype.
        local_idx = idx_ref[...] - col0
        row_ids = jax.lax.broadcasted_iota(jnp.int32, (tn, tk), 0)
        onehot = (row_ids == local_idx).astype(x_ref.dtype)
        if mask_tail:
            # The last N-block may be partial: zero the out-of-range tail so
            # stale VMEM contents (possibly NaN) cannot leak through 0 * NaN.
            lane_ids = jax.lax.broadcasted_iota(jnp.int32, (1, tn), 1)
            xv = jnp.where(lane_ids < (n_total - col0), x_ref[...], 0)
        else:
            xv = x_ref[...]
        acc_ref[...] += jnp.dot(
            xv, onehot,
            preferred_element_type=jnp.float32,
            precision=jax.lax.Precision.HIGHEST,   # exact f32 gather
        )

    @pl.when(s == pl.num_programs(1) - 1)
    def _store():
        o_ref[...] = acc_ref[...].astype(o_ref.dtype)


def gather_sorted_static(x, rp_np, *, tn=512, tk=256):
    """out[b, k] = x[b, rp_np[k]] for a STATIC, SORTED numpy index vector.

    tn / tk are per-generation knobs: tk must stay a multiple of 128
    (lane-dense output), tn a multiple of 128 (x lane dim / MXU inner dim).
    """
    B, N = x.shape
    rp_np = np.asarray(rp_np, dtype=np.int32)
    K = int(rp_np.shape[0])
    assert K > 0 and int(rp_np.min()) >= 0 and int(rp_np.max()) < N, "gather index out of range"

    # Lane-dense output: pad K up to a multiple of tk with copies of the last
    # (largest) index; padded columns are sliced off below.
    tk = int(min(tk, _round_up(K, 128)))
    num_kt = _cdiv(K, tk)
    k_pad = num_kt * tk
    rp_pad = np.concatenate([rp_np, np.full((k_pad - K,), rp_np[-1], np.int32)])

    tn = int(min(tn, _round_up(N, 128)))
    n_blocks = _cdiv(N, tn)
    mask_tail = (N % tn) != 0                 # static: only mask when a partial block exists

    # Per-K-tile contiguous span of N-blocks that can contain its indices.
    tiles = rp_pad.reshape(num_kt, tk)        # rows stay sorted
    nb_start = (tiles[:, 0] // tn).astype(np.int32)
    nb_end = (tiles[:, -1] // tn).astype(np.int32)
    counts = (nb_end - nb_start + 1).astype(np.int32)
    max_steps = int(counts.max())
    assert int(nb_end.max()) < n_blocks

    idx2 = jnp.asarray(rp_pad).reshape(1, k_pad)

    grid_spec = pltpu.PrefetchScalarGridSpec(
        num_scalar_prefetch=2,
        grid=(num_kt, max_steps),             # reduction (N-step) axis innermost
        in_specs=[
            # this K-tile's indices (constant across s -> no re-DMA per step)
            pl.BlockSpec((1, tk), lambda j, s, nbs, cnt: (0, j)),
            # only visit N-blocks inside this tile's span; padding steps clamp
            # to the previously visited block (no re-DMA; accumulation is
            # gated off by pl.when in the kernel).
            pl.BlockSpec(
                (B, tn),
                lambda j, s, nbs, cnt: (0, nbs[j] + jnp.minimum(s, cnt[j] - 1)),
            ),
        ],
        out_specs=pl.BlockSpec((B, tk), lambda j, s, nbs, cnt: (0, j)),
        scratch_shapes=[pltpu.VMEM((B, tk), jnp.float32)],
    )

    out = pl.pallas_call(
        functools.partial(_gather_kernel, n_total=N, mask_tail=mask_tail),
        out_shape=jax.ShapeDtypeStruct((B, k_pad), x.dtype),
        grid_spec=grid_spec,
        compiler_params=pltpu.CompilerParams(
            # K-tile axis shards across TensorCores on multi-TC chips (v7x);
            # harmless on single-TC v5e/v6e.
            dimension_semantics=("parallel", "arbitrary"),
        ),
    )(jnp.asarray(nb_start), jnp.asarray(counts), idx2, x)
    return out[:, :K]


class ParamSelector:
    """JAX/Pallas port of detectability.utils.ParamSelector.

    Takes parameter shapes instead of a torch module; the per-parameter
    torch.randperm selection is reproduced with jax.random.permutation,
    deterministically seeded.  Indices are kept as host numpy so the Pallas
    wrapper can precompute the block-diagonal schedule at trace time.
    """

    def __init__(self, param_shapes, sz, frac, sparse_grad, seed):
        assert sparse_grad is False, "sparse_grad is hardcoded off (as in the original)"
        self.sz = sz
        self.frac = frac
        self.sparse_grad = sparse_grad

        key = jax.random.PRNGKey(seed)
        self.rps_np = []
        numels = []
        for shp in param_shapes:
            n = int(np.prod(shp))
            numels.append(n)
            key, sub = jax.random.split(key)
            k = max(self.sz, int(round(n * self.frac)))
            perm = np.asarray(jax.random.permutation(sub, n))[:k]
            self.rps_np.append(np.sort(perm).astype(np.int32))

        offsets = [0] + list(np.cumsum(numels)[:-1])
        self.rp_cat_np = np.concatenate(
            [rp + np.int32(int(o)) for rp, o in zip(self.rps_np, offsets)], axis=0
        ).astype(np.int32)

        self.rps = [jnp.asarray(rp) for rp in self.rps_np]
        self.rp_cat = jnp.asarray(self.rp_cat_np)
        self.sel_counts = [int(rp.shape[0]) for rp in self.rps_np]
        self.numels = numels
        self.total_numel = int(sum(numels))
        self.num_par = int(sum(self.sel_counts))
        self.frac_tot = self.num_par / self.total_numel
        # TODO(synk): the original __init__ prints a per-parameter usage table;
        # omitted here (host-side logging only, no compute).

    @staticmethod
    def extract(p, rp_np, single_grad=False):
        rp_np = np.asarray(rp_np)
        if not single_grad:
            pf = p.reshape(p.shape[0], -1)                 # flatten(start_dim=1)
            if pf.shape[1] == rp_np.shape[0]:
                return pf
            return gather_sorted_static(pf, rp_np)         # torch.gather(dim=1, index=rp.expand(B,-1))
        pf = p.reshape(-1)                                 # flatten()
        if pf.shape[0] == rp_np.shape[0]:
            return pf
        # B == 1: reuse the same Pallas kernel via a (1, N) view.  Data
        # movement dominates either way, and it avoids XLA's scalar-loop
        # gather emitter for constant index vectors.
        return gather_sorted_static(pf.reshape(1, -1), rp_np)[0]

    def forward(self, params, single_grad, flat_cat):
        if flat_cat:
            return self.extract(params, self.rp_cat_np, single_grad)
        # flat_cat=False: fuse all per-parameter gathers into a SINGLE kernel
        # call over rp_cat (avoids one tiny, lane-sparse pallas_call per
        # parameter) and split the result host-side.
        bounds = np.concatenate([[0], np.cumsum(self.sel_counts)]).astype(np.int64)
        if single_grad:
            flat = jnp.concatenate([p.reshape(-1) for p in params], axis=0)
            out = self.extract(flat, self.rp_cat_np, single_grad=True)
            return [out[int(a):int(b)] for a, b in zip(bounds[:-1], bounds[1:])]
        B = params[0].shape[0]
        flat = jnp.concatenate([p.reshape(B, -1) for p in params], axis=1)
        out = self.extract(flat, self.rp_cat_np, single_grad=False)
        return [out[:, int(a):int(b)] for a, b in zip(bounds[:-1], bounds[1:])]

    __call__ = forward


if __name__ == "__main__":
    # Synthetic "public model": two small linear layers (weights + biases).
    param_shapes = [(16, 32), (32,), (32, 8), (8,)]      # numels 512, 32, 256, 8 -> total 808
    selector = ParamSelector(param_shapes, sz=8, frac=0.25, sparse_grad=False, seed=0)
    # selected counts: 128, 8, 64, 8 -> K = 208

    key = jax.random.PRNGKey(0)
    B = 8
    total = selector.total_numel
    key, k1 = jax.random.split(key)
    flat_params = jax.random.normal(k1, (B, total), dtype=jnp.float32)

    # --- flat_cat=True, single_grad=False: batched gather over concatenated params ---
    out_flat = jax.block_until_ready(selector(flat_params, single_grad=False, flat_cat=True))
    ref_flat = jnp.take(flat_params, selector.rp_cat, axis=1)
    np.testing.assert_allclose(np.asarray(out_flat), np.asarray(ref_flat), rtol=1e-6, atol=1e-6)
    assert out_flat.shape == (B, selector.num_par)

    # --- flat_cat=False: per-parameter batched gradients [B, *param_shape] ---
    per_param, off = [], 0
    for shp in param_shapes:
        n = int(np.prod(shp))
        per_param.append(flat_params[:, off:off + n].reshape((B,) + shp))
        off += n
    outs = jax.block_until_ready(selector(per_param, single_grad=False, flat_cat=False))
    for o, p, rp in zip(outs, per_param, selector.rps):
        ref = jnp.take(p.reshape(B, -1), rp, axis=1)
        np.testing.assert_allclose(np.asarray(o), np.asarray(ref), rtol=1e-6, atol=1e-6)

    # --- flat_cat=True, single_grad=True: single flat gradient vector ---
    out_sg = jax.block_until_ready(selector(flat_params[0], single_grad=True, flat_cat=True))
    ref_sg = flat_params[0][selector.rp_cat]
    np.testing.assert_allclose(np.asarray(out_sg), np.asarray(ref_sg), rtol=1e-6, atol=1e-6)

    # --- flat_cat=False, single_grad=True ---
    outs_sg = jax.block_until_ready(selector([p[0] for p in per_param], single_grad=True, flat_cat=False))
    for o, p, rp in zip(outs_sg, per_param, selector.rps):
        ref = p[0].reshape(-1)[rp]
        np.testing.assert_allclose(np.asarray(o), np.asarray(ref), rtol=1e-6, atol=1e-6)

    print("KERNEL_OK")
</pallas_src>

<mosaic_0001>
module attributes {stable_mosaic.version = 11 : i64} {
  func.func @_gather_kernel(%arg0: i32, %arg1: i32, %arg2: memref<1xi32, #tpu.memory_space<smem>>, %arg3: memref<1xi32, #tpu.memory_space<smem>>, %arg4: memref<1x256xi32, #tpu.memory_space<vmem>>, %arg5: memref<8x512xf32, #tpu.memory_space<vmem>>, %arg6: memref<8x256xf32, #tpu.memory_space<vmem>>, %arg7: memref<8x256xf32, #tpu.memory_space<vmem>>) attributes {dimension_semantics = [#tpu.dimension_semantics<parallel>, #tpu.dimension_semantics<arbitrary>], iteration_bounds = array<i64: 1, 2>, scalar_prefetch = 2 : i64, scratch_operands = 1 : i64, tpu.core_type = #tpu.core_type<tc>, window_params = [{transform_indices = @transform_0, window_bounds = array<i64: 1, 256>}, {transform_indices = @transform_1, window_bounds = array<i64: 8, 512>}, {transform_indices = @transform_2, window_bounds = array<i64: 8, 256>}]} {
    %c0_i32 = arith.constant 0 : i32
    %0 = arith.cmpi eq, %arg1, %c0_i32 : i32
    %1 = arith.extui %0 : i1 to i32
    %c0_i32_0 = arith.constant 0 : i32
    %2 = arith.cmpi ne, %1, %c0_i32_0 : i32
    scf.if %2 {
      %cst = arith.constant 0.000000e+00 : f32
      %11 = vector.broadcast %cst : f32 to vector<8x256xf32>
      %c0 = arith.constant 0 : index
      %c0_3 = arith.constant 0 : index
      %12 = vector.load %arg7[%c0, %c0_3] : memref<8x256xf32, #tpu.memory_space<vmem>>, vector<8x256xf32>
      tpu.vector_store %arg7[%c0, %c0_3], %11 {strides = array<i32>} : memref<8x256xf32, #tpu.memory_space<vmem>>, vector<8x256xf32>,
    } else {
    }
    %3 = arith.index_cast %arg0 : i32 to index
    %4 = memref.load %arg3[%3] : memref<1xi32, #tpu.memory_space<smem>>
    %5 = arith.cmpi slt, %arg1, %4 : i32
    %6 = arith.extui %5 : i1 to i32
    %c0_i32_1 = arith.constant 0 : i32
    %7 = arith.cmpi ne, %6, %c0_i32_1 : i32
    scf.if %7 {
      %11 = arith.index_cast %arg0 : i32 to index
      %12 = memref.load %arg2[%11] : memref<1xi32, #tpu.memory_space<smem>>
      %13 = arith.addi %12, %arg1 : i32
      %c512_i32 = arith.constant 512 : i32
      %14 = arith.muli %13, %c512_i32 : i32
      %c0 = arith.constant 0 : index
      %c0_3 = arith.constant 0 : index
      %15 = vector.load %arg4[%c0, %c0_3] : memref<1x256xi32, #tpu.memory_space<vmem>>, vector<1x256xi32>
      %16 = vector.broadcast %14 : i32 to vector<1x256xi32>
      %17 = arith.subi %15, %16 : vector<1x256xi32>
      %18 = tpu.iota {dimensions = array<i32: 0>} : vector<512x256xi32>
      %19 = vector.broadcast %17 : vector<1x256xi32> to vector<512x256xi32>
      %20 = arith.cmpi eq, %18, %19 : vector<512x256xi32>
      %21 = arith.extui %20 : vector<512x256xi1> to vector<512x256xi32>
      %22 = arith.sitofp %21 : vector<512x256xi32> to vector<512x256xf32>
      %23 = tpu.iota {dimensions = array<i32: 1>} : vector<1x512xi32>
      %c808_i32 = arith.constant 808 : i32
      %24 = arith.subi %c808_i32, %14 : i32
      %25 = vector.broadcast %24 : i32 to vector<1x512xi32>
      %26 = arith.cmpi slt, %23, %25 : vector<1x512xi32>
      %c0_4 = arith.constant 0 : index
      %c0_5 = arith.constant 0 : index
      %27 = vector.load %arg5[%c0_4, %c0_5] : memref<8x512xf32, #tpu.memory_space<vmem>>, vector<8x512xf32>
      %c0_i32_6 = arith.constant 0 : i32
      %28 = arith.sitofp %c0_i32_6 : i32 to f32
      %29 = vector.shape_cast %26 : vector<1x512xi1> to vector<1x512xi1>
      %30 = vector.broadcast %29 : vector<1x512xi1> to vector<8x512xi1>
      %31 = vector.broadcast %28 : f32 to vector<8x512xf32>
      %32 = arith.select %30, %27, %31 : vector<8x512xi1>, vector<8x512xf32>
      %c0_7 = arith.constant 0 : index
      %c0_8 = arith.constant 0 : index
      %33 = vector.load %arg7[%c0_7, %c0_8] : memref<8x256xf32, #tpu.memory_space<vmem>>, vector<8x256xf32>
      %cst = arith.constant dense<0.000000e+00> : vector<8x256xf32>
      %34 = tpu.matmul %32, %22, %cst {dimension_numbers = #tpu.dot_dimension_numbers<[1], [0], [0], [1], [0, 0, 1, 1], [], []>, precision = #tpu.contract_precision<fp32>} : vector<8x512xf32>, vector<512x256xf32>, vector<8x256xf32> -> vector<8x256xf32>
      %35 = arith.addf %33, %34 : vector<8x256xf32>
      %c0_9 = arith.constant 0 : index
      %c0_10 = arith.constant 0 : index
      %36 = vector.load %arg7[%c0_9, %c0_10] : memref<8x256xf32, #tpu.memory_space<vmem>>, vector<8x256xf32>
      tpu.vector_store %arg7[%c0_9, %c0_10], %35 {strides = array<i32>} : memref<8x256xf32, #tpu.memory_space<vmem>>, vector<8x256xf32>,
    } else {
    }
    %c1_i32 = arith.constant 1 : i32
    %8 = arith.cmpi eq, %arg1, %c1_i32 : i32
    %9 = arith.extui %8 : i1 to i32
    %c0_i32_2 = arith.constant 0 : i32
    %10 = arith.cmpi ne, %9, %c0_i32_2 : i32
    scf.if %10 {
      %c0 = arith.constant 0 : index
      %c0_3 = arith.constant 0 : index
      %11 = vector.load %arg7[%c0, %c0_3] : memref<8x256xf32, #tpu.memory_space<vmem>>, vector<8x256xf32>
      %c0_4 = arith.constant 0 : index
      %c0_5 = arith.constant 0 : index
      %12 = vector.load %arg6[%c0_4, %c0_5] : memref<8x256xf32, #tpu.memory_space<vmem>>, vector<8x256xf32>
      tpu.vector_store %arg6[%c0_4, %c0_5], %11 {strides = array<i32>} : memref<8x256xf32, #tpu.memory_space<vmem>>, vector<8x256xf32>,
    } else {
    }
    return
  }
  func.func @transform_0(%arg0: i32, %arg1: i32, %arg2: memref<1xi32, #tpu.memory_space<smem>>, %arg3: memref<1xi32, #tpu.memory_space<smem>>) -> (i32, i32) {
    %c0_i32 = arith.constant 0 : i32
    %c0_i32_0 = arith.constant 0 : i32
    return %c0_i32, %arg0 : i32, i32
  }
  func.func @transform_1(%arg0: i32, %arg1: i32, %arg2: memref<1xi32, #tpu.memory_space<smem>>, %arg3: memref<1xi32, #tpu.memory_space<smem>>) -> (i32, i32) {
    %0 = arith.index_cast %arg0 : i32 to index
    %1 = memref.load %arg2[%0] : memref<1xi32, #tpu.memory_space<smem>>
    %2 = arith.index_cast %arg0 : i32 to index
    %3 = memref.load %arg3[%2] : memref<1xi32, #tpu.memory_space<smem>>
    %c1_i32 = arith.constant 1 : i32
    %4 = arith.subi %3, %c1_i32 : i32
    %5 = arith.minsi %arg1, %4 : i32
    %6 = arith.addi %1, %5 : i32
    %c0_i32 = arith.constant 0 : i32
    %c0_i32_0 = arith.constant 0 : i32
    return %c0_i32, %6 : i32, i32
  }
  func.func @transform_2(%arg0: i32, %arg1: i32, %arg2: memref<1xi32, #tpu.memory_space<smem>>, %arg3: memref<1xi32, #tpu.memory_space<smem>>) -> (i32, i32) {
    %c0_i32 = arith.constant 0 : i32
    %c0_i32_0 = arith.constant 0 : i32
    return %c0_i32, %arg0 : i32, i32
  }
}

</mosaic_0001>

<llo_original>
// kernel: tpu_custom_call.1
$region0: #{tpu_custom_call.1}
  #allocation0 [shape = 'u32[]', space=smem, size = 0x4, offset = 0x4, fixed_abs, tag = 'smem constant byte address 0x4 - core index']
  #allocation1 [shape = 'u32[144,128]{1,0:T(1,128)}', space=vmem, size = 0x12000, scoped, tag = 'internal scratch']
  #allocation2 [shape = 'f32[8,256]{1,0:T(8,128)}', space=vmem, size = 0x2000, scoped, tag = 'scratch operand']
  #allocation3 [shape = 's32[1]{0}', space=sflag, size = 0x4, scoped, tag = 'scoped memory for tpu_custom_call.1']
  #allocation4 [shape = 's32[1]{0:T(128)S(6)}', space=smem, size = 0x200, scoped, tag = 'prefetched SMEM operand 0']
  #allocation5 [shape = 's32[1]{0:T(128)S(6)}', space=smem, size = 0x200, scoped, tag = 'prefetched SMEM operand 1']
  %s0 = inlined_call_operand.<no memory space> [shape: s32[1], index: 0, kind: input, shape index: {}]
  %s1 = inlined_call_operand.<no memory space> [shape: s32[1], index: 1, kind: input, shape index: {}]
  %s2 = inlined_call_operand.vmem [shape: s32[1,256], index: 2, kind: input, shape index: {}]
  %s3 = inlined_call_operand.hbm [shape: f32[8,808], index: 3, kind: input, shape index: {}]
  %s4 = inlined_call_operand.hbm [shape: f32[8,256], index: 4, kind: output, shape index: {}]
  %s5 = sld [smem:[#allocation0]]
  $region57: #{tpu_custom_call.1} parent=0
    _
  %s7 = ssub.s32 1, %s5
  %s8 = scalar_select 0, %s7, %s5
  %9 = sst [smem:[#allocation4]] %s0
  %10 = sst [smem:[#allocation5]] %s1
  $region1: #{tpu_custom_call.1} parent=0
    #allocation6 [shape = 'u8[32768]{0}', space=vmem, size = 0x8000, scoped, tag = 'input window, operand 3']
    #allocation7 [shape = 's32[2]{0}', space=sflag, size = 0x8, scoped, tag = 'scoped memory for tpu_custom_call.1']
    #allocation8 [shape = 's32[2]{0}', space=sflag, size = 0x8, scoped, tag = 'scoped memory for tpu_custom_call.1']
    #allocation9 [shape = 'u8[8192]{0}', space=vmem, size = 0x2000, scoped, tag = 'output window, operand 0, single buffered']
    %11 = vsyncpa [#allocation7], 0
    %s12 = scalar_lea.sflag [#allocation7], 1
    %13 = vsyncpa %s12, 0
    %14 = vsyncpa [#allocation8], 0
    loop: start=0, step=1, limit=4
    $region2: #{tpu_custom_call.1} parent=1 // loop_pre_header
      _
    $region3: #{tpu_custom_call.1} parent=1 // loop_header
      %s16 = sphi 0, %s20
      %p17 = scmp.ge.s32.totalorder %s16, 4
      %s23 = sphi 0, %s35
      %s24 = sphi 0, %s31
      %s25 = sphi 0, %s23
      %s26 = sphi 0, %s24
      %s27 = sphi 0, %s25
      %s28 = sphi 0, %s26
      %s38 = sphi 0, %s40
      %s41 = sphi 0, %s38
      %s42 = sphi 0, %s41
      %s58 = sphi 0, %s42
      %s76 = sphi 0, %s78
      %s79 = sphi 0, %s76
      %s80 = sphi 0, %s79
      %s96 = sphi 0, %s80
      %s102 = sphi 0, %s104
      %s105 = sphi 0, %s102
      %s106 = sphi 0, %s105
      %s122 = sphi 0, %s106
    $region4: #{tpu_custom_call.1} parent=1 // loop_header_branch
      %19 = sbr.rel (%p17) target = $region8
    $region5: #{tpu_custom_call.1} parent=1 // loop_body
      %s21 = ssub.s32 %s16, 1
      %s22 = ssub.s32 %s16, 2
      %s29 = sadd.s32 1, %s24
      %p30 = scmp.ge.s32.totalorder %s29, 2
      %s31 = scalar_select %p30, 0, %s29
      %s32 = sadd.s32 1, %s23
      %s33 = scalar_select %p30, %s32, %s23
      %p34 = scmp.ge.s32.totalorder %s33, 1
      %s35 = scalar_select %p34, 0, %s33
      %s36 = ssub.s32 %s23, %s35
      %p37 = scmp.eq.s32.totalorder %s36, 0
      %s39 = sadd.s32 %s38, 1
      %s40 = scalar_select %p37, %s38, %s39
      %p43 = pneg %p37
      %p44 = scmp.eq.s32.totalorder %s16, 1
      %p45 = por %p43, %p44
      %p46 = scmp.ne.s32.totalorder %s38, %s41
      %p47 = scmp.eq.s32.totalorder %s16, 0
      %p48 = por %p46, %p47
      %p49 = scmp.ne.s32.totalorder %s38, %s41
      %p50 = scmp.eq.s32.totalorder %s21, 1
      %p51 = por %p49, %p50
      %p52 = scmp.ne.s32.totalorder %s41, %s42
      %p53 = scmp.eq.s32.totalorder %s21, 0
      %p54 = por %p52, %p53
      %p55 = scmp.ne.s32.totalorder %s41, %s42
      %p56 = scmp.eq.s32.totalorder %s22, 1
      %p57 = por %p55, %p56
      %p59 = scmp.ne.s32.totalorder %s42, %s58
      %p60 = scmp.eq.s32.totalorder %s22, 0
      %p61 = por %p59, %p60
      %s62 = sld [smem:[#allocation4 + %s23]]
      %s63 = sld [smem:[#allocation5 + %s23]]
      %s64 = ssub.s32 %s63, 1
      %p65 = scmp.lt.s32.totalorder %s24, %s64
      %s66 = scalar_select %p65, %s24, %s64
      %s67 = sadd.s32 %s62, %s66
      %s68 = sld [smem:[#allocation4 + %s35]]
      %s69 = sld [smem:[#allocation5 + %s35]]
      %s70 = ssub.s32 %s69, 1
      %p71 = scmp.lt.s32.totalorder %s31, %s70
      %s72 = scalar_select %p71, %s31, %s70
      %s73 = sadd.s32 %s68, %s72
      %s74 = ssub.s32 %s67, %s73
      %p75 = scmp.eq.s32.totalorder %s74, 0
      %s77 = sadd.s32 %s76, 1
      %s78 = scalar_select %p75, %s76, %s77
      %p81 = pneg %p75
      %p82 = scmp.eq.s32.totalorder %s16, 1
      %p83 = por %p81, %p82
      %p84 = scmp.ne.s32.totalorder %s76, %s79
      %p85 = scmp.eq.s32.totalorder %s16, 0
      %p86 = por %p84, %p85
      %p87 = scmp.ne.s32.totalorder %s76, %s79
      %p88 = scmp.eq.s32.totalorder %s21, 1
      %p89 = por %p87, %p88
      %p90 = scmp.ne.s32.totalorder %s79, %s80
      %p91 = scmp.eq.s32.totalorder %s21, 0
      %p92 = por %p90, %p91
      %p93 = scmp.ne.s32.totalorder %s79, %s80
      %p94 = scmp.eq.s32.totalorder %s22, 1
      %p95 = por %p93, %p94
      %p97 = scmp.ne.s32.totalorder %s80, %s96
      %p98 = scmp.eq.s32.totalorder %s22, 0
      %p99 = por %p97, %p98
      %s100 = ssub.s32 %s23, %s35
      %p101 = scmp.eq.s32.totalorder %s100, 0
      %s103 = sadd.s32 %s102, 1
      %s104 = scalar_select %p101, %s102, %s103
      %p107 = pneg %p101
      %p108 = scmp.eq.s32.totalorder %s16, 1
      %p109 = por %p107, %p108
      %p110 = scmp.ne.s32.totalorder %s102, %s105
      %p111 = scmp.eq.s32.totalorder %s16, 0
      %p112 = por %p110, %p111
      %p113 = scmp.ne.s32.totalorder %s102, %s105
      %p114 = scmp.eq.s32.totalorder %s21, 1
      %p115 = por %p113, %p114
      %p116 = scmp.ne.s32.totalorder %s105, %s106
      %p117 = scmp.eq.s32.totalorder %s21, 0
      %p118 = por %p116, %p117
      %p119 = scmp.ne.s32.totalorder %s105, %s106
      %p120 = scmp.eq.s32.totalorder %s22, 1
      %p121 = por %p119, %p120
      %p123 = scmp.ne.s32.totalorder %s106, %s122
      %p124 = scmp.eq.s32.totalorder %s22, 0
      %p125 = por %p123, %p124
      %p126 = scmp.le.s32.totalorder 1, %s16
      %p127 = scmp.lt.s32.totalorder %s16, 3
      %p128 = pnand %p126, %p127
      %p129 = pneg %p128
      // Predicated region
      $region9: #{tpu_custom_call.1} parent=5 // pred_check
        _
      $region10: #{tpu_custom_call.1} parent=5 // pred_check_branch
        %131 = sbr.rel (%p128) target = $region12
      $region11: #{tpu_custom_call.1} parent=5 // pred_region
        %s132 = ssub.s32 %s16, 1
        // Predicated region
        $region13: #{tpu_custom_call.1} parent=11 // pred_check
          %p133 = pneg %p54
        $region14: #{tpu_custom_call.1} parent=11 // pred_check_branch
          %135 = sbr.rel (%p133) target = $region16
        $region15: #{tpu_custom_call.1} parent=11 // pred_region
          %s136 = smul.u32 2, %s25
          %p137 = scmp.lt.s32.totalorder %s136, 1
          %s138 = scalar_select %p137, %s136, 1
          %s139 = scalar_lea.vmem %s2, %s138
          %s140 = smul.u32 2, %s25
        $region16: #{tpu_custom_call.1} parent=11 // pred_fallthru
          _
      $region12: #{tpu_custom_call.1} parent=5 // pred_fallthru
        _
      %p141 = scmp.lt.s32.totalorder %s16, 2
      // Predicated region
      $region17: #{tpu_custom_call.1} parent=5 // pred_check
        %p142 = pneg %p141
      $region18: #{tpu_custom_call.1} parent=5 // pred_check_branch
        %144 = sbr.rel (%p142) target = $region20
      $region19: #{tpu_custom_call.1} parent=5 // pred_region
        // Predicated region
        $region21: #{tpu_custom_call.1} parent=19 // pred_check
          %p145 = pneg %p86
        $region22: #{tpu_custom_call.1} parent=19 // pred_check_branch
          %147 = sbr.rel (%p145) target = $region24
        $region23: #{tpu_custom_call.1} parent=19 // pred_region
          %s148 = sand.u32 %s76, 1
          %s149 = scalar_lea.sflag [#allocation7], %s148
          %s150 = sand.u32 %s76, 1
          %s151 = smul.addr %s150, 32
          %s152 = scalar_lea.vmem [#allocation6], %s151
          %s153 = sld [smem:[#allocation4 + %s23]]
          %s154 = sld [smem:[#allocation5 + %s23]]
          %s155 = ssub.s32 %s154, 1
          %p156 = scmp.lt.s32.totalorder %s24, %s155
          %s157 = scalar_select %p156, %s24, %s155
          %s158 = sadd.s32 %s153, %s157
          %s159 = smul.u32 4, %s158
          %s160 = ssub.s32 7, %s159
          %p161 = scmp.lt.s32.totalorder %s160, 4
          %s162 = scalar_select %p161, %s160, 4
          %s163 = smul.u32 128, %s162
          %s165 = ssub.s32 512, %s163
          %166 = vsyncadd %s149, %s165
          %p167 = scmp.ne.s32.totalorder 0, %s163
          %s168 = smul.addr %s159, 128
          %s169 = scalar_lea.hbm %s3, %s168
          %s170 = smul.u32 %s162, 8
          %s171 = sshll.u32 %s170, 4
          %s172 = sshll.u32 %s152, 4
          %s173 = int_to_ptr.vmem [resolvable:$true] %s172
          %175 = dma.hbm_to_vmem [thread:$0]  (%p167), %s169, %s171, %s173, %s149
        $region24: #{tpu_custom_call.1} parent=19 // pred_fallthru
          _
      $region20: #{tpu_custom_call.1} parent=5 // pred_fallthru
        _
      %p176 = scmp.le.s32.totalorder 1, %s16
      %p177 = scmp.lt.s32.totalorder %s16, 3
      %p178 = pnand %p176, %p177
      %p179 = pneg %p178
      // Predicated region
      $region25: #{tpu_custom_call.1} parent=5 // pred_check
        _
      $region26: #{tpu_custom_call.1} parent=5 // pred_check_branch
        %181 = sbr.rel (%p178) target = $region28
      $region27: #{tpu_custom_call.1} parent=5 // pred_region
        %s182 = ssub.s32 %s16, 1
        %s183 = sand.u32 %s79, 1
        %s184 = scalar_lea.sflag [#allocation7], %s183
        %s185 = sand.u32 %s79, 1
        %s186 = smul.addr %s185, 32
        %s187 = scalar_lea.vmem [#allocation6], %s186
        // Predicated region
        $region29: #{tpu_custom_call.1} parent=27 // pred_check
          %p188 = pneg %p92
        $region30: #{tpu_custom_call.1} parent=27 // pred_check_branch
          %190 = sbr.rel (%p188) target = $region32
        $region31: #{tpu_custom_call.1} parent=27 // pred_region
          %191 = dma.done %s184, 512
        $region32: #{tpu_custom_call.1} parent=27 // pred_fallthru
          _
        %s192 = smul.u32 2, %s25
        %p193 = scmp.lt.s32.totalorder %s192, 1
        %s194 = scalar_select %p193, %s192, 1
        %s195 = scalar_lea.vmem %s2, %s194
        %p196 = pneg %p54
        %p197 = pneg %p51
        %s198 = sand.u32 %s79, 1
        %s199 = scalar_lea.sflag [#allocation7], %s198
        %s200 = sand.u32 %s79, 1
        %s201 = smul.addr %s200, 32
        %s202 = scalar_lea.vmem [#allocation6], %s201
        %p203 = pneg %p92
        %p204 = pneg %p89
        %p205 = pneg %p118
        %p206 = pneg %p115
        %s207 = smul.u32 2, %s25
        %p208 = scmp.lt.s32.totalorder %s207, 1
        %s209 = scalar_select %p208, %s207, 1
        %s210 = scalar_lea.vmem %s2, %s209
        %s211 = smul.u32 2, %s25
        %s212 = sld [smem:[#allocation4 + %s25]]
        %s213 = sld [smem:[#allocation5 + %s25]]
        %s214 = ssub.s32 %s213, 1
        %p215 = scmp.lt.s32.totalorder %s26, %s214
        %s216 = scalar_select %p215, %s26, %s214
        %s217 = sadd.s32 %s212, %s216
        %s218 = smul.u32 4, %s217
        %s219 = ssub.s32 7, %s218
        %p220 = scmp.lt.s32.totalorder %s219, 4
        %s221 = scalar_select %p220, %s219, 4
        %s222 = smul.u32 128, %s221
        %s223 = smul.u32 2, %s25
        %p224 = scmp.eq.s32.totalorder %s26, 0
        // Predicated region
        $region33: #{tpu_custom_call.1} parent=27 // pred_check
          %p225 = pneg %p224
        $region34: #{tpu_custom_call.1} parent=27 // pred_check_branch
          %227 = sbr.rel (%p225) target = $region36
        $region35: #{tpu_custom_call.1} parent=27 // pred_region
          %228 = vst [vmem:[#allocation2] sm:$0xff] 0.0
          %229 = vst [vmem:[#allocation2 + $0x8] sm:$0xff] 0.0
        $region36: #{tpu_custom_call.1} parent=27 // pred_fallthru
          _
        %s230 = sld [smem:[#allocation5 + %s25]]
        %p231 = scmp.lt.s32.totalorder %s26, %s230
        // Predicated region
        $region37: #{tpu_custom_call.1} parent=27 // pred_check
          %p232 = pneg %p231
        $region38: #{tpu_custom_call.1} parent=27 // pred_check_branch
          %234 = sbr.rel (%p232) target = $region40
        $region39: #{tpu_custom_call.1} parent=27 // pred_region
          %s235 = sld [smem:[#allocation4 + %s25]]
          %s236 = sadd.s32 %s235, %s26
          %s237 = smul.u32 %s236, 512
          %v238 = vld [vmem:[%s210] sm:$0x3]
          %v239 = vstv %s237
          %v240 = vsub.s32 %v238, %v239
          %v241 = vlaneseq
          %v242 = vshrl.u32 %v241, 7
          %v243 = vadd.s32 %v242, 8
          %v244 = vadd.s32 %v242, 16
          %v245 = vadd.s32 %v242, 24
          %v246 = vadd.s32 %v242, 32
          %v247 = vadd.s32 %v242, 40
          %v248 = vadd.s32 %v242, 48
          %v249 = vadd.s32 %v242, 56
          %v250 = vadd.s32 %v242, 64
          %v251 = vadd.s32 %v242, 72
          %v252 = vadd.s32 %v242, 80
          %v253 = vadd.s32 %v242, 88
          %v254 = vadd.s32 %v242, 96
          %v255 = vadd.s32 %v242, 104
          %v256 = vadd.s32 %v242, 112
          %v257 = vadd.s32 %v242, 120
          %v258 = vadd.s32 %v242, 128
          %v259 = vadd.s32 %v242, 136
          %v260 = vadd.s32 %v242, 144
          %v261 = vadd.s32 %v242, 152
          %v262 = vadd.s32 %v242, 160
          %v263 = vadd.s32 %v242, 168
          %v264 = vadd.s32 %v242, 176
          %v265 = vadd.s32 %v242, 184
          %v266 = vadd.s32 %v242, 192
          %v267 = vadd.s32 %v242, 200
          %v268 = vadd.s32 %v242, 208
          %v269 = vadd.s32 %v242, 216
          %v270 = vadd.s32 %v242, 224
          %v271 = vadd.s32 %v242, 232
          %v272 = vadd.s32 %v242, 240
          %v273 = vadd.s32 %v242, 248
          %v274 = vadd.s32 %v242, 256
          %v275 = vadd.s32 %v242, 264
          %v276 = vadd.s32 %v242, 272
          %v277 = vadd.s32 %v242, 280
          %v278 = vadd.s32 %v242, 288
          %v279 = vadd.s32 %v242, 296
          %v280 = vadd.s32 %v242, 304
          %v281 = vadd.s32 %v242, 312
          %v282 = vadd.s32 %v242, 320
          %v283 = vadd.s32 %v242, 328
          %v284 = vadd.s32 %v242, 336
          %v285 = vadd.s32 %v242, 344
          %v286 = vadd.s32 %v242, 352
          %v287 = vadd.s32 %v242, 360
          %v288 = vadd.s32 %v242, 368
          %v289 = vadd.s32 %v242, 376
          %v290 = vadd.s32 %v242, 384
          %v291 = vadd.s32 %v242, 392
          %v292 = vadd.s32 %v242, 400
          %v293 = vadd.s32 %v242, 408
          %v294 = vadd.s32 %v242, 416
          %v295 = vadd.s32 %v242, 424
          %v296 = vadd.s32 %v242, 432
          %v297 = vadd.s32 %v242, 440
          %v298 = vadd.s32 %v242, 448
          %v299 = vadd.s32 %v242, 456
          %v300 = vadd.s32 %v242, 464
          %v301 = vadd.s32 %v242, 472
          %v302 = vadd.s32 %v242, 480
          %v303 = vadd.s32 %v242, 488
          %v304 = vadd.s32 %v242, 496
          %v305 = vadd.s32 %v242, 504
          %v306 = vlaneseq
          %v307 = vshrl.u32 %v306, 7
          %v308 = vsub.s32 0, %v307
          %v309 = vrot.slane %v240, %v308
          %v310 = vlaneseq
          %v311 = vshrl.u32 %v310, 7
          %v312 = vsub.s32 1, %v311
          %v313 = vrot.slane %v240, %v312
          %vm314 = vcmp.eq.s32.totalorder %v242, %v309
          %vm315 = vcmp.eq.s32.totalorder %v242, %v313
          %vm316 = vcmp.eq.s32.totalorder %v243, %v309
          %vm317 = vcmp.eq.s32.totalorder %v243, %v313
          %vm318 = vcmp.eq.s32.totalorder %v244, %v309
          %vm319 = vcmp.eq.s32.totalorder %v244, %v313
          %vm320 = vcmp.eq.s32.totalorder %v245, %v309
          %vm321 = vcmp.eq.s32.totalorder %v245, %v313
          %vm322 = vcmp.eq.s32.totalorder %v246, %v309
          %vm323 = vcmp.eq.s32.totalorder %v246, %v313
          %vm324 = vcmp.eq.s32.totalorder %v247, %v309
          %vm325 = vcmp.eq.s32.totalorder %v247, %v313
          %vm326 = vcmp.eq.s32.totalorder %v248, %v309
          %vm327 = vcmp.eq.s32.totalorder %v248, %v313
          %vm328 = vcmp.eq.s32.totalorder %v249, %v309
          %vm329 = vcmp.eq.s32.totalorder %v249, %v313
          %vm330 = vcmp.eq.s32.totalorder %v250, %v309
          %vm331 = vcmp.eq.s32.totalorder %v250, %v313
          %vm332 = vcmp.eq.s32.totalorder %v251, %v309
          %vm333 = vcmp.eq.s32.totalorder %v251, %v313
          %vm334 = vcmp.eq.s32.totalorder %v252, %v309
          %vm335 = vcmp.eq.s32.totalorder %v252, %v313
          %vm336 = vcmp.eq.s32.totalorder %v253, %v309
          %vm337 = vcmp.eq.s32.totalorder %v253, %v313
          %vm338 = vcmp.eq.s32.totalorder %v254, %v309
          %vm339 = vcmp.eq.s32.totalorder %v254, %v313
          %vm340 = vcmp.eq.s32.totalorder %v255, %v309
          %vm341 = vcmp.eq.s32.totalorder %v255, %v313
          %vm342 = vcmp.eq.s32.totalorder %v256, %v309
          %vm343 = vcmp.eq.s32.totalorder %v256, %v313
          %vm344 = vcmp.eq.s32.totalorder %v257, %v309
          %vm345 = vcmp.eq.s32.totalorder %v257, %v313
          %vm346 = vcmp.eq.s32.totalorder %v258, %v309
          %vm347 = vcmp.eq.s32.totalorder %v258, %v313
          %vm348 = vcmp.eq.s32.totalorder %v259, %v309
          %vm349 = vcmp.eq.s32.totalorder %v259, %v313
          %vm350 = vcmp.eq.s32.totalorder %v260, %v309
          %vm351 = vcmp.eq.s32.totalorder %v260, %v313
          %vm352 = vcmp.eq.s32.totalorder %v261, %v309
          %vm353 = vcmp.eq.s32.totalorder %v261, %v313
          %vm354 = vcmp.eq.s32.totalorder %v262, %v309
          %vm355 = vcmp.eq.s32.totalorder %v262, %v313
          %vm356 = vcmp.eq.s32.totalorder %v263, %v309
          %vm357 = vcmp.eq.s32.totalorder %v263, %v313
          %vm358 = vcmp.eq.s32.totalorder %v264, %v309
          %vm359 = vcmp.eq.s32.totalorder %v264, %v313
          %vm360 = vcmp.eq.s32.totalorder %v265, %v309
          %vm361 = vcmp.eq.s32.totalorder %v265, %v313
          %vm362 = vcmp.eq.s32.totalorder %v266, %v309
          %vm363 = vcmp.eq.s32.totalorder %v266, %v313
          %vm364 = vcmp.eq.s32.totalorder %v267, %v309
          %vm365 = vcmp.eq.s32.totalorder %v267, %v313
          %vm366 = vcmp.eq.s32.totalorder %v268, %v309
          %vm367 = vcmp.eq.s32.totalorder %v268, %v313
          %vm368 = vcmp.eq.s32.totalorder %v269, %v309
          %vm369 = vcmp.eq.s32.totalorder %v269, %v313
          %vm370 = vcmp.eq.s32.totalorder %v270, %v309
          %vm371 = vcmp.eq.s32.totalorder %v270, %v313
          %vm372 = vcmp.eq.s32.totalorder %v271, %v309
          %vm373 = vcmp.eq.s32.totalorder %v271, %v313
          %vm374 = vcmp.eq.s32.totalorder %v272, %v309
          %vm375 = vcmp.eq.s32.totalorder %v272, %v313
          %vm376 = vcmp.eq.s32.totalorder %v273, %v309
          %vm377 = vcmp.eq.s32.totalorder %v273, %v313
          %vm378 = vcmp.eq.s32.totalorder %v274, %v309
          %vm379 = vcmp.eq.s32.totalorder %v274, %v313
          %vm380 = vcmp.eq.s32.totalorder %v275, %v309
          %vm381 = vcmp.eq.s32.totalorder %v275, %v313
          %vm382 = vcmp.eq.s32.totalorder %v276, %v309
          %vm383 = vcmp.eq.s32.totalorder %v276, %v313
          %vm384 = vcmp.eq.s32.totalorder %v277, %v309
          %vm385 = vcmp.eq.s32.totalorder %v277, %v313
          %vm386 = vcmp.eq.s32.totalorder %v278, %v309
          %vm387 = vcmp.eq.s32.totalorder %v278, %v313
          %vm388 = vcmp.eq.s32.totalorder %v279, %v309
          %vm389 = vcmp.eq.s32.totalorder %v279, %v313
          %vm390 = vcmp.eq.s32.totalorder %v280, %v309
          %vm391 = vcmp.eq.s32.totalorder %v280, %v313
          %vm392 = vcmp.eq.s32.totalorder %v281, %v309
          %vm393 = vcmp.eq.s32.totalorder %v281, %v313
          %vm394 = vcmp.eq.s32.totalorder %v282, %v309
          %vm395 = vcmp.eq.s32.totalorder %v282, %v313
          %vm396 = vcmp.eq.s32.totalorder %v283, %v309
          %vm397 = vcmp.eq.s32.totalorder %v283, %v313
          %vm398 = vcmp.eq.s32.totalorder %v284, %v309
          %vm399 = vcmp.eq.s32.totalorder %v284, %v313
          %vm400 = vcmp.eq.s32.totalorder %v285, %v309
          %vm401 = vcmp.eq.s32.totalorder %v285, %v313
          %vm402 = vcmp.eq.s32.totalorder %v286, %v309
          %vm403 = vcmp.eq.s32.totalorder %v286, %v313
          %vm404 = vcmp.eq.s32.totalorder %v287, %v309
          %vm405 = vcmp.eq.s32.totalorder %v287, %v313
          %vm406 = vcmp.eq.s32.totalorder %v288, %v309
          %vm407 = vcmp.eq.s32.totalorder %v288, %v313
          %vm408 = vcmp.eq.s32.totalorder %v289, %v309
          %vm409 = vcmp.eq.s32.totalorder %v289, %v313
          %vm410 = vcmp.eq.s32.totalorder %v290, %v309
          %vm411 = vcmp.eq.s32.totalorder %v290, %v313
          %vm412 = vcmp.eq.s32.totalorder %v291, %v309
          %vm413 = vcmp.eq.s32.totalorder %v291, %v313
          %vm414 = vcmp.eq.s32.totalorder %v292, %v309
          %vm415 = vcmp.eq.s32.totalorder %v292, %v313
          %vm416 = vcmp.eq.s32.totalorder %v293, %v309
          %vm417 = vcmp.eq.s32.totalorder %v293, %v313
          %vm418 = vcmp.eq.s32.totalorder %v294, %v309
          %vm419 = vcmp.eq.s32.totalorder %v294, %v313
          %vm420 = vcmp.eq.s32.totalorder %v295, %v309
          %vm421 = vcmp.eq.s32.totalorder %v295, %v313
          %vm422 = vcmp.eq.s32.totalorder %v296, %v309
          %vm423 = vcmp.eq.s32.totalorder %v296, %v313
          %vm424 = vcmp.eq.s32.totalorder %v297, %v309
          %vm425 = vcmp.eq.s32.totalorder %v297, %v313
          %vm426 = vcmp.eq.s32.totalorder %v298, %v309
          %vm427 = vcmp.eq.s32.totalorder %v298, %v313
          %vm428 = vcmp.eq.s32.totalorder %v299, %v309
          %vm429 = vcmp.eq.s32.totalorder %v299, %v313
          %vm430 = vcmp.eq.s32.totalorder %v300, %v309
          %vm431 = vcmp.eq.s32.totalorder %v300, %v313
          %vm432 = vcmp.eq.s32.totalorder %v301, %v309
          %vm433 = vcmp.eq.s32.totalorder %v301, %v313
          %vm434 = vcmp.eq.s32.totalorder %v302, %v309
          %vm435 = vcmp.eq.s32.totalorder %v302, %v313
          %vm436 = vcmp.eq.s32.totalorder %v303, %v309
          %vm437 = vcmp.eq.s32.totalorder %v303, %v313
          %vm438 = vcmp.eq.s32.totalorder %v304, %v309
          %vm439 = vcmp.eq.s32.totalorder %v304, %v313
          %vm440 = vcmp.eq.s32.totalorder %v305, %v309
          %vm441 = vcmp.eq.s32.totalorder %v305, %v313
          %v442 = vsel %vm314, 1, 0
          %v443 = vsel %vm315, 1, 0
          %v444 = vsel %vm316, 1, 0
          %v445 = vsel %vm317, 1, 0
          %v446 = vsel %vm318, 1, 0
          %v447 = vsel %vm319, 1, 0
          %v448 = vsel %vm320, 1, 0
          %v449 = vsel %vm321, 1, 0
          %v450 = vsel %vm322, 1, 0
          %v451 = vsel %vm323, 1, 0
          %v452 = vsel %vm324, 1, 0
          %v453 = vsel %vm325, 1, 0
          %v454 = vsel %vm326, 1, 0
          %v455 = vsel %vm327, 1, 0
          %v456 = vsel %vm328, 1, 0
          %v457 = vsel %vm329, 1, 0
          %v458 = vsel %vm330, 1, 0
          %v459 = vsel %vm331, 1, 0
          %v460 = vsel %vm332, 1, 0
          %v461 = vsel %vm333, 1, 0
          %v462 = vsel %vm334, 1, 0
          %v463 = vsel %vm335, 1, 0
          %v464 = vsel %vm336, 1, 0
          %v465 = vsel %vm337, 1, 0
          %v466 = vsel %vm338, 1, 0
          %v467 = vsel %vm339, 1, 0
          %v468 = vsel %vm340, 1, 0
          %v469 = vsel %vm341, 1, 0
          %v470 = vsel %vm342, 1, 0
          %v471 = vsel %vm343, 1, 0
          %v472 = vsel %vm344, 1, 0
          %v473 = vsel %vm345, 1, 0
          %v474 = vsel %vm346, 1, 0
          %v475 = vsel %vm347, 1, 0
          %v476 = vsel %vm348, 1, 0
          %v477 = vsel %vm349, 1, 0
          %v478 = vsel %vm350, 1, 0
          %v479 = vsel %vm351, 1, 0
          %v480 = vsel %vm352, 1, 0
          %v481 = vsel %vm353, 1, 0
          %v482 = vsel %vm354, 1, 0
          %v483 = vsel %vm355, 1, 0
          %v484 = vsel %vm356, 1, 0
          %v485 = vsel %vm357, 1, 0
          %v486 = vsel %vm358, 1, 0
          %v487 = vsel %vm359, 1, 0
          %v488 = vsel %vm360, 1, 0
          %v489 = vsel %vm361, 1, 0
          %v490 = vsel %vm362, 1, 0
          %v491 = vsel %vm363, 1, 0
          %v492 = vsel %vm364, 1, 0
          %v493 = vsel %vm365, 1, 0
          %v494 = vsel %vm366, 1, 0
          %v495 = vsel %vm367, 1, 0
          %v496 = vsel %vm368, 1, 0
          %v497 = vsel %vm369, 1, 0
          %v498 = vsel %vm370, 1, 0
          %v499 = vsel %vm371, 1, 0
          %v500 = vsel %vm372, 1, 0
          %v501 = vsel %vm373, 1, 0
          %v502 = vsel %vm374, 1, 0
          %v503 = vsel %vm375, 1, 0
          %v504 = vsel %vm376, 1, 0
          %v505 = vsel %vm377, 1, 0
          %v506 = vsel %vm378, 1, 0
          %v507 = vsel %vm379, 1, 0
          %v508 = vsel %vm380, 1, 0
          %v509 = vsel %vm381, 1, 0
          %v510 = vsel %vm382, 1, 0
          %v511 = vsel %vm383, 1, 0
          %v512 = vsel %vm384, 1, 0
          %v513 = vsel %vm385, 1, 0
          %v514 = vsel %vm386, 1, 0
          %v515 = vsel %vm387, 1, 0
          %v516 = vsel %vm388, 1, 0
          %v517 = vsel %vm389, 1, 0
          %v518 = vsel %vm390, 1, 0
          %v519 = vsel %vm391, 1, 0
          %v520 = vsel %vm392, 1, 0
          %v521 = vsel %vm393, 1, 0
          %v522 = vsel %vm394, 1, 0
          %v523 = vsel %vm395, 1, 0
          %v524 = vsel %vm396, 1, 0
          %v525 = vsel %vm397, 1, 0
          %v526 = vsel %vm398, 1, 0
          %v527 = vsel %vm399, 1, 0
          %v528 = vsel %vm400, 1, 0
          %v529 = vsel %vm401, 1, 0
          %v530 = vsel %vm402, 1, 0
          %v531 = vsel %vm403, 1, 0
          %v532 = vsel %vm404, 1, 0
          %v533 = vsel %vm405, 1, 0
          %v534 = vsel %vm406, 1, 0
          %v535 = vsel %vm407, 1, 0
          %v536 = vsel %vm408, 1, 0
          %v537 = vsel %vm409, 1, 0
          %v538 = vsel %vm410, 1, 0
          %v539 = vsel %vm411, 1, 0
          %v540 = vsel %vm412, 1, 0
          %v541 = vsel %vm413, 1, 0
          %v542 = vsel %vm414, 1, 0
          %v543 = vsel %vm415, 1, 0
          %v544 = vsel %vm416, 1, 0
          %v545 = vsel %vm417, 1, 0
          %v546 = vsel %vm418, 1, 0
          %v547 = vsel %vm419, 1, 0
          %v548 = vsel %vm420, 1, 0
          %v549 = vsel %vm421, 1, 0
          %v550 = vsel %vm422, 1, 0
          %v551 = vsel %vm423, 1, 0
          %v552 = vsel %vm424, 1, 0
          %v553 = vsel %vm425, 1, 0
          %v554 = vsel %vm426, 1, 0
          %v555 = vsel %vm427, 1, 0
          %v556 = vsel %vm428, 1, 0
          %v557 = vsel %vm429, 1, 0
          %v558 = vsel %vm430, 1, 0
          %v559 = vsel %vm431, 1, 0
          %v560 = vsel %vm432, 1, 0
          %v561 = vsel %vm433, 1, 0
          %v562 = vsel %vm434, 1, 0
          %v563 = vsel %vm435, 1, 0
          %v564 = vsel %vm436, 1, 0
          %v565 = vsel %vm437, 1, 0
          %v566 = vsel %vm438, 1, 0
          %v567 = vsel %vm439, 1, 0
          %v568 = vsel %vm440, 1, 0
          %v569 = vsel %vm441, 1, 0
          %v570 = vcvt.s32.f32 %v442
          %v571 = vcvt.s32.f32 %v443
          %v572 = vcvt.s32.f32 %v444
          %v573 = vcvt.s32.f32 %v445
          %v574 = vcvt.s32.f32 %v446
          %v575 = vcvt.s32.f32 %v447
          %v576 = vcvt.s32.f32 %v448
          %v577 = vcvt.s32.f32 %v449
          %v578 = vcvt.s32.f32 %v450
          %v579 = vcvt.s32.f32 %v451
          %v580 = vcvt.s32.f32 %v452
          %v581 = vcvt.s32.f32 %v453
          %v582 = vcvt.s32.f32 %v454
          %v583 = vcvt.s32.f32 %v455
          %v584 = vcvt.s32.f32 %v456
          %v585 = vcvt.s32.f32 %v457
          %v586 = vcvt.s32.f32 %v458
          %v587 = vcvt.s32.f32 %v459
          %v588 = vcvt.s32.f32 %v460
          %v589 = vcvt.s32.f32 %v461
          %v590 = vcvt.s32.f32 %v462
          %v591 = vcvt.s32.f32 %v463
          %v592 = vcvt.s32.f32 %v464
          %v593 = vcvt.s32.f32 %v465
          %v594 = vcvt.s32.f32 %v466
          %v595 = vcvt.s32.f32 %v467
          %v596 = vcvt.s32.f32 %v468
          %v597 = vcvt.s32.f32 %v469
          %v598 = vcvt.s32.f32 %v470
          %v599 = vcvt.s32.f32 %v471
          %v600 = vcvt.s32.f32 %v472
          %v601 = vcvt.s32.f32 %v473
          %v602 = vcvt.s32.f32 %v474
          %v603 = vcvt.s32.f32 %v475
          %v604 = vcvt.s32.f32 %v476
          %v605 = vcvt.s32.f32 %v477
          %v606 = vcvt.s32.f32 %v478
          %v607 = vcvt.s32.f32 %v479
          %v608 = vcvt.s32.f32 %v480
          %v609 = vcvt.s32.f32 %v481
          %v610 = vcvt.s32.f32 %v482
          %v611 = vcvt.s32.f32 %v483
          %v612 = vcvt.s32.f32 %v484
          %v613 = vcvt.s32.f32 %v485
          %v614 = vcvt.s32.f32 %v486
          %v615 = vcvt.s32.f32 %v487
          %v616 = vcvt.s32.f32 %v488
          %v617 = vcvt.s32.f32 %v489
          %v618 = vcvt.s32.f32 %v490
          %v619 = vcvt.s32.f32 %v491
          %v620 = vcvt.s32.f32 %v492
          %v621 = vcvt.s32.f32 %v493
          %v622 = vcvt.s32.f32 %v494
          %v623 = vcvt.s32.f32 %v495
          %v624 = vcvt.s32.f32 %v496
          %v625 = vcvt.s32.f32 %v497
          %v626 = vcvt.s32.f32 %v498
          %v627 = vcvt.s32.f32 %v499
          %v628 = vcvt.s32.f32 %v500
          %v629 = vcvt.s32.f32 %v501
          %v630 = vcvt.s32.f32 %v502
          %v631 = vcvt.s32.f32 %v503
          %v632 = vcvt.s32.f32 %v504
          %v633 = vcvt.s32.f32 %v505
          %v634 = vcvt.s32.f32 %v506
          %v635 = vcvt.s32.f32 %v507
          %v636 = vcvt.s32.f32 %v508
          %v637 = vcvt.s32.f32 %v509
          %v638 = vcvt.s32.f32 %v510
          %v639 = vcvt.s32.f32 %v511
          %v640 = vcvt.s32.f32 %v512
          %v641 = vcvt.s32.f32 %v513
          %v642 = vcvt.s32.f32 %v514
          %v643 = vcvt.s32.f32 %v515
          %v644 = vcvt.s32.f32 %v516
          %v645 = vcvt.s32.f32 %v517
          %v646 = vcvt.s32.f32 %v518
          %v647 = vcvt.s32.f32 %v519
          %v648 = vcvt.s32.f32 %v520
          %v649 = vcvt.s32.f32 %v521
          %v650 = vcvt.s32.f32 %v522
          %v651 = vcvt.s32.f32 %v523
          %v652 = vcvt.s32.f32 %v524
          %v653 = vcvt.s32.f32 %v525
          %v654 = vcvt.s32.f32 %v526
          %v655 = vcvt.s32.f32 %v527
          %v656 = vcvt.s32.f32 %v528
          %v657 = vcvt.s32.f32 %v529
          %v658 = vcvt.s32.f32 %v530
          %v659 = vcvt.s32.f32 %v531
          %v660 = vcvt.s32.f32 %v532
          %v661 = vcvt.s32.f32 %v533
          %v662 = vcvt.s32.f32 %v534
          %v663 = vcvt.s32.f32 %v535
          %v664 = vcvt.s32.f32 %v536
          %v665 = vcvt.s32.f32 %v537
          %v666 = vcvt.s32.f32 %v538
          %v667 = vcvt.s32.f32 %v539
          %v668 = vcvt.s32.f32 %v540
          %v669 = vcvt.s32.f32 %v541
          %v670 = vcvt.s32.f32 %v542
          %v671 = vcvt.s32.f32 %v543
          %v672 = vcvt.s32.f32 %v544
          %v673 = vcvt.s32.f32 %v545
          %v674 = vcvt.s32.f32 %v546
          %v675 = vcvt.s32.f32 %v547
          %v676 = vcvt.s32.f32 %v548
          %v677 = vcvt.s32.f32 %v549
          %v678 = vcvt.s32.f32 %v550
          %v679 = vcvt.s32.f32 %v551
          %v680 = vcvt.s32.f32 %v552
          %v681 = vcvt.s32.f32 %v553
          %v682 = vcvt.s32.f32 %v554
          %v683 = vcvt.s32.f32 %v555
          %v684 = vcvt.s32.f32 %v556
          %v685 = vcvt.s32.f32 %v557
          %v686 = vcvt.s32.f32 %v558
          %v687 = vcvt.s32.f32 %v559
          %v688 = vcvt.s32.f32 %v560
          %v689 = vcvt.s32.f32 %v561
          %v690 = vcvt.s32.f32 %v562
          %v691 = vcvt.s32.f32 %v563
          %v692 = vcvt.s32.f32 %v564
          %v693 = vcvt.s32.f32 %v565
          %v694 = vcvt.s32.f32 %v566
          %v695 = vcvt.s32.f32 %v567
          %v696 = vcvt.s32.f32 %v568
          %v697 = vcvt.s32.f32 %v569
          %v698 = vlaneseq
          %v699 = vand.u32 %v698, 127
          %v700 = vadd.s32 %v699, 128
          %v701 = vadd.s32 %v699, 256
          %v702 = vadd.s32 %v699, 384
          %s703 = ssub.s32 808, %s237
          %v704 = vstv %s703
          %vm705 = vcmp.lt.s32.totalorder %v699, %v704
          %vm706 = vcmp.lt.s32.totalorder %v700, %v704
          %vm707 = vcmp.lt.s32.totalorder %v701, %v704
          %vm708 = vcmp.lt.s32.totalorder %v702, %v704
          %v709 = vld [vmem:[%s187] sm:$0xff]
          %v710 = vld [vmem:[%s187 + $0x8] sm:$0xff]
          %v711 = vld [vmem:[%s187 + $0x10] sm:$0xff]
          %v712 = vld [vmem:[%s187 + $0x18] sm:$0xff]
          %v713 = vsel %vm705, 1, 0
          %v714 = vsel %vm706, 1, 0
          %v715 = vsel %vm707, 1, 0
          %v716 = vsel %vm708, 1, 0
          %vm717 = vcmp.eq.s32.totalorder %v713, 1
          %vm718 = vcmp.eq.s32.totalorder %v714, 1
          %vm719 = vcmp.eq.s32.totalorder %v715, 1
          %vm720 = vcmp.eq.s32.totalorder %v716, 1
          %v721 = vsel %vm717, %v709, 0.0
          %v722 = vsel %vm718, %v710, 0.0
          %v723 = vsel %vm719, %v711, 0.0
          %v724 = vsel %vm720, %v712, 0.0
          %v725 = vld [vmem:[#allocation2] sm:$0xff]
          %v726 = vld [vmem:[#allocation2 + $0x8] sm:$0xff]
          %v727 = vand.u32 %v571, 4294901760
          %728 = vmatprep.subr.mxu0 %v727
          %v729 = vand.u32 %v570, 4294901760
          %730 = vmatpush1.msra.mxu0 %v729
          %v731 = vand.u32 %v573, 4294901760
          %732 = vmatprep.subr.mxu0 %v731
          %v733 = vand.u32 %v572, 4294901760
          %734 = vmatpush1.msra.mxu0 %v733
          %v735 = vand.u32 %v575, 4294901760
          %736 = vmatprep.subr.mxu0 %v735
          %v737 = vand.u32 %v574, 4294901760
          %738 = vmatpush1.msra.mxu0 %v737
          %v739 = vand.u32 %v577, 4294901760
          %740 = vmatprep.subr.mxu0 %v739
          %v741 = vand.u32 %v576, 4294901760
          %742 = vmatpush1.msra.mxu0 %v741
          %v743 = vand.u32 %v579, 4294901760
          %744 = vmatprep.subr.mxu0 %v743
          %v745 = vand.u32 %v578, 4294901760
          %746 = vmatpush1.msra.mxu0 %v745
          %v747 = vand.u32 %v581, 4294901760
          %748 = vmatprep.subr.mxu0 %v747
          %v749 = vand.u32 %v580, 4294901760
          %750 = vmatpush1.msra.mxu0 %v749
          %v751 = vand.u32 %v583, 4294901760
          %752 = vmatprep.subr.mxu0 %v751
          %v753 = vand.u32 %v582, 4294901760
          %754 = vmatpush1.msra.mxu0 %v753
          %v755 = vand.u32 %v585, 4294901760
          %756 = vmatprep.subr.mxu0 %v755
          %v757 = vand.u32 %v584, 4294901760
          %758 = vmatpush1.msra.mxu0 %v757
          %v759 = vand.u32 %v587, 4294901760
          %760 = vmatprep.subr.mxu0 %v759
          %v761 = vand.u32 %v586, 4294901760
          %762 = vmatpush1.msra.mxu0 %v761
          %v763 = vand.u32 %v589, 4294901760
          %764 = vmatprep.subr.mxu0 %v763
          %v765 = vand.u32 %v588, 4294901760
          %766 = vmatpush1.msra.mxu0 %v765
          %v767 = vand.u32 %v591, 4294901760
          %768 = vmatprep.subr.mxu0 %v767
          %v769 = vand.u32 %v590, 4294901760
          %770 = vmatpush1.msra.mxu0 %v769
          %v771 = vand.u32 %v593, 4294901760
          %772 = vmatprep.subr.mxu0 %v771
          %v773 = vand.u32 %v592, 4294901760
          %774 = vmatpush1.msra.mxu0 %v773
          %v775 = vand.u32 %v595, 4294901760
          %776 = vmatprep.subr.mxu0 %v775
          %v777 = vand.u32 %v594, 4294901760
          %778 = vmatpush1.msra.mxu0 %v777
          %v779 = vand.u32 %v597, 4294901760
          %780 = vmatprep.subr.mxu0 %v779
          %v781 = vand.u32 %v596, 4294901760
          %782 = vmatpush1.msra.mxu0 %v781
          %v783 = vand.u32 %v599, 4294901760
          %784 = vmatprep.subr.mxu0 %v783
          %v785 = vand.u32 %v598, 4294901760
          %786 = vmatpush1.msra.mxu0 %v785
          %v787 = vand.u32 %v601, 4294901760
          %788 = vmatprep.subr.mxu0 %v787
          %v789 = vand.u32 %v600, 4294901760
          %790 = vmatpush1.msra.mxu0 %v789
          %v791 = vand.u32 %v603, 4294901760
          %792 = vmatprep.subr.mxu0 %v791
          %v793 = vand.u32 %v602, 4294901760
          %794 = vmatpush1.msra.mxu0 %v793
          %v795 = vand.u32 %v605, 4294901760
          %796 = vmatprep.subr.mxu0 %v795
          %v797 = vand.u32 %v604, 4294901760
          %798 = vmatpush1.msra.mxu0 %v797
          %v799 = vand.u32 %v607, 4294901760
          %800 = vmatprep.subr.mxu0 %v799
          %v801 = vand.u32 %v606, 4294901760
          %802 = vmatpush1.msra.mxu0 %v801
          %v803 = vand.u32 %v609, 4294901760
          %804 = vmatprep.subr.mxu0 %v803
          %v805 = vand.u32 %v608, 4294901760
          %806 = vmatpush1.msra.mxu0 %v805
          %v807 = vand.u32 %v611, 4294901760
          %808 = vmatprep.subr.mxu0 %v807
          %v809 = vand.u32 %v610, 4294901760
          %810 = vmatpush1.msra.mxu0 %v809
          %v811 = vand.u32 %v613, 4294901760
          %812 = vmatprep.subr.mxu0 %v811
          %v813 = vand.u32 %v612, 4294901760
          %814 = vmatpush1.msra.mxu0 %v813
          %v815 = vand.u32 %v615, 4294901760
          %816 = vmatprep.subr.mxu0 %v815
          %v817 = vand.u32 %v614, 4294901760
          %818 = vmatpush1.msra.mxu0 %v817
          %v819 = vand.u32 %v617, 4294901760
          %820 = vmatprep.subr.mxu0 %v819
          %v821 = vand.u32 %v616, 4294901760
          %822 = vmatpush1.msra.mxu0 %v821
          %v823 = vand.u32 %v619, 4294901760
          %824 = vmatprep.subr.mxu0 %v823
          %v825 = vand.u32 %v618, 4294901760
          %826 = vmatpush1.msra.mxu0 %v825
          %v827 = vand.u32 %v621, 4294901760
          %828 = vmatprep.subr.mxu0 %v827
          %v829 = vand.u32 %v620, 4294901760
          %830 = vmatpush1.msra.mxu0 %v829
          %v831 = vand.u32 %v623, 4294901760
          %832 = vmatprep.subr.mxu0 %v831
          %v833 = vand.u32 %v622, 4294901760
          %834 = vmatpush1.msra.mxu0 %v833
          %v835 = vand.u32 %v625, 4294901760
          %836 = vmatprep.subr.mxu0 %v835
          %v837 = vand.u32 %v624, 4294901760
          %838 = vmatpush1.msra.mxu0 %v837
          %v839 = vand.u32 %v627, 4294901760
          %840 = vmatprep.subr.mxu0 %v839
          %v841 = vand.u32 %v626, 4294901760
          %842 = vmatpush1.msra.mxu0 %v841
          %v843 = vand.u32 %v629, 4294901760
          %844 = vmatprep.subr.mxu0 %v843
          %v845 = vand.u32 %v628, 4294901760
          %846 = vmatpush1.msra.mxu0 %v845
          %v847 = vand.u32 %v631, 4294901760
          %848 = vmatprep.subr.mxu0 %v847
          %v849 = vand.u32 %v630, 4294901760
          %850 = vmatpush1.msra.mxu0 %v849
          %v851 = vand.u32 %v633, 4294901760
          %852 = vmatprep.subr.mxu0 %v851
          %v853 = vand.u32 %v632, 4294901760
          %854 = vmatpush1.msra.mxu0 %v853
          %v855 = vand.u32 %v722, 4294901760
          %v856 = vsub.f32 %v722, %v855
          %v857 = vand.u32 %v856, 4294901760
          %v858 = vsub.f32 %v856, %v857
          %v859 = vand.u32 %v858, 4294901760
          %860 = vmatprep.mubr.f32.mxu0 %v859
          %v861 = vand.u32 %v721, 4294901760
          %v862 = vsub.f32 %v721, %v861
          %v863 = vand.u32 %v862, 4294901760
          %v864 = vsub.f32 %v862, %v863
          %v865 = vand.u32 %v864, 4294901760
          %866 = vmatmul.mubr.f32.gmra.mrb[0].mxu0 %v865
          %v867 = vpop.f32.mrb[0].mxu0
          %v868 = vadd.f32 0.0, %v867
          %v869 = vpop.f32.mrb[0].mxu0
          %v870 = vadd.f32 0.0, %v869
          %871 = vdwg.mxu0
          %v872 = vand.u32 %v571, 4294901760
          %v873 = vsub.f32 %v571, %v872
          %v874 = vand.u32 %v873, 4294901760
          %v875 = vsub.f32 %v873, %v874
          %v876 = vand.u32 %v875, 4294901760
          %877 = vmatprep.subr.mxu0 %v876
          %v878 = vand.u32 %v570, 4294901760
          %v879 = vsub.f32 %v570, %v878
          %v880 = vand.u32 %v879, 4294901760
          %v881 = vsub.f32 %v879, %v880
          %v882 = vand.u32 %v881, 4294901760
          %883 = vmatpush1.msra.mxu0 %v882
          %v884 = vand.u32 %v573, 4294901760
          %v885 = vsub.f32 %v573, %v884
          %v886 = vand.u32 %v885, 4294901760
          %v887 = vsub.f32 %v885, %v886
          %v888 = vand.u32 %v887, 4294901760
          %889 = vmatprep.subr.mxu0 %v888
          %v890 = vand.u32 %v572, 4294901760
          %v891 = vsub.f32 %v572, %v890
          %v892 = vand.u32 %v891, 4294901760
          %v893 = vsub.f32 %v891, %v892
          %v894 = vand.u32 %v893, 4294901760
          %895 = vmatpush1.msra.mxu0 %v894
          %v896 = vand.u32 %v575, 4294901760
          %v897 = vsub.f32 %v575, %v896
          %v898 = vand.u32 %v897, 4294901760
          %v899 = vsub.f32 %v897, %v898
          %v900 = vand.u32 %v899, 4294901760
          %901 = vmatprep.subr.mxu0 %v900
          %v902 = vand.u32 %v574, 4294901760
          %v903 = vsub.f32 %v574, %v902
          %v904 = vand.u32 %v903, 4294901760
          %v905 = vsub.f32 %v903, %v904
          %v906 = vand.u32 %v905, 4294901760
          %907 = vmatpush1.msra.mxu0 %v906
          %v908 = vand.u32 %v577, 4294901760
          %v909 = vsub.f32 %v577, %v908
          %v910 = vand.u32 %v909, 4294901760
          %v911 = vsub.f32 %v909, %v910
          %v912 = vand.u32 %v911, 4294901760
          %913 = vmatprep.subr.mxu0 %v912
          %v914 = vand.u32 %v576, 4294901760
          %v915 = vsub.f32 %v576, %v914
          %v916 = vand.u32 %v915, 4294901760
          %v917 = vsub.f32 %v915, %v916
          %v918 = vand.u32 %v917, 4294901760
          %919 = vmatpush1.msra.mxu0 %v918
          %v920 = vand.u32 %v579, 4294901760
          %v921 = vsub.f32 %v579, %v920
          %v922 = vand.u32 %v921, 4294901760
          %v923 = vsub.f32 %v921, %v922
          %v924 = vand.u32 %v923, 4294901760
          %925 = vmatprep.subr.mxu0 %v924
          %v926 = vand.u32 %v578, 4294901760
          %v927 = vsub.f32 %v578, %v926
          %v928 = vand.u32 %v927, 4294901760
          %v929 = vsub.f32 %v927, %v928
          %v930 = vand.u32 %v929, 4294901760
          %931 = vmatpush1.msra.mxu0 %v930
          %v932 = vand.u32 %v581, 4294901760
          %v933 = vsub.f32 %v581, %v932
          %v934 = vand.u32 %v933, 4294901760
          %v935 = vsub.f32 %v933, %v934
          %v936 = vand.u32 %v935, 4294901760
          %937 = vmatprep.subr.mxu0 %v936
          %v938 = vand.u32 %v580, 4294901760
          %v939 = vsub.f32 %v580, %v938
          %v940 = vand.u32 %v939, 4294901760
          %v941 = vsub.f32 %v939, %v940
          %v942 = vand.u32 %v941, 4294901760
          %943 = vmatpush1.msra.mxu0 %v942
          %v944 = vand.u32 %v583, 4294901760
          %v945 = vsub.f32 %v583, %v944
          %v946 = vand.u32 %v945, 4294901760
          %v947 = vsub.f32 %v945, %v946
          %v948 = vand.u32 %v947, 4294901760
          %949 = vmatprep.subr.mxu0 %v948
          %v950 = vand.u32 %v582, 4294901760
          %v951 = vsub.f32 %v582, %v950
          %v952 = vand.u32 %v951, 4294901760
          %v953 = vsub.f32 %v951, %v952
          %v954 = vand.u32 %v953, 4294901760
          %955 = vmatpush1.msra.mxu0 %v954
          %v956 = vand.u32 %v585, 4294901760
          %v957 = vsub.f32 %v585, %v956
          %v958 = vand.u32 %v957, 4294901760
          %v959 = vsub.f32 %v957, %v958
          %v960 = vand.u32 %v959, 4294901760
          %961 = vmatprep.subr.mxu0 %v960
          %v962 = vand.u32 %v584, 4294901760
          %v963 = vsub.f32 %v584, %v962
          %v964 = vand.u32 %v963, 4294901760
          %v965 = vsub.f32 %v963, %v964
          %v966 = vand.u32 %v965, 4294901760
          %967 = vmatpush1.msra.mxu0 %v966
          %v968 = vand.u32 %v587, 4294901760
          %v969 = vsub.f32 %v587, %v968
          %v970 = vand.u32 %v969, 4294901760
          %v971 = vsub.f32 %v969, %v970
          %v972 = vand.u32 %v971, 4294901760
          %973 = vmatprep.subr.mxu0 %v972
          %v974 = vand.u32 %v586, 4294901760
          %v975 = vsub.f32 %v586, %v974
          %v976 = vand.u32 %v975, 4294901760
          %v977 = vsub.f32 %v975, %v976
          %v978 = vand.u32 %v977, 4294901760
          %979 = vmatpush1.msra.mxu0 %v978
          %v980 = vand.u32 %v589, 4294901760
          %v981 = vsub.f32 %v589, %v980
          %v982 = vand.u32 %v981, 4294901760
          %v983 = vsub.f32 %v981, %v982
          %v984 = vand.u32 %v983, 4294901760
          %985 = vmatprep.subr.mxu0 %v984
          %v986 = vand.u32 %v588, 4294901760
          %v987 = vsub.f32 %v588, %v986
          %v988 = vand.u32 %v987, 4294901760
          %v989 = vsub.f32 %v987, %v988
          %v990 = vand.u32 %v989, 4294901760
          %991 = vmatpush1.msra.mxu0 %v990
          %v992 = vand.u32 %v591, 4294901760
          %v993 = vsub.f32 %v591, %v992
          %v994 = vand.u32 %v993, 4294901760
          %v995 = vsub.f32 %v993, %v994
          %v996 = vand.u32 %v995, 4294901760
          %997 = vmatprep.subr.mxu0 %v996
          %v998 = vand.u32 %v590, 4294901760
          %v999 = vsub.f32 %v590, %v998
          %v1000 = vand.u32 %v999, 4294901760
          %v1001 = vsub.f32 %v999, %v1000
          %v1002 = vand.u32 %v1001, 4294901760
          %1003 = vmatpush1.msra.mxu0 %v1002
          %v1004 = vand.u32 %v593, 4294901760
          %v1005 = vsub.f32 %v593, %v1004
          %v1006 = vand.u32 %v1005, 4294901760
          %v1007 = vsub.f32 %v1005, %v1006
          %v1008 = vand.u32 %v1007, 4294901760
          %1009 = vmatprep.subr.mxu0 %v1008
          %v1010 = vand.u32 %v592, 4294901760
          %v1011 = vsub.f32 %v592, %v1010
          %v1012 = vand.u32 %v1011, 4294901760
          %v1013 = vsub.f32 %v1011, %v1012
          %v1014 = vand.u32 %v1013, 4294901760
          %1015 = vmatpush1.msra.mxu0 %v1014
          %v1016 = vand.u32 %v595, 4294901760
          %v1017 = vsub.f32 %v595, %v1016
          %v1018 = vand.u32 %v1017, 4294901760
          %v1019 = vsub.f32 %v1017, %v1018
          %v1020 = vand.u32 %v1019, 4294901760
          %1021 = vmatprep.subr.mxu0 %v1020
          %v1022 = vand.u32 %v594, 4294901760
          %v1023 = vsub.f32 %v594, %v1022
          %v1024 = vand.u32 %v1023, 4294901760
          %v1025 = vsub.f32 %v1023, %v1024
          %v1026 = vand.u32 %v1025, 4294901760
          %1027 = vmatpush1.msra.mxu0 %v1026
          %v1028 = vand.u32 %v597, 4294901760
          %v1029 = vsub.f32 %v597, %v1028
          %v1030 = vand.u32 %v1029, 4294901760
          %v1031 = vsub.f32 %v1029, %v1030
          %v1032 = vand.u32 %v1031, 4294901760
          %1033 = vmatprep.subr.mxu0 %v1032
          %v1034 = vand.u32 %v596, 4294901760
          %v1035 = vsub.f32 %v596, %v1034
          %v1036 = vand.u32 %v1035, 4294901760
          %v1037 = vsub.f32 %v1035, %v1036
          %v1038 = vand.u32 %v1037, 4294901760
          %1039 = vmatpush1.msra.mxu0 %v1038
          %v1040 = vand.u32 %v599, 4294901760
          %v1041 = vsub.f32 %v599, %v1040
          %v1042 = vand.u32 %v1041, 4294901760
          %v1043 = vsub.f32 %v1041, %v1042
          %v1044 = vand.u32 %v1043, 4294901760
          %1045 = vmatprep.subr.mxu0 %v1044
          %v1046 = vand.u32 %v598, 4294901760
          %v1047 = vsub.f32 %v598, %v1046
          %v1048 = vand.u32 %v1047, 4294901760
          %v1049 = vsub.f32 %v1047, %v1048
          %v1050 = vand.u32 %v1049, 4294901760
          %1051 = vmatpush1.msra.mxu0 %v1050
          %v1052 = vand.u32 %v601, 4294901760
          %v1053 = vsub.f32 %v601, %v1052
          %v1054 = vand.u32 %v1053, 4294901760
          %v1055 = vsub.f32 %v1053, %v1054
          %v1056 = vand.u32 %v1055, 4294901760
          %1057 = vmatprep.subr.mxu0 %v1056
          %v1058 = vand.u32 %v600, 4294901760
          %v1059 = vsub.f32 %v600, %v1058
          %v1060 = vand.u32 %v1059, 4294901760
          %v1061 = vsub.f32 %v1059, %v1060
          %v1062 = vand.u32 %v1061, 4294901760
          %1063 = vmatpush1.msra.mxu0 %v1062
          %v1064 = vand.u32 %v603, 4294901760
          %v1065 = vsub.f32 %v603, %v1064
          %v1066 = vand.u32 %v1065, 4294901760
          %v1067 = vsub.f32 %v1065, %v1066
          %v1068 = vand.u32 %v1067, 4294901760
          %1069 = vmatprep.subr.mxu0 %v1068
          %v1070 = vand.u32 %v602, 4294901760
          %v1071 = vsub.f32 %v602, %v1070
          %v1072 = vand.u32 %v1071, 4294901760
          %v1073 = vsub.f32 %v1071, %v1072
          %v1074 = vand.u32 %v1073, 4294901760
          %1075 = vmatpush1.msra.mxu0 %v1074
          %v1076 = vand.u32 %v605, 4294901760
          %v1077 = vsub.f32 %v605, %v1076
          %v1078 = vand.u32 %v1077, 4294901760
          %v1079 = vsub.f32 %v1077, %v1078
          %v1080 = vand.u32 %v1079, 4294901760
          %1081 = vmatprep.subr.mxu0 %v1080
          %v1082 = vand.u32 %v604, 4294901760
          %v1083 = vsub.f32 %v604, %v1082
          %v1084 = vand.u32 %v1083, 4294901760
          %v1085 = vsub.f32 %v1083, %v1084
          %v1086 = vand.u32 %v1085, 4294901760
          %1087 = vmatpush1.msra.mxu0 %v1086
          %v1088 = vand.u32 %v607, 4294901760
          %v1089 = vsub.f32 %v607, %v1088
          %v1090 = vand.u32 %v1089, 4294901760
          %v1091 = vsub.f32 %v1089, %v1090
          %v1092 = vand.u32 %v1091, 4294901760
          %1093 = vmatprep.subr.mxu0 %v1092
          %v1094 = vand.u32 %v606, 4294901760
          %v1095 = vsub.f32 %v606, %v1094
          %v1096 = vand.u32 %v1095, 4294901760
          %v1097 = vsub.f32 %v1095, %v1096
          %v1098 = vand.u32 %v1097, 4294901760
          %1099 = vmatpush1.msra.mxu0 %v1098
          %v1100 = vand.u32 %v609, 4294901760
          %v1101 = vsub.f32 %v609, %v1100
          %v1102 = vand.u32 %v1101, 4294901760
          %v1103 = vsub.f32 %v1101, %v1102
          %v1104 = vand.u32 %v1103, 4294901760
          %1105 = vmatprep.subr.mxu0 %v1104
          %v1106 = vand.u32 %v608, 4294901760
          %v1107 = vsub.f32 %v608, %v1106
          %v1108 = vand.u32 %v1107, 4294901760
          %v1109 = vsub.f32 %v1107, %v1108
          %v1110 = vand.u32 %v1109, 4294901760
          %1111 = vmatpush1.msra.mxu0 %v1110
          %v1112 = vand.u32 %v611, 4294901760
          %v1113 = vsub.f32 %v611, %v1112
          %v1114 = vand.u32 %v1113, 4294901760
          %v1115 = vsub.f32 %v1113, %v1114
          %v1116 = vand.u32 %v1115, 4294901760
          %1117 = vmatprep.subr.mxu0 %v1116
          %v1118 = vand.u32 %v610, 4294901760
          %v1119 = vsub.f32 %v610, %v1118
          %v1120 = vand.u32 %v1119, 4294901760
          %v1121 = vsub.f32 %v1119, %v1120
          %v1122 = vand.u32 %v1121, 4294901760
          %1123 = vmatpush1.msra.mxu0 %v1122
          %v1124 = vand.u32 %v613, 4294901760
          %v1125 = vsub.f32 %v613, %v1124
          %v1126 = vand.u32 %v1125, 4294901760
          %v1127 = vsub.f32 %v1125, %v1126
          %v1128 = vand.u32 %v1127, 4294901760
          %1129 = vmatprep.subr.mxu0 %v1128
          %v1130 = vand.u32 %v612, 4294901760
          %v1131 = vsub.f32 %v612, %v1130
          %v1132 = vand.u32 %v1131, 4294901760
          %v1133 = vsub.f32 %v1131, %v1132
          %v1134 = vand.u32 %v1133, 4294901760
          %1135 = vmatpush1.msra.mxu0 %v1134
          %v1136 = vand.u32 %v615, 4294901760
          %v1137 = vsub.f32 %v615, %v1136
          %v1138 = vand.u32 %v1137, 4294901760
          %v1139 = vsub.f32 %v1137, %v1138
          %v1140 = vand.u32 %v1139, 4294901760
          %1141 = vmatprep.subr.mxu0 %v1140
          %v1142 = vand.u32 %v614, 4294901760
          %v1143 = vsub.f32 %v614, %v1142
          %v1144 = vand.u32 %v1143, 4294901760
          %v1145 = vsub.f32 %v1143, %v1144
          %v1146 = vand.u32 %v1145, 4294901760
          %1147 = vmatpush1.msra.mxu0 %v1146
          %v1148 = vand.u32 %v617, 4294901760
          %v1149 = vsub.f32 %v617, %v1148
          %v1150 = vand.u32 %v1149, 4294901760
          %v1151 = vsub.f32 %v1149, %v1150
          %v1152 = vand.u32 %v1151, 4294901760
          %1153 = vmatprep.subr.mxu0 %v1152
          %v1154 = vand.u32 %v616, 4294901760
          %v1155 = vsub.f32 %v616, %v1154
          %v1156 = vand.u32 %v1155, 4294901760
          %v1157 = vsub.f32 %v1155, %v1156
          %v1158 = vand.u32 %v1157, 4294901760
          %1159 = vmatpush1.msra.mxu0 %v1158
          %v1160 = vand.u32 %v619, 4294901760
          %v1161 = vsub.f32 %v619, %v1160
          %v1162 = vand.u32 %v1161, 4294901760
          %v1163 = vsub.f32 %v1161, %v1162
          %v1164 = vand.u32 %v1163, 4294901760
          %1165 = vmatprep.subr.mxu0 %v1164
          %v1166 = vand.u32 %v618, 4294901760
          %v1167 = vsub.f32 %v618, %v1166
          %v1168 = vand.u32 %v1167, 4294901760
          %v1169 = vsub.f32 %v1167, %v1168
          %v1170 = vand.u32 %v1169, 4294901760
          %1171 = vmatpush1.msra.mxu0 %v1170
          %v1172 = vand.u32 %v621, 4294901760
          %v1173 = vsub.f32 %v621, %v1172
          %v1174 = vand.u32 %v1173, 4294901760
          %v1175 = vsub.f32 %v1173, %v1174
          %v1176 = vand.u32 %v1175, 4294901760
          %1177 = vmatprep.subr.mxu0 %v1176
          %v1178 = vand.u32 %v620, 4294901760
          %v1179 = vsub.f32 %v620, %v1178
          %v1180 = vand.u32 %v1179, 4294901760
          %v1181 = vsub.f32 %v1179, %v1180
          %v1182 = vand.u32 %v1181, 4294901760
          %1183 = vmatpush1.msra.mxu0 %v1182
          %v1184 = vand.u32 %v623, 4294901760
          %v1185 = vsub.f32 %v623, %v1184
          %v1186 = vand.u32 %v1185, 4294901760
          %v1187 = vsub.f32 %v1185, %v1186
          %v1188 = vand.u32 %v1187, 4294901760
          %1189 = vmatprep.subr.mxu0 %v1188
          %v1190 = vand.u32 %v622, 4294901760
          %v1191 = vsub.f32 %v622, %v1190
          %v1192 = vand.u32 %v1191, 4294901760
          %v1193 = vsub.f32 %v1191, %v1192
          %v1194 = vand.u32 %v1193, 4294901760
          %1195 = vmatpush1.msra.mxu0 %v1194
          %v1196 = vand.u32 %v625, 4294901760
          %v1197 = vsub.f32 %v625, %v1196
          %v1198 = vand.u32 %v1197, 4294901760
          %v1199 = vsub.f32 %v1197, %v1198
          %v1200 = vand.u32 %v1199, 4294901760
          %1201 = vmatprep.subr.mxu0 %v1200
          %v1202 = vand.u32 %v624, 4294901760
          %v1203 = vsub.f32 %v624, %v1202
          %v1204 = vand.u32 %v1203, 4294901760
          %v1205 = vsub.f32 %v1203, %v1204
          %v1206 = vand.u32 %v1205, 4294901760
          %1207 = vmatpush1.msra.mxu0 %v1206
          %v1208 = vand.u32 %v627, 4294901760
          %v1209 = vsub.f32 %v627, %v1208
          %v1210 = vand.u32 %v1209, 4294901760
          %v1211 = vsub.f32 %v1209, %v1210
          %v1212 = vand.u32 %v1211, 4294901760
          %1213 = vmatprep.subr.mxu0 %v1212
          %v1214 = vand.u32 %v626, 4294901760
          %v1215 = vsub.f32 %v626, %v1214
          %v1216 = vand.u32 %v1215, 4294901760
          %v1217 = vsub.f32 %v1215, %v1216
          %v1218 = vand.u32 %v1217, 4294901760
          %1219 = vmatpush1.msra.mxu0 %v1218
          %v1220 = vand.u32 %v629, 4294901760
          %v1221 = vsub.f32 %v629, %v1220
          %v1222 = vand.u32 %v1221, 4294901760
          %v1223 = vsub.f32 %v1221, %v1222
          %v1224 = vand.u32 %v1223, 4294901760
          %1225 = vmatprep.subr.mxu0 %v1224
          %v1226 = vand.u32 %v628, 4294901760
          %v1227 = vsub.f32 %v628, %v1226
          %v1228 = vand.u32 %v1227, 4294901760
          %v1229 = vsub.f32 %v1227, %v1228
          %v1230 = vand.u32 %v1229, 4294901760
          %1231 = vmatpush1.msra.mxu0 %v1230
          %v1232 = vand.u32 %v631, 4294901760
          %v1233 = vsub.f32 %v631, %v1232
          %v1234 = vand.u32 %v1233, 4294901760
          %v1235 = vsub.f32 %v1233, %v1234
          %v1236 = vand.u32 %v1235, 4294901760
          %1237 = vmatprep.subr.mxu0 %v1236
          %v1238 = vand.u32 %v630, 4294901760
          %v1239 = vsub.f32 %v630, %v1238
          %v1240 = vand.u32 %v1239, 4294901760
          %v1241 = vsub.f32 %v1239, %v1240
          %v1242 = vand.u32 %v1241, 4294901760
          %1243 = vmatpush1.msra.mxu0 %v1242
          %v1244 = vand.u32 %v633, 4294901760
          %v1245 = vsub.f32 %v633, %v1244
          %v1246 = vand.u32 %v1245, 4294901760
          %v1247 = vsub.f32 %v1245, %v1246
          %v1248 = vand.u32 %v1247, 4294901760
          %1249 = vmatprep.subr.mxu0 %v1248
          %v1250 = vand.u32 %v632, 4294901760
          %v1251 = vsub.f32 %v632, %v1250
          %v1252 = vand.u32 %v1251, 4294901760
          %v1253 = vsub.f32 %v1251, %v1252
          %v1254 = vand.u32 %v1253, 4294901760
          %1255 = vmatpush1.msra.mxu0 %v1254
          %v1256 = vand.u32 %v722, 4294901760
          %1257 = vmatprep.mubr.f32.mxu0 %v1256
          %v1258 = vand.u32 %v721, 4294901760
          %1259 = vmatmul.mubr.f32.gmra.mrb[0].mxu0 %v1258
          %v1260 = vpop.f32.mrb[0].mxu0
          %v1261 = vadd.f32 %v868, %v1260
          %v1262 = vpop.f32.mrb[0].mxu0
          %v1263 = vadd.f32 %v870, %v1262
          %1264 = vdwg.mxu0
          %v1265 = vand.u32 %v571, 4294901760
          %v1266 = vsub.f32 %v571, %v1265
          %1267 = vmatprep.subr.mxu0 %v1266
          %v1268 = vand.u32 %v570, 4294901760
          %v1269 = vsub.f32 %v570, %v1268
          %1270 = vmatpush1.msra.mxu0 %v1269
          %v1271 = vand.u32 %v573, 4294901760
          %v1272 = vsub.f32 %v573, %v1271
          %1273 = vmatprep.subr.mxu0 %v1272
          %v1274 = vand.u32 %v572, 4294901760
          %v1275 = vsub.f32 %v572, %v1274
          %1276 = vmatpush1.msra.mxu0 %v1275
          %v1277 = vand.u32 %v575, 4294901760
          %v1278 = vsub.f32 %v575, %v1277
          %1279 = vmatprep.subr.mxu0 %v1278
          %v1280 = vand.u32 %v574, 4294901760
          %v1281 = vsub.f32 %v574, %v1280
          %1282 = vmatpush1.msra.mxu0 %v1281
          %v1283 = vand.u32 %v577, 4294901760
          %v1284 = vsub.f32 %v577, %v1283
          %1285 = vmatprep.subr.mxu0 %v1284
          %v1286 = vand.u32 %v576, 4294901760
          %v1287 = vsub.f32 %v576, %v1286
          %1288 = vmatpush1.msra.mxu0 %v1287
          %v1289 = vand.u32 %v579, 4294901760
          %v1290 = vsub.f32 %v579, %v1289
          %1291 = vmatprep.subr.mxu0 %v1290
          %v1292 = vand.u32 %v578, 4294901760
          %v1293 = vsub.f32 %v578, %v1292
          %1294 = vmatpush1.msra.mxu0 %v1293
          %v1295 = vand.u32 %v581, 4294901760
          %v1296 = vsub.f32 %v581, %v1295
          %1297 = vmatprep.subr.mxu0 %v1296
          %v1298 = vand.u32 %v580, 4294901760
          %v1299 = vsub.f32 %v580, %v1298
          %1300 = vmatpush1.msra.mxu0 %v1299
          %v1301 = vand.u32 %v583, 4294901760
          %v1302 = vsub.f32 %v583, %v1301
          %1303 = vmatprep.subr.mxu0 %v1302
          %v1304 = vand.u32 %v582, 4294901760
          %v1305 = vsub.f32 %v582, %v1304
          %1306 = vmatpush1.msra.mxu0 %v1305
          %v1307 = vand.u32 %v585, 4294901760
          %v1308 = vsub.f32 %v585, %v1307
          %1309 = vmatprep.subr.mxu0 %v1308
          %v1310 = vand.u32 %v584, 4294901760
          %v1311 = vsub.f32 %v584, %v1310
          %1312 = vmatpush1.msra.mxu0 %v1311
          %v1313 = vand.u32 %v587, 4294901760
          %v1314 = vsub.f32 %v587, %v1313
          %1315 = vmatprep.subr.mxu0 %v1314
          %v1316 = vand.u32 %v586, 4294901760
          %v1317 = vsub.f32 %v586, %v1316
          %1318 = vmatpush1.msra.mxu0 %v1317
          %v1319 = vand.u32 %v589, 4294901760
          %v1320 = vsub.f32 %v589, %v1319
          %1321 = vmatprep.subr.mxu0 %v1320
          %v1322 = vand.u32 %v588, 4294901760
          %v1323 = vsub.f32 %v588, %v1322
          %1324 = vmatpush1.msra.mxu0 %v1323
          %v1325 = vand.u32 %v591, 4294901760
          %v1326 = vsub.f32 %v591, %v1325
          %1327 = vmatprep.subr.mxu0 %v1326
          %v1328 = vand.u32 %v590, 4294901760
          %v1329 = vsub.f32 %v590, %v1328
          %1330 = vmatpush1.msra.mxu0 %v1329
          %v1331 = vand.u32 %v593, 4294901760
          %v1332 = vsub.f32 %v593, %v1331
          %1333 = vmatprep.subr.mxu0 %v1332
          %v1334 = vand.u32 %v592, 4294901760
          %v1335 = vsub.f32 %v592, %v1334
          %1336 = vmatpush1.msra.mxu0 %v1335
          %v1337 = vand.u32 %v595, 4294901760
          %v1338 = vsub.f32 %v595, %v1337
          %1339 = vmatprep.subr.mxu0 %v1338
          %v1340 = vand.u32 %v594, 4294901760
          %v1341 = vsub.f32 %v594, %v1340
          %1342 = vmatpush1.msra.mxu0 %v1341
          %v1343 = vand.u32 %v597, 4294901760
          %v1344 = vsub.f32 %v597, %v1343
          %1345 = vmatprep.subr.mxu0 %v1344
          %v1346 = vand.u32 %v596, 4294901760
          %v1347 = vsub.f32 %v596, %v1346
          %1348 = vmatpush1.msra.mxu0 %v1347
          %v1349 = vand.u32 %v599, 4294901760
          %v1350 = vsub.f32 %v599, %v1349
          %1351 = vmatprep.subr.mxu0 %v1350
          %v1352 = vand.u32 %v598, 4294901760
          %v1353 = vsub.f32 %v598, %v1352
          %1354 = vmatpush1.msra.mxu0 %v1353
          %v1355 = vand.u32 %v601, 4294901760
          %v1356 = vsub.f32 %v601, %v1355
          %1357 = vmatprep.subr.mxu0 %v1356
          %v1358 = vand.u32 %v600, 4294901760
          %v1359 = vsub.f32 %v600, %v1358
          %1360 = vmatpush1.msra.mxu0 %v1359
          %v1361 = vand.u32 %v603, 4294901760
          %v1362 = vsub.f32 %v603, %v1361
          %1363 = vmatprep.subr.mxu0 %v1362
          %v1364 = vand.u32 %v602, 4294901760
          %v1365 = vsub.f32 %v602, %v1364
          %1366 = vmatpush1.msra.mxu0 %v1365
          %v1367 = vand.u32 %v605, 4294901760
          %v1368 = vsub.f32 %v605, %v1367
          %1369 = vmatprep.subr.mxu0 %v1368
          %v1370 = vand.u32 %v604, 4294901760
          %v1371 = vsub.f32 %v604, %v1370
          %1372 = vmatpush1.msra.mxu0 %v1371
          %v1373 = vand.u32 %v607, 4294901760
          %v1374 = vsub.f32 %v607, %v1373
          %1375 = vmatprep.subr.mxu0 %v1374
          %v1376 = vand.u32 %v606, 4294901760
          %v1377 = vsub.f32 %v606, %v1376
          %1378 = vmatpush1.msra.mxu0 %v1377
          %v1379 = vand.u32 %v609, 4294901760
          %v1380 = vsub.f32 %v609, %v1379
          %1381 = vmatprep.subr.mxu0 %v1380
          %v1382 = vand.u32 %v608, 4294901760
          %v1383 = vsub.f32 %v608, %v1382
          %1384 = vmatpush1.msra.mxu0 %v1383
          %v1385 = vand.u32 %v611, 4294901760
          %v1386 = vsub.f32 %v611, %v1385
          %1387 = vmatprep.subr.mxu0 %v1386
          %v1388 = vand.u32 %v610, 4294901760
          %v1389 = vsub.f32 %v610, %v1388
          %1390 = vmatpush1.msra.mxu0 %v1389
          %v1391 = vand.u32 %v613, 4294901760
          %v1392 = vsub.f32 %v613, %v1391
          %1393 = vmatprep.subr.mxu0 %v1392
          %v1394 = vand.u32 %v612, 4294901760
          %v1395 = vsub.f32 %v612, %v1394
          %1396 = vmatpush1.msra.mxu0 %v1395
          %v1397 = vand.u32 %v615, 4294901760
          %v1398 = vsub.f32 %v615, %v1397
          %1399 = vmatprep.subr.mxu0 %v1398
          %v1400 = vand.u32 %v614, 4294901760
          %v1401 = vsub.f32 %v614, %v1400
          %1402 = vmatpush1.msra.mxu0 %v1401
          %v1403 = vand.u32 %v617, 4294901760
          %v1404 = vsub.f32 %v617, %v1403
          %1405 = vmatprep.subr.mxu0 %v1404
          %v1406 = vand.u32 %v616, 4294901760
          %v1407 = vsub.f32 %v616, %v1406
          %1408 = vmatpush1.msra.mxu0 %v1407
          %v1409 = vand.u32 %v619, 4294901760
          %v1410 = vsub.f32 %v619, %v1409
          %1411 = vmatprep.subr.mxu0 %v1410
          %v1412 = vand.u32 %v618, 4294901760
          %v1413 = vsub.f32 %v618, %v1412
          %1414 = vmatpush1.msra.mxu0 %v1413
          %v1415 = vand.u32 %v621, 4294901760
          %v1416 = vsub.f32 %v621, %v1415
          %1417 = vmatprep.subr.mxu0 %v1416
          %v1418 = vand.u32 %v620, 4294901760
          %v1419 = vsub.f32 %v620, %v1418
          %1420 = vmatpush1.msra.mxu0 %v1419
          %v1421 = vand.u32 %v623, 4294901760
          %v1422 = vsub.f32 %v623, %v1421
          %1423 = vmatprep.subr.mxu0 %v1422
          %v1424 = vand.u32 %v622, 4294901760
          %v1425 = vsub.f32 %v622, %v1424
          %1426 = vmatpush1.msra.mxu0 %v1425
          %v1427 = vand.u32 %v625, 4294901760
          %v1428 = vsub.f32 %v625, %v1427
          %1429 = vmatprep.subr.mxu0 %v1428
          %v1430 = vand.u32 %v624, 4294901760
          %v1431 = vsub.f32 %v624, %v1430
          %1432 = vmatpush1.msra.mxu0 %v1431
          %v1433 = vand.u32 %v627, 4294901760
          %v1434 = vsub.f32 %v627, %v1433
          %1435 = vmatprep.subr.mxu0 %v1434
          %v1436 = vand.u32 %v626, 4294901760
          %v1437 = vsub.f32 %v626, %v1436
          %1438 = vmatpush1.msra.mxu0 %v1437
          %v1439 = vand.u32 %v629, 4294901760
          %v1440 = vsub.f32 %v629, %v1439
          %1441 = vmatprep.subr.mxu0 %v1440
          %v1442 = vand.u32 %v628, 4294901760
          %v1443 = vsub.f32 %v628, %v1442
          %1444 = vmatpush1.msra.mxu0 %v1443
          %v1445 = vand.u32 %v631, 4294901760
          %v1446 = vsub.f32 %v631, %v1445
          %1447 = vmatprep.subr.mxu0 %v1446
          %v1448 = vand.u32 %v630, 4294901760
          %v1449 = vsub.f32 %v630, %v1448
          %1450 = vmatpush1.msra.mxu0 %v1449
          %v1451 = vand.u32 %v633, 4294901760
          %v1452 = vsub.f32 %v633, %v1451
          %1453 = vmatprep.subr.mxu0 %v1452
          %v1454 = vand.u32 %v632, 4294901760
          %v1455 = vsub.f32 %v632, %v1454
          %1456 = vmatpush1.msra.mxu0 %v1455
          %v1457 = vand.u32 %v722, 4294901760
          %v1458 = vsub.f32 %v722, %v1457
          %1459 = vmatprep.mubr.f32.mxu0 %v1458
          %v1460 = vand.u32 %v721, 4294901760
          %v1461 = vsub.f32 %v721, %v1460
          %1462 = vmatmul.mubr.f32.gmra.mrb[0].mxu0 %v1461
          %v1463 = vpop.f32.mrb[0].mxu0
          %v1464 = vadd.f32 %v1261, %v1463
          %v1465 = vpop.f32.mrb[0].mxu0
          %v1466 = vadd.f32 %v1263, %v1465
          %1467 = vdwg.mxu0
          %v1468 = vand.u32 %v571, 4294901760
          %1469 = vmatprep.subr.mxu0 %v1468
          %v1470 = vand.u32 %v570, 4294901760
          %1471 = vmatpush1.msra.mxu0 %v1470
          %v1472 = vand.u32 %v573, 4294901760
          %1473 = vmatprep.subr.mxu0 %v1472
          %v1474 = vand.u32 %v572, 4294901760
          %1475 = vmatpush1.msra.mxu0 %v1474
          %v1476 = vand.u32 %v575, 4294901760
          %1477 = vmatprep.subr.mxu0 %v1476
          %v1478 = vand.u32 %v574, 4294901760
          %1479 = vmatpush1.msra.mxu0 %v1478
          %v1480 = vand.u32 %v577, 4294901760
          %1481 = vmatprep.subr.mxu0 %v1480
          %v1482 = vand.u32 %v576, 4294901760
          %1483 = vmatpush1.msra.mxu0 %v1482
          %v1484 = vand.u32 %v579, 4294901760
          %1485 = vmatprep.subr.mxu0 %v1484
          %v1486 = vand.u32 %v578, 4294901760
          %1487 = vmatpush1.msra.mxu0 %v1486
          %v1488 = vand.u32 %v581, 4294901760
          %1489 = vmatprep.subr.mxu0 %v1488
          %v1490 = vand.u32 %v580, 4294901760
          %1491 = vmatpush1.msra.mxu0 %v1490
          %v1492 = vand.u32 %v583, 4294901760
          %1493 = vmatprep.subr.mxu0 %v1492
          %v1494 = vand.u32 %v582, 4294901760
          %1495 = vmatpush1.msra.mxu0 %v1494
          %v1496 = vand.u32 %v585, 4294901760
          %1497 = vmatprep.subr.mxu0 %v1496
          %v1498 = vand.u32 %v584, 4294901760
          %1499 = vmatpush1.msra.mxu0 %v1498
          %v1500 = vand.u32 %v587, 4294901760
          %1501 = vmatprep.subr.mxu0 %v1500
          %v1502 = vand.u32 %v586, 4294901760
          %1503 = vmatpush1.msra.mxu0 %v1502
          %v1504 = vand.u32 %v589, 4294901760
          %1505 = vmatprep.subr.mxu0 %v1504
          %v1506 = vand.u32 %v588, 4294901760
          %1507 = vmatpush1.msra.mxu0 %v1506
          %v1508 = vand.u32 %v591, 4294901760
          %1509 = vmatprep.subr.mxu0 %v1508
          %v1510 = vand.u32 %v590, 4294901760
          %1511 = vmatpush1.msra.mxu0 %v1510
          %v1512 = vand.u32 %v593, 4294901760
          %1513 = vmatprep.subr.mxu0 %v1512
          %v1514 = vand.u32 %v592, 4294901760
          %1515 = vmatpush1.msra.mxu0 %v1514
          %v1516 = vand.u32 %v595, 4294901760
          %1517 = vmatprep.subr.mxu0 %v1516
          %v1518 = vand.u32 %v594, 4294901760
          %1519 = vmatpush1.msra.mxu0 %v1518
          %v1520 = vand.u32 %v597, 4294901760
          %1521 = vmatprep.subr.mxu0 %v1520
          %v1522 = vand.u32 %v596, 4294901760
          %1523 = vmatpush1.msra.mxu0 %v1522
          %v1524 = vand.u32 %v599, 4294901760
          %1525 = vmatprep.subr.mxu0 %v1524
          %v1526 = vand.u32 %v598, 4294901760
          %1527 = vmatpush1.msra.mxu0 %v1526
          %v1528 = vand.u32 %v601, 4294901760
          %1529 = vmatprep.subr.mxu0 %v1528
          %v1530 = vand.u32 %v600, 4294901760
          %1531 = vmatpush1.msra.mxu0 %v1530
          %v1532 = vand.u32 %v603, 4294901760
          %1533 = vmatprep.subr.mxu0 %v1532
          %v1534 = vand.u32 %v602, 4294901760
          %1535 = vmatpush1.msra.mxu0 %v1534
          %v1536 = vand.u32 %v605, 4294901760
          %1537 = vmatprep.subr.mxu0 %v1536
          %v1538 = vand.u32 %v604, 4294901760
          %1539 = vmatpush1.msra.mxu0 %v1538
          %v1540 = vand.u32 %v607, 4294901760
          %1541 = vmatprep.subr.mxu0 %v1540
          %v1542 = vand.u32 %v606, 4294901760
          %1543 = vmatpush1.msra.mxu0 %v1542
          %v1544 = vand.u32 %v609, 4294901760
          %1545 = vmatprep.subr.mxu0 %v1544
          %v1546 = vand.u32 %v608, 4294901760
          %1547 = vmatpush1.msra.mxu0 %v1546
          %v1548 = vand.u32 %v611, 4294901760
          %1549 = vmatprep.subr.mxu0 %v1548
          %v1550 = vand.u32 %v610, 4294901760
          %1551 = vmatpush1.msra.mxu0 %v1550
          %v1552 = vand.u32 %v613, 4294901760
          %1553 = vmatprep.subr.mxu0 %v1552
          %v1554 = vand.u32 %v612, 4294901760
          %1555 = vmatpush1.msra.mxu0 %v1554
          %v1556 = vand.u32 %v615, 4294901760
          %1557 = vmatprep.subr.mxu0 %v1556
          %v1558 = vand.u32 %v614, 4294901760
          %1559 = vmatpush1.msra.mxu0 %v1558
          %v1560 = vand.u32 %v617, 4294901760
          %1561 = vmatprep.subr.mxu0 %v1560
          %v1562 = vand.u32 %v616, 4294901760
          %1563 = vmatpush1.msra.mxu0 %v1562
          %v1564 = vand.u32 %v619, 4294901760
          %1565 = vmatprep.subr.mxu0 %v1564
          %v1566 = vand.u32 %v618, 4294901760
          %1567 = vmatpush1.msra.mxu0 %v1566
          %v1568 = vand.u32 %v621, 4294901760
          %1569 = vmatprep.subr.mxu0 %v1568
          %v1570 = vand.u32 %v620, 4294901760
          %1571 = vmatpush1.msra.mxu0 %v1570
          %v1572 = vand.u32 %v623, 4294901760
          %1573 = vmatprep.subr.mxu0 %v1572
          %v1574 = vand.u32 %v622, 4294901760
          %1575 = vmatpush1.msra.mxu0 %v1574
          %v1576 = vand.u32 %v625, 4294901760
          %1577 = vmatprep.subr.mxu0 %v1576
          %v1578 = vand.u32 %v624, 4294901760
          %1579 = vmatpush1.msra.mxu0 %v1578
          %v1580 = vand.u32 %v627, 4294901760
          %1581 = vmatprep.subr.mxu0 %v1580
          %v1582 = vand.u32 %v626, 4294901760
          %1583 = vmatpush1.msra.mxu0 %v1582
          %v1584 = vand.u32 %v629, 4294901760
          %1585 = vmatprep.subr.mxu0 %v1584
          %v1586 = vand.u32 %v628, 4294901760
          %1587 = vmatpush1.msra.mxu0 %v1586
          %v1588 = vand.u32 %v631, 4294901760
          %1589 = vmatprep.subr.mxu0 %v1588
          %v1590 = vand.u32 %v630, 4294901760
          %1591 = vmatpush1.msra.mxu0 %v1590
          %v1592 = vand.u32 %v633, 4294901760
          %1593 = vmatprep.subr.mxu0 %v1592
          %v1594 = vand.u32 %v632, 4294901760
          %1595 = vmatpush1.msra.mxu0 %v1594
          %v1596 = vand.u32 %v722, 4294901760
          %v1597 = vsub.f32 %v722, %v1596
          %v1598 = vand.u32 %v1597, 4294901760
          %1599 = vmatprep.mubr.f32.mxu0 %v1598
          %v1600 = vand.u32 %v721, 4294901760
          %v1601 = vsub.f32 %v721, %v1600
          %v1602 = vand.u32 %v1601, 4294901760
          %1603 = vmatmul.mubr.f32.gmra.mrb[0].mxu0 %v1602
          %v1604 = vpop.f32.mrb[0].mxu0
          %v1605 = vadd.f32 %v1464, %v1604
          %v1606 = vpop.f32.mrb[0].mxu0
          %v1607 = vadd.f32 %v1466, %v1606
          %1608 = vdwg.mxu0
          %v1609 = vand.u32 %v571, 4294901760
          %v1610 = vsub.f32 %v571, %v1609
          %v1611 = vand.u32 %v1610, 4294901760
          %1612 = vmatprep.subr.mxu0 %v1611
          %v1613 = vand.u32 %v570, 4294901760
          %v1614 = vsub.f32 %v570, %v1613
          %v1615 = vand.u32 %v1614, 4294901760
          %1616 = vmatpush1.msra.mxu0 %v1615
          %v1617 = vand.u32 %v573, 4294901760
          %v1618 = vsub.f32 %v573, %v1617
          %v1619 = vand.u32 %v1618, 4294901760
          %1620 = vmatprep.subr.mxu0 %v1619
          %v1621 = vand.u32 %v572, 4294901760
          %v1622 = vsub.f32 %v572, %v1621
          %v1623 = vand.u32 %v1622, 4294901760
          %1624 = vmatpush1.msra.mxu0 %v1623
          %v1625 = vand.u32 %v575, 4294901760
          %v1626 = vsub.f32 %v575, %v1625
          %v1627 = vand.u32 %v1626, 4294901760
          %1628 = vmatprep.subr.mxu0 %v1627
          %v1629 = vand.u32 %v574, 4294901760
          %v1630 = vsub.f32 %v574, %v1629
          %v1631 = vand.u32 %v1630, 4294901760
          %1632 = vmatpush1.msra.mxu0 %v1631
          %v1633 = vand.u32 %v577, 4294901760
          %v1634 = vsub.f32 %v577, %v1633
          %v1635 = vand.u32 %v1634, 4294901760
          %1636 = vmatprep.subr.mxu0 %v1635
          %v1637 = vand.u32 %v576, 4294901760
          %v1638 = vsub.f32 %v576, %v1637
          %v1639 = vand.u32 %v1638, 4294901760
          %1640 = vmatpush1.msra.mxu0 %v1639
          %v1641 = vand.u32 %v579, 4294901760
          %v1642 = vsub.f32 %v579, %v1641
          %v1643 = vand.u32 %v1642, 4294901760
          %1644 = vmatprep.subr.mxu0 %v1643
          %v1645 = vand.u32 %v578, 4294901760
          %v1646 = vsub.f32 %v578, %v1645
          %v1647 = vand.u32 %v1646, 4294901760
          %1648 = vmatpush1.msra.mxu0 %v1647
          %v1649 = vand.u32 %v581, 4294901760
          %v1650 = vsub.f32 %v581, %v1649
          %v1651 = vand.u32 %v1650, 4294901760
          %1652 = vmatprep.subr.mxu0 %v1651
          %v1653 = vand.u32 %v580, 4294901760
          %v1654 = vsub.f32 %v580, %v1653
          %v1655 = vand.u32 %v1654, 4294901760
          %1656 = vmatpush1.msra.mxu0 %v1655
          %v1657 = vand.u32 %v583, 4294901760
          %v1658 = vsub.f32 %v583, %v1657
          %v1659 = vand.u32 %v1658, 4294901760
          %1660 = vmatprep.subr.mxu0 %v1659
          %v1661 = vand.u32 %v582, 4294901760
          %v1662 = vsub.f32 %v582, %v1661
          %v1663 = vand.u32 %v1662, 4294901760
          %1664 = vmatpush1.msra.mxu0 %v1663
          %v1665 = vand.u32 %v585, 4294901760
          %v1666 = vsub.f32 %v585, %v1665
          %v1667 = vand.u32 %v1666, 4294901760
          %1668 = vmatprep.subr.mxu0 %v1667
          %v1669 = vand.u32 %v584, 4294901760
          %v1670 = vsub.f32 %v584, %v1669
          %v1671 = vand.u32 %v1670, 4294901760
          %1672 = vmatpush1.msra.mxu0 %v1671
          %v1673 = vand.u32 %v587, 4294901760
          %v1674 = vsub.f32 %v587, %v1673
          %v1675 = vand.u32 %v1674, 4294901760
          %1676 = vmatprep.subr.mxu0 %v1675
          %v1677 = vand.u32 %v586, 4294901760
          %v1678 = vsub.f32 %v586, %v1677
          %v1679 = vand.u32 %v1678, 4294901760
          %1680 = vmatpush1.msra.mxu0 %v1679
          %v1681 = vand.u32 %v589, 4294901760
          %v1682 = vsub.f32 %v589, %v1681
          %v1683 = vand.u32 %v1682, 4294901760
          %1684 = vmatprep.subr.mxu0 %v1683
          %v1685 = vand.u32 %v588, 4294901760
          %v1686 = vsub.f32 %v588, %v1685
          %v1687 = vand.u32 %v1686, 4294901760
          %1688 = vmatpush1.msra.mxu0 %v1687
          %v1689 = vand.u32 %v591, 4294901760
          %v1690 = vsub.f32 %v591, %v1689
          %v1691 = vand.u32 %v1690, 4294901760
          %1692 = vmatprep.subr.mxu0 %v1691
          %v1693 = vand.u32 %v590, 4294901760
          %v1694 = vsub.f32 %v590, %v1693
          %v1695 = vand.u32 %v1694, 4294901760
          %1696 = vmatpush1.msra.mxu0 %v1695
          %v1697 = vand.u32 %v593, 4294901760
          %v1698 = vsub.f32 %v593, %v1697
          %v1699 = vand.u32 %v1698, 4294901760
          %1700 = vmatprep.subr.mxu0 %v1699
          %v1701 = vand.u32 %v592, 4294901760
          %v1702 = vsub.f32 %v592, %v1701
          %v1703 = vand.u32 %v1702, 4294901760
          %1704 = vmatpush1.msra.mxu0 %v1703
          %v1705 = vand.u32 %v595, 4294901760
          %v1706 = vsub.f32 %v595, %v1705
          %v1707 = vand.u32 %v1706, 4294901760
          %1708 = vmatprep.subr.mxu0 %v1707
          %v1709 = vand.u32 %v594, 4294901760
          %v1710 = vsub.f32 %v594, %v1709
          %v1711 = vand.u32 %v1710, 4294901760
          %1712 = vmatpush1.msra.mxu0 %v1711
          %v1713 = vand.u32 %v597, 4294901760
          %v1714 = vsub.f32 %v597, %v1713
          %v1715 = vand.u32 %v1714, 4294901760
          %1716 = vmatprep.subr.mxu0 %v1715
          %v1717 = vand.u32 %v596, 4294901760
          %v1718 = vsub.f32 %v596, %v1717
          %v1719 = vand.u32 %v1718, 4294901760
          %1720 = vmatpush1.msra.mxu0 %v1719
          %v1721 = vand.u32 %v599, 4294901760
          %v1722 = vsub.f32 %v599, %v1721
          %v1723 = vand.u32 %v1722, 4294901760
          %1724 = vmatprep.subr.mxu0 %v1723
          %v1725 = vand.u32 %v598, 4294901760
          %v1726 = vsub.f32 %v598, %v1725
          %v1727 = vand.u32 %v1726, 4294901760
          %1728 = vmatpush1.msra.mxu0 %v1727
          %v1729 = vand.u32 %v601, 4294901760
          %v1730 = vsub.f32 %v601, %v1729
          %v1731 = vand.u32 %v1730, 4294901760
          %1732 = vmatprep.subr.mxu0 %v1731
          %v1733 = vand.u32 %v600, 4294901760
          %v1734 = vsub.f32 %v600, %v1733
          %v1735 = vand.u32 %v1734, 4294901760
          %1736 = vmatpush1.msra.mxu0 %v1735
          %v1737 = vand.u32 %v603, 4294901760
          %v1738 = vsub.f32 %v603, %v1737
          %v1739 = vand.u32 %v1738, 4294901760
          %1740 = vmatprep.subr.mxu0 %v1739
          %v1741 = vand.u32 %v602, 4294901760
          %v1742 = vsub.f32 %v602, %v1741
          %v1743 = vand.u32 %v1742, 4294901760
          %1744 = vmatpush1.msra.mxu0 %v1743
          %v1745 = vand.u32 %v605, 4294901760
          %v1746 = vsub.f32 %v605, %v1745
          %v1747 = vand.u32 %v1746, 4294901760
          %1748 = vmatprep.subr.mxu0 %v1747
          %v1749 = vand.u32 %v604, 4294901760
          %v1750 = vsub.f32 %v604, %v1749
          %v1751 = vand.u32 %v1750, 4294901760
          %1752 = vmatpush1.msra.mxu0 %v1751
          %v1753 = vand.u32 %v607, 4294901760
          %v1754 = vsub.f32 %v607, %v1753
          %v1755 = vand.u32 %v1754, 4294901760
          %1756 = vmatprep.subr.mxu0 %v1755
          %v1757 = vand.u32 %v606, 4294901760
          %v1758 = vsub.f32 %v606, %v1757
          %v1759 = vand.u32 %v1758, 4294901760
          %1760 = vmatpush1.msra.mxu0 %v1759
          %v1761 = vand.u32 %v609, 4294901760
          %v1762 = vsub.f32 %v609, %v1761
          %v1763 = vand.u32 %v1762, 4294901760
          %1764 = vmatprep.subr.mxu0 %v1763
          %v1765 = vand.u32 %v608, 4294901760
          %v1766 = vsub.f32 %v608, %v1765
          %v1767 = vand.u32 %v1766, 4294901760
          %1768 = vmatpush1.msra.mxu0 %v1767
          %v1769 = vand.u32 %v611, 4294901760
          %v1770 = vsub.f32 %v611, %v1769
          %v1771 = vand.u32 %v1770, 4294901760
          %1772 = vmatprep.subr.mxu0 %v1771
          %v1773 = vand.u32 %v610, 4294901760
          %v1774 = vsub.f32 %v610, %v1773
          %v1775 = vand.u32 %v1774, 4294901760
          %1776 = vmatpush1.msra.mxu0 %v1775
          %v1777 = vand.u32 %v613, 4294901760
          %v1778 = vsub.f32 %v613, %v1777
          %v1779 = vand.u32 %v1778, 4294901760
          %1780 = vmatprep.subr.mxu0 %v1779
          %v1781 = vand.u32 %v612, 4294901760
          %v1782 = vsub.f32 %v612, %v1781
          %v1783 = vand.u32 %v1782, 4294901760
          %1784 = vmatpush1.msra.mxu0 %v1783
          %v1785 = vand.u32 %v615, 4294901760
          %v1786 = vsub.f32 %v615, %v1785
          %v1787 = vand.u32 %v1786, 4294901760
          %1788 = vmatprep.subr.mxu0 %v1787
          %v1789 = vand.u32 %v614, 4294901760
          %v1790 = vsub.f32 %v614, %v1789
          %v1791 = vand.u32 %v1790, 4294901760
          %1792 = vmatpush1.msra.mxu0 %v1791
          %v1793 = vand.u32 %v617, 4294901760
          %v1794 = vsub.f32 %v617, %v1793
          %v1795 = vand.u32 %v1794, 4294901760
          %1796 = vmatprep.subr.mxu0 %v1795
          %v1797 = vand.u32 %v616, 4294901760
          %v1798 = vsub.f32 %v616, %v1797
          %v1799 = vand.u32 %v1798, 4294901760
          %1800 = vmatpush1.msra.mxu0 %v1799
          %v1801 = vand.u32 %v619, 4294901760
          %v1802 = vsub.f32 %v619, %v1801
          %v1803 = vand.u32 %v1802, 4294901760
          %1804 = vmatprep.subr.mxu0 %v1803
          %v1805 = vand.u32 %v618, 4294901760
          %v1806 = vsub.f32 %v618, %v1805
          %v1807 = vand.u32 %v1806, 4294901760
          %1808 = vmatpush1.msra.mxu0 %v1807
          %v1809 = vand.u32 %v621, 4294901760
          %v1810 = vsub.f32 %v621, %v1809
          %v1811 = vand.u32 %v1810, 4294901760
          %1812 = vmatprep.subr.mxu0 %v1811
          %v1813 = vand.u32 %v620, 4294901760
          %v1814 = vsub.f32 %v620, %v1813
          %v1815 = vand.u32 %v1814, 4294901760
          %1816 = vmatpush1.msra.mxu0 %v1815
          %v1817 = vand.u32 %v623, 4294901760
          %v1818 = vsub.f32 %v623, %v1817
          %v1819 = vand.u32 %v1818, 4294901760
          %1820 = vmatprep.subr.mxu0 %v1819
          %v1821 = vand.u32 %v622, 4294901760
          %v1822 = vsub.f32 %v622, %v1821
          %v1823 = vand.u32 %v1822, 4294901760
          %1824 = vmatpush1.msra.mxu0 %v1823
          %v1825 = vand.u32 %v625, 4294901760
          %v1826 = vsub.f32 %v625, %v1825
          %v1827 = vand.u32 %v1826, 4294901760
          %1828 = vmatprep.subr.mxu0 %v1827
          %v1829 = vand.u32 %v624, 4294901760
          %v1830 = vsub.f32 %v624, %v1829
          %v1831 = vand.u32 %v1830, 4294901760
          %1832 = vmatpush1.msra.mxu0 %v1831
          %v1833 = vand.u32 %v627, 4294901760
          %v1834 = vsub.f32 %v627, %v1833
          %v1835 = vand.u32 %v1834, 4294901760
          %1836 = vmatprep.subr.mxu0 %v1835
          %v1837 = vand.u32 %v626, 4294901760
          %v1838 = vsub.f32 %v626, %v1837
          %v1839 = vand.u32 %v1838, 4294901760
          %1840 = vmatpush1.msra.mxu0 %v1839
          %v1841 = vand.u32 %v629, 4294901760
          %v1842 = vsub.f32 %v629, %v1841
          %v1843 = vand.u32 %v1842, 4294901760
          %1844 = vmatprep.subr.mxu0 %v1843
          %v1845 = vand.u32 %v628, 4294901760
          %v1846 = vsub.f32 %v628, %v1845
          %v1847 = vand.u32 %v1846, 4294901760
          %1848 = vmatpush1.msra.mxu0 %v1847
          %v1849 = vand.u32 %v631, 4294901760
          %v1850 = vsub.f32 %v631, %v1849
          %v1851 = vand.u32 %v1850, 4294901760
          %1852 = vmatprep.subr.mxu0 %v1851
          %v1853 = vand.u32 %v630, 4294901760
          %v1854 = vsub.f32 %v630, %v1853
          %v1855 = vand.u32 %v1854, 4294901760
          %1856 = vmatpush1.msra.mxu0 %v1855
          %v1857 = vand.u32 %v633, 4294901760
          %v1858 = vsub.f32 %v633, %v1857
          %v1859 = vand.u32 %v1858, 4294901760
          %1860 = vmatprep.subr.mxu0 %v1859
          %v1861 = vand.u32 %v632, 4294901760
          %v1862 = vsub.f32 %v632, %v1861
          %v1863 = vand.u32 %v1862, 4294901760
          %1864 = vmatpush1.msra.mxu0 %v1863
          %v1865 = vand.u32 %v722, 4294901760
          %1866 = vmatprep.mubr.f32.mxu0 %v1865
          %v1867 = vand.u32 %v721, 4294901760
          %1868 = vmatmul.mubr.f32.gmra.mrb[0].mxu0 %v1867
          %v1869 = vpop.f32.mrb[0].mxu0
          %v1870 = vadd.f32 %v1605, %v1869
          %v1871 = vpop.f32.mrb[0].mxu0
          %v1872 = vadd.f32 %v1607, %v1871
          %1873 = vdwg.mxu0
          %v1874 = vand.u32 %v571, 4294901760
          %1875 = vmatprep.subr.mxu0 %v1874
          %v1876 = vand.u32 %v570, 4294901760
          %1877 = vmatpush1.msra.mxu0 %v1876
          %v1878 = vand.u32 %v573, 4294901760
          %1879 = vmatprep.subr.mxu0 %v1878
          %v1880 = vand.u32 %v572, 4294901760
          %1881 = vmatpush1.msra.mxu0 %v1880
          %v1882 = vand.u32 %v575, 4294901760
          %1883 = vmatprep.subr.mxu0 %v1882
          %v1884 = vand.u32 %v574, 4294901760
          %1885 = vmatpush1.msra.mxu0 %v1884
          %v1886 = vand.u32 %v577, 4294901760
          %1887 = vmatprep.subr.mxu0 %v1886
          %v1888 = vand.u32 %v576, 4294901760
          %1889 = vmatpush1.msra.mxu0 %v1888
          %v1890 = vand.u32 %v579, 4294901760
          %1891 = vmatprep.subr.mxu0 %v1890
          %v1892 = vand.u32 %v578, 4294901760
          %1893 = vmatpush1.msra.mxu0 %v1892
          %v1894 = vand.u32 %v581, 4294901760
          %1895 = vmatprep.subr.mxu0 %v1894
          %v1896 = vand.u32 %v580, 4294901760
          %1897 = vmatpush1.msra.mxu0 %v1896
          %v1898 = vand.u32 %v583, 4294901760
          %1899 = vmatprep.subr.mxu0 %v1898
          %v1900 = vand.u32 %v582, 4294901760
          %1901 = vmatpush1.msra.mxu0 %v1900
          %v1902 = vand.u32 %v585, 4294901760
          %1903 = vmatprep.subr.mxu0 %v1902
          %v1904 = vand.u32 %v584, 4294901760
          %1905 = vmatpush1.msra.mxu0 %v1904
          %v1906 = vand.u32 %v587, 4294901760
          %1907 = vmatprep.subr.mxu0 %v1906
          %v1908 = vand.u32 %v586, 4294901760
          %1909 = vmatpush1.msra.mxu0 %v1908
          %v1910 = vand.u32 %v589, 4294901760
          %1911 = vmatprep.subr.mxu0 %v1910
          %v1912 = vand.u32 %v588, 4294901760
          %1913 = vmatpush1.msra.mxu0 %v1912
          %v1914 = vand.u32 %v591, 4294901760
          %1915 = vmatprep.subr.mxu0 %v1914
          %v1916 = vand.u32 %v590, 4294901760
          %1917 = vmatpush1.msra.mxu0 %v1916
          %v1918 = vand.u32 %v593, 4294901760
          %1919 = vmatprep.subr.mxu0 %v1918
          %v1920 = vand.u32 %v592, 4294901760
          %1921 = vmatpush1.msra.mxu0 %v1920
          %v1922 = vand.u32 %v595, 4294901760
          %1923 = vmatprep.subr.mxu0 %v1922
          %v1924 = vand.u32 %v594, 4294901760
          %1925 = vmatpush1.msra.mxu0 %v1924
          %v1926 = vand.u32 %v597, 4294901760
          %1927 = vmatprep.subr.mxu0 %v1926
          %v1928 = vand.u32 %v596, 4294901760
          %1929 = vmatpush1.msra.mxu0 %v1928
          %v1930 = vand.u32 %v599, 4294901760
          %1931 = vmatprep.subr.mxu0 %v1930
          %v1932 = vand.u32 %v598, 4294901760
          %1933 = vmatpush1.msra.mxu0 %v1932
          %v1934 = vand.u32 %v601, 4294901760
          %1935 = vmatprep.subr.mxu0 %v1934
          %v1936 = vand.u32 %v600, 4294901760
          %1937 = vmatpush1.msra.mxu0 %v1936
          %v1938 = vand.u32 %v603, 4294901760
          %1939 = vmatprep.subr.mxu0 %v1938
          %v1940 = vand.u32 %v602, 4294901760
          %1941 = vmatpush1.msra.mxu0 %v1940
          %v1942 = vand.u32 %v605, 4294901760
          %1943 = vmatprep.subr.mxu0 %v1942
          %v1944 = vand.u32 %v604, 4294901760
          %1945 = vmatpush1.msra.mxu0 %v1944
          %v1946 = vand.u32 %v607, 4294901760
          %1947 = vmatprep.subr.mxu0 %v1946
          %v1948 = vand.u32 %v606, 4294901760
          %1949 = vmatpush1.msra.mxu0 %v1948
          %v1950 = vand.u32 %v609, 4294901760
          %1951 = vmatprep.subr.mxu0 %v1950
          %v1952 = vand.u32 %v608, 4294901760
          %1953 = vmatpush1.msra.mxu0 %v1952
          %v1954 = vand.u32 %v611, 4294901760
          %1955 = vmatprep.subr.mxu0 %v1954
          %v1956 = vand.u32 %v610, 4294901760
          %1957 = vmatpush1.msra.mxu0 %v1956
          %v1958 = vand.u32 %v613, 4294901760
          %1959 = vmatprep.subr.mxu0 %v1958
          %v1960 = vand.u32 %v612, 4294901760
          %1961 = vmatpush1.msra.mxu0 %v1960
          %v1962 = vand.u32 %v615, 4294901760
          %1963 = vmatprep.subr.mxu0 %v1962
          %v1964 = vand.u32 %v614, 4294901760
          %1965 = vmatpush1.msra.mxu0 %v1964
          %v1966 = vand.u32 %v617, 4294901760
          %1967 = vmatprep.subr.mxu0 %v1966
          %v1968 = vand.u32 %v616, 4294901760
          %1969 = vmatpush1.msra.mxu0 %v1968
          %v1970 = vand.u32 %v619, 4294901760
          %1971 = vmatprep.subr.mxu0 %v1970
          %v1972 = vand.u32 %v618, 4294901760
          %1973 = vmatpush1.msra.mxu0 %v1972
          %v1974 = vand.u32 %v621, 4294901760
          %1975 = vmatprep.subr.mxu0 %v1974
          %v1976 = vand.u32 %v620, 4294901760
          %1977 = vmatpush1.msra.mxu0 %v1976
          %v1978 = vand.u32 %v623, 4294901760
          %1979 = vmatprep.subr.mxu0 %v1978
          %v1980 = vand.u32 %v622, 4294901760
          %1981 = vmatpush1.msra.mxu0 %v1980
          %v1982 = vand.u32 %v625, 4294901760
          %1983 = vmatprep.subr.mxu0 %v1982
          %v1984 = vand.u32 %v624, 4294901760
          %1985 = vmatpush1.msra.mxu0 %v1984
          %v1986 = vand.u32 %v627, 4294901760
          %1987 = vmatprep.subr.mxu0 %v1986
          %v1988 = vand.u32 %v626, 4294901760
          %1989 = vmatpush1.msra.mxu0 %v1988
          %v1990 = vand.u32 %v629, 4294901760
          %1991 = vmatprep.subr.mxu0 %v1990
          %v1992 = vand.u32 %v628, 4294901760
          %1993 = vmatpush1.msra.mxu0 %v1992
          %v1994 = vand.u32 %v631, 4294901760
          %1995 = vmatprep.subr.mxu0 %v1994
          %v1996 = vand.u32 %v630, 4294901760
          %1997 = vmatpush1.msra.mxu0 %v1996
          %v1998 = vand.u32 %v633, 4294901760
          %1999 = vmatprep.subr.mxu0 %v1998
          %v2000 = vand.u32 %v632, 4294901760
          %2001 = vmatpush1.msra.mxu0 %v2000
          %v2002 = vand.u32 %v722, 4294901760
          %2003 = vmatprep.mubr.f32.mxu0 %v2002
          %v2004 = vand.u32 %v721, 4294901760
          %2005 = vmatmul.mubr.f32.gmra.mrb[0].mxu0 %v2004
          %v2006 = vpop.f32.mrb[0].mxu0
          %v2007 = vadd.f32 %v1870, %v2006
          %v2008 = vpop.f32.mrb[0].mxu0
          %v2009 = vadd.f32 %v1872, %v2008
          %2010 = vdwg.mxu0
          %v2011 = vand.u32 %v635, 4294901760
          %2012 = vmatprep.subr.mxu0 %v2011
          %v2013 = vand.u32 %v634, 4294901760
          %2014 = vmatpush1.msra.mxu0 %v2013
          %v2015 = vand.u32 %v637, 4294901760
          %2016 = vmatprep.subr.mxu0 %v2015
          %v2017 = vand.u32 %v636, 4294901760
          %2018 = vmatpush1.msra.mxu0 %v2017
          %v2019 = vand.u32 %v639, 4294901760
          %2020 = vmatprep.subr.mxu0 %v2019
          %v2021 = vand.u32 %v638, 4294901760
          %2022 = vmatpush1.msra.mxu0 %v2021
          %v2023 = vand.u32 %v641, 4294901760
          %2024 = vmatprep.subr.mxu0 %v2023
          %v2025 = vand.u32 %v640, 4294901760
          %2026 = vmatpush1.msra.mxu0 %v2025
          %v2027 = vand.u32 %v643, 4294901760
          %2028 = vmatprep.subr.mxu0 %v2027
          %v2029 = vand.u32 %v642, 4294901760
          %2030 = vmatpush1.msra.mxu0 %v2029
          %v2031 = vand.u32 %v645, 4294901760
          %2032 = vmatprep.subr.mxu0 %v2031
          %v2033 = vand.u32 %v644, 4294901760
          %2034 = vmatpush1.msra.mxu0 %v2033
          %v2035 = vand.u32 %v647, 4294901760
          %2036 = vmatprep.subr.mxu0 %v2035
          %v2037 = vand.u32 %v646, 4294901760
          %2038 = vmatpush1.msra.mxu0 %v2037
          %v2039 = vand.u32 %v649, 4294901760
          %2040 = vmatprep.subr.mxu0 %v2039
          %v2041 = vand.u32 %v648, 4294901760
          %2042 = vmatpush1.msra.mxu0 %v2041
          %v2043 = vand.u32 %v651, 4294901760
          %2044 = vmatprep.subr.mxu0 %v2043
          %v2045 = vand.u32 %v650, 4294901760
          %2046 = vmatpush1.msra.mxu0 %v2045
          %v2047 = vand.u32 %v653, 4294901760
          %2048 = vmatprep.subr.mxu0 %v2047
          %v2049 = vand.u32 %v652, 4294901760
          %2050 = vmatpush1.msra.mxu0 %v2049
          %v2051 = vand.u32 %v655, 4294901760
          %2052 = vmatprep.subr.mxu0 %v2051
          %v2053 = vand.u32 %v654, 4294901760
          %2054 = vmatpush1.msra.mxu0 %v2053
          %v2055 = vand.u32 %v657, 4294901760
          %2056 = vmatprep.subr.mxu0 %v2055
          %v2057 = vand.u32 %v656, 4294901760
          %2058 = vmatpush1.msra.mxu0 %v2057
          %v2059 = vand.u32 %v659, 4294901760
          %2060 = vmatprep.subr.mxu0 %v2059
          %v2061 = vand.u32 %v658, 4294901760
          %2062 = vmatpush1.msra.mxu0 %v2061
          %v2063 = vand.u32 %v661, 4294901760
          %2064 = vmatprep.subr.mxu0 %v2063
          %v2065 = vand.u32 %v660, 4294901760
          %2066 = vmatpush1.msra.mxu0 %v2065
          %v2067 = vand.u32 %v663, 4294901760
          %2068 = vmatprep.subr.mxu0 %v2067
          %v2069 = vand.u32 %v662, 4294901760
          %2070 = vmatpush1.msra.mxu0 %v2069
          %v2071 = vand.u32 %v665, 4294901760
          %2072 = vmatprep.subr.mxu0 %v2071
          %v2073 = vand.u32 %v664, 4294901760
          %2074 = vmatpush1.msra.mxu0 %v2073
          %v2075 = vand.u32 %v667, 4294901760
          %2076 = vmatprep.subr.mxu0 %v2075
          %v2077 = vand.u32 %v666, 4294901760
          %2078 = vmatpush1.msra.mxu0 %v2077
          %v2079 = vand.u32 %v669, 4294901760
          %2080 = vmatprep.subr.mxu0 %v2079
          %v2081 = vand.u32 %v668, 4294901760
          %2082 = vmatpush1.msra.mxu0 %v2081
          %v2083 = vand.u32 %v671, 4294901760
          %2084 = vmatprep.subr.mxu0 %v2083
          %v2085 = vand.u32 %v670, 4294901760
          %2086 = vmatpush1.msra.mxu0 %v2085
          %v2087 = vand.u32 %v673, 4294901760
          %2088 = vmatprep.subr.mxu0 %v2087
          %v2089 = vand.u32 %v672, 4294901760
          %2090 = vmatpush1.msra.mxu0 %v2089
          %v2091 = vand.u32 %v675, 4294901760
          %2092 = vmatprep.subr.mxu0 %v2091
          %v2093 = vand.u32 %v674, 4294901760
          %2094 = vmatpush1.msra.mxu0 %v2093
          %v2095 = vand.u32 %v677, 4294901760
          %2096 = vmatprep.subr.mxu0 %v2095
          %v2097 = vand.u32 %v676, 4294901760
          %2098 = vmatpush1.msra.mxu0 %v2097
          %v2099 = vand.u32 %v679, 4294901760
          %2100 = vmatprep.subr.mxu0 %v2099
          %v2101 = vand.u32 %v678, 4294901760
          %2102 = vmatpush1.msra.mxu0 %v2101
          %v2103 = vand.u32 %v681, 4294901760
          %2104 = vmatprep.subr.mxu0 %v2103
          %v2105 = vand.u32 %v680, 4294901760
          %2106 = vmatpush1.msra.mxu0 %v2105
          %v2107 = vand.u32 %v683, 4294901760
          %2108 = vmatprep.subr.mxu0 %v2107
          %v2109 = vand.u32 %v682, 4294901760
          %2110 = vmatpush1.msra.mxu0 %v2109
          %v2111 = vand.u32 %v685, 4294901760
          %2112 = vmatprep.subr.mxu0 %v2111
          %v2113 = vand.u32 %v684, 4294901760
          %2114 = vmatpush1.msra.mxu0 %v2113
          %v2115 = vand.u32 %v687, 4294901760
          %2116 = vmatprep.subr.mxu0 %v2115
          %v2117 = vand.u32 %v686, 4294901760
          %2118 = vmatpush1.msra.mxu0 %v2117
          %v2119 = vand.u32 %v689, 4294901760
          %2120 = vmatprep.subr.mxu0 %v2119
          %v2121 = vand.u32 %v688, 4294901760
          %2122 = vmatpush1.msra.mxu0 %v2121
          %v2123 = vand.u32 %v691, 4294901760
          %2124 = vmatprep.subr.mxu0 %v2123
          %v2125 = vand.u32 %v690, 4294901760
          %2126 = vmatpush1.msra.mxu0 %v2125
          %v2127 = vand.u32 %v693, 4294901760
          %2128 = vmatprep.subr.mxu0 %v2127
          %v2129 = vand.u32 %v692, 4294901760
          %2130 = vmatpush1.msra.mxu0 %v2129
          %v2131 = vand.u32 %v695, 4294901760
          %2132 = vmatprep.subr.mxu0 %v2131
          %v2133 = vand.u32 %v694, 4294901760
          %2134 = vmatpush1.msra.mxu0 %v2133
          %v2135 = vand.u32 %v697, 4294901760
          %2136 = vmatprep.subr.mxu0 %v2135
          %v2137 = vand.u32 %v696, 4294901760
          %2138 = vmatpush1.msra.mxu0 %v2137
          %v2139 = vand.u32 %v724, 4294901760
          %v2140 = vsub.f32 %v724, %v2139
          %v2141 = vand.u32 %v2140, 4294901760
          %v2142 = vsub.f32 %v2140, %v2141
          %v2143 = vand.u32 %v2142, 4294901760
          %2144 = vmatprep.mubr.f32.mxu0 %v2143
          %v2145 = vand.u32 %v723, 4294901760
          %v2146 = vsub.f32 %v723, %v2145
          %v2147 = vand.u32 %v2146, 4294901760
          %v2148 = vsub.f32 %v2146, %v2147
          %v2149 = vand.u32 %v2148, 4294901760
          %2150 = vmatmul.mubr.f32.gmra.mrb[0].mxu0 %v2149
          %v2151 = vpop.f32.mrb[0].mxu0
          %v2152 = vadd.f32 %v2007, %v2151
          %v2153 = vpop.f32.mrb[0].mxu0
          %v2154 = vadd.f32 %v2009, %v2153
          %2155 = vdwg.mxu0
          %v2156 = vand.u32 %v635, 4294901760
          %v2157 = vsub.f32 %v635, %v2156
          %v2158 = vand.u32 %v2157, 4294901760
          %v2159 = vsub.f32 %v2157, %v2158
          %v2160 = vand.u32 %v2159, 4294901760
          %2161 = vmatprep.subr.mxu0 %v2160
          %v2162 = vand.u32 %v634, 4294901760
          %v2163 = vsub.f32 %v634, %v2162
          %v2164 = vand.u32 %v2163, 4294901760
          %v2165 = vsub.f32 %v2163, %v2164
          %v2166 = vand.u32 %v2165, 4294901760
          %2167 = vmatpush1.msra.mxu0 %v2166
          %v2168 = vand.u32 %v637, 4294901760
          %v2169 = vsub.f32 %v637, %v2168
          %v2170 = vand.u32 %v2169, 4294901760
          %v2171 = vsub.f32 %v2169, %v2170
          %v2172 = vand.u32 %v2171, 4294901760
          %2173 = vmatprep.subr.mxu0 %v2172
          %v2174 = vand.u32 %v636, 4294901760
          %v2175 = vsub.f32 %v636, %v2174
          %v2176 = vand.u32 %v2175, 4294901760
          %v2177 = vsub.f32 %v2175, %v2176
          %v2178 = vand.u32 %v2177, 4294901760
          %2179 = vmatpush1.msra.mxu0 %v2178
          %v2180 = vand.u32 %v639, 4294901760
          %v2181 = vsub.f32 %v639, %v2180
          %v2182 = vand.u32 %v2181, 4294901760
          %v2183 = vsub.f32 %v2181, %v2182
          %v2184 = vand.u32 %v2183, 4294901760
          %2185 = vmatprep.subr.mxu0 %v2184
          %v2186 = vand.u32 %v638, 4294901760
          %v2187 = vsub.f32 %v638, %v2186
          %v2188 = vand.u32 %v2187, 4294901760
          %v2189 = vsub.f32 %v2187, %v2188
          %v2190 = vand.u32 %v2189, 4294901760
          %2191 = vmatpush1.msra.mxu0 %v2190
          %v2192 = vand.u32 %v641, 4294901760
          %v2193 = vsub.f32 %v641, %v2192
          %v2194 = vand.u32 %v2193, 4294901760
          %v2195 = vsub.f32 %v2193, %v2194
          %v2196 = vand.u32 %v2195, 4294901760
          %2197 = vmatprep.subr.mxu0 %v2196
          %v2198 = vand.u32 %v640, 4294901760
          %v2199 = vsub.f32 %v640, %v2198
          %v2200 = vand.u32 %v2199, 4294901760
          %v2201 = vsub.f32 %v2199, %v2200
          %v2202 = vand.u32 %v2201, 4294901760
          %2203 = vmatpush1.msra.mxu0 %v2202
          %v2204 = vand.u32 %v643, 4294901760
          %v2205 = vsub.f32 %v643, %v2204
          %v2206 = vand.u32 %v2205, 4294901760
          %v2207 = vsub.f32 %v2205, %v2206
          %v2208 = vand.u32 %v2207, 4294901760
          %2209 = vmatprep.subr.mxu0 %v2208
          %v2210 = vand.u32 %v642, 4294901760
          %v2211 = vsub.f32 %v642, %v2210
          %v2212 = vand.u32 %v2211, 4294901760
          %v2213 = vsub.f32 %v2211, %v2212
          %v2214 = vand.u32 %v2213, 4294901760
          %2215 = vmatpush1.msra.mxu0 %v2214
          %v2216 = vand.u32 %v645, 4294901760
          %v2217 = vsub.f32 %v645, %v2216
          %v2218 = vand.u32 %v2217, 4294901760
          %v2219 = vsub.f32 %v2217, %v2218
          %v2220 = vand.u32 %v2219, 4294901760
          %2221 = vmatprep.subr.mxu0 %v2220
          %v2222 = vand.u32 %v644, 4294901760
          %v2223 = vsub.f32 %v644, %v2222
          %v2224 = vand.u32 %v2223, 4294901760
          %v2225 = vsub.f32 %v2223, %v2224
          %v2226 = vand.u32 %v2225, 4294901760
          %2227 = vmatpush1.msra.mxu0 %v2226
          %v2228 = vand.u32 %v647, 4294901760
          %v2229 = vsub.f32 %v647, %v2228
          %v2230 = vand.u32 %v2229, 4294901760
          %v2231 = vsub.f32 %v2229, %v2230
          %v2232 = vand.u32 %v2231, 4294901760
          %2233 = vmatprep.subr.mxu0 %v2232
          %v2234 = vand.u32 %v646, 4294901760
          %v2235 = vsub.f32 %v646, %v2234
          %v2236 = vand.u32 %v2235, 4294901760
          %v2237 = vsub.f32 %v2235, %v2236
          %v2238 = vand.u32 %v2237, 4294901760
          %2239 = vmatpush1.msra.mxu0 %v2238
          %v2240 = vand.u32 %v649, 4294901760
          %v2241 = vsub.f32 %v649, %v2240
          %v2242 = vand.u32 %v2241, 4294901760
          %v2243 = vsub.f32 %v2241, %v2242
          %v2244 = vand.u32 %v2243, 4294901760
          %2245 = vmatprep.subr.mxu0 %v2244
          %v2246 = vand.u32 %v648, 4294901760
          %v2247 = vsub.f32 %v648, %v2246
          %v2248 = vand.u32 %v2247, 4294901760
          %v2249 = vsub.f32 %v2247, %v2248
          %v2250 = vand.u32 %v2249, 4294901760
          %2251 = vmatpush1.msra.mxu0 %v2250
          %v2252 = vand.u32 %v651, 4294901760
          %v2253 = vsub.f32 %v651, %v2252
          %v2254 = vand.u32 %v2253, 4294901760
          %v2255 = vsub.f32 %v2253, %v2254
          %v2256 = vand.u32 %v2255, 4294901760
          %2257 = vmatprep.subr.mxu0 %v2256
          %v2258 = vand.u32 %v650, 4294901760
          %v2259 = vsub.f32 %v650, %v2258
          %v2260 = vand.u32 %v2259, 4294901760
          %v2261 = vsub.f32 %v2259, %v2260
          %v2262 = vand.u32 %v2261, 4294901760
          %2263 = vmatpush1.msra.mxu0 %v2262
          %v2264 = vand.u32 %v653, 4294901760
          %v2265 = vsub.f32 %v653, %v2264
          %v2266 = vand.u32 %v2265, 4294901760
          %v2267 = vsub.f32 %v2265, %v2266
          %v2268 = vand.u32 %v2267, 4294901760
          %2269 = vmatprep.subr.mxu0 %v2268
          %v2270 = vand.u32 %v652, 4294901760
          %v2271 = vsub.f32 %v652, %v2270
          %v2272 = vand.u32 %v2271, 4294901760
          %v2273 = vsub.f32 %v2271, %v2272
          %v2274 = vand.u32 %v2273, 4294901760
          %2275 = vmatpush1.msra.mxu0 %v2274
          %v2276 = vand.u32 %v655, 4294901760
          %v2277 = vsub.f32 %v655, %v2276
          %v2278 = vand.u32 %v2277, 4294901760
          %v2279 = vsub.f32 %v2277, %v2278
          %v2280 = vand.u32 %v2279, 4294901760
          %2281 = vmatprep.subr.mxu0 %v2280
          %v2282 = vand.u32 %v654, 4294901760
          %v2283 = vsub.f32 %v654, %v2282
          %v2284 = vand.u32 %v2283, 4294901760
          %v2285 = vsub.f32 %v2283, %v2284
          %v2286 = vand.u32 %v2285, 4294901760
          %2287 = vmatpush1.msra.mxu0 %v2286
          %v2288 = vand.u32 %v657, 4294901760
          %v2289 = vsub.f32 %v657, %v2288
          %v2290 = vand.u32 %v2289, 4294901760
          %v2291 = vsub.f32 %v2289, %v2290
          %v2292 = vand.u32 %v2291, 4294901760
          %2293 = vmatprep.subr.mxu0 %v2292
          %v2294 = vand.u32 %v656, 4294901760
          %v2295 = vsub.f32 %v656, %v2294
          %v2296 = vand.u32 %v2295, 4294901760
          %v2297 = vsub.f32 %v2295, %v2296
          %v2298 = vand.u32 %v2297, 4294901760
          %2299 = vmatpush1.msra.mxu0 %v2298
          %v2300 = vand.u32 %v659, 4294901760
          %v2301 = vsub.f32 %v659, %v2300
          %v2302 = vand.u32 %v2301, 4294901760
          %v2303 = vsub.f32 %v2301, %v2302
          %v2304 = vand.u32 %v2303, 4294901760
          %2305 = vmatprep.subr.mxu0 %v2304
          %v2306 = vand.u32 %v658, 4294901760
          %v2307 = vsub.f32 %v658, %v2306
          %v2308 = vand.u32 %v2307, 4294901760
          %v2309 = vsub.f32 %v2307, %v2308
          %v2310 = vand.u32 %v2309, 4294901760
          %2311 = vmatpush1.msra.mxu0 %v2310
          %v2312 = vand.u32 %v661, 4294901760
          %v2313 = vsub.f32 %v661, %v2312
          %v2314 = vand.u32 %v2313, 4294901760
          %v2315 = vsub.f32 %v2313, %v2314
          %v2316 = vand.u32 %v2315, 4294901760
          %2317 = vmatprep.subr.mxu0 %v2316
          %v2318 = vand.u32 %v660, 4294901760
          %v2319 = vsub.f32 %v660, %v2318
          %v2320 = vand.u32 %v2319, 4294901760
          %v2321 = vsub.f32 %v2319, %v2320
          %v2322 = vand.u32 %v2321, 4294901760
          %2323 = vmatpush1.msra.mxu0 %v2322
          %v2324 = vand.u32 %v663, 4294901760
          %v2325 = vsub.f32 %v663, %v2324
          %v2326 = vand.u32 %v2325, 4294901760
          %v2327 = vsub.f32 %v2325, %v2326
          %v2328 = vand.u32 %v2327, 4294901760
          %2329 = vmatprep.subr.mxu0 %v2328
          %v2330 = vand.u32 %v662, 4294901760
          %v2331 = vsub.f32 %v662, %v2330
          %v2332 = vand.u32 %v2331, 4294901760
          %v2333 = vsub.f32 %v2331, %v2332
          %v2334 = vand.u32 %v2333, 4294901760
          %2335 = vmatpush1.msra.mxu0 %v2334
          %v2336 = vand.u32 %v665, 4294901760
          %v2337 = vsub.f32 %v665, %v2336
          %v2338 = vand.u32 %v2337, 4294901760
          %v2339 = vsub.f32 %v2337, %v2338
          %v2340 = vand.u32 %v2339, 4294901760
          %2341 = vmatprep.subr.mxu0 %v2340
          %v2342 = vand.u32 %v664, 4294901760
          %v2343 = vsub.f32 %v664, %v2342
          %v2344 = vand.u32 %v2343, 4294901760
          %v2345 = vsub.f32 %v2343, %v2344
          %v2346 = vand.u32 %v2345, 4294901760
          %2347 = vmatpush1.msra.mxu0 %v2346
          %v2348 = vand.u32 %v667, 4294901760
          %v2349 = vsub.f32 %v667, %v2348
          %v2350 = vand.u32 %v2349, 4294901760
          %v2351 = vsub.f32 %v2349, %v2350
          %v2352 = vand.u32 %v2351, 4294901760
          %2353 = vmatprep.subr.mxu0 %v2352
          %v2354 = vand.u32 %v666, 4294901760
          %v2355 = vsub.f32 %v666, %v2354
          %v2356 = vand.u32 %v2355, 4294901760
          %v2357 = vsub.f32 %v2355, %v2356
          %v2358 = vand.u32 %v2357, 4294901760
          %2359 = vmatpush1.msra.mxu0 %v2358
          %v2360 = vand.u32 %v669, 4294901760
          %v2361 = vsub.f32 %v669, %v2360
          %v2362 = vand.u32 %v2361, 4294901760
          %v2363 = vsub.f32 %v2361, %v2362
          %v2364 = vand.u32 %v2363, 4294901760
          %2365 = vmatprep.subr.mxu0 %v2364
          %v2366 = vand.u32 %v668, 4294901760
          %v2367 = vsub.f32 %v668, %v2366
          %v2368 = vand.u32 %v2367, 4294901760
          %v2369 = vsub.f32 %v2367, %v2368
          %v2370 = vand.u32 %v2369, 4294901760
          %2371 = vmatpush1.msra.mxu0 %v2370
          %v2372 = vand.u32 %v671, 4294901760
          %v2373 = vsub.f32 %v671, %v2372
          %v2374 = vand.u32 %v2373, 4294901760
          %v2375 = vsub.f32 %v2373, %v2374
          %v2376 = vand.u32 %v2375, 4294901760
          %2377 = vmatprep.subr.mxu0 %v2376
          %v2378 = vand.u32 %v670, 4294901760
          %v2379 = vsub.f32 %v670, %v2378
          %v2380 = vand.u32 %v2379, 4294901760
          %v2381 = vsub.f32 %v2379, %v2380
          %v2382 = vand.u32 %v2381, 4294901760
          %2383 = vmatpush1.msra.mxu0 %v2382
          %v2384 = vand.u32 %v673, 4294901760
          %v2385 = vsub.f32 %v673, %v2384
          %v2386 = vand.u32 %v2385, 4294901760
          %v2387 = vsub.f32 %v2385, %v2386
          %v2388 = vand.u32 %v2387, 4294901760
          %2389 = vmatprep.subr.mxu0 %v2388
          %v2390 = vand.u32 %v672, 4294901760
          %v2391 = vsub.f32 %v672, %v2390
          %v2392 = vand.u32 %v2391, 4294901760
          %v2393 = vsub.f32 %v2391, %v2392
          %v2394 = vand.u32 %v2393, 4294901760
          %2395 = vmatpush1.msra.mxu0 %v2394
          %v2396 = vand.u32 %v675, 4294901760
          %v2397 = vsub.f32 %v675, %v2396
          %v2398 = vand.u32 %v2397, 4294901760
          %v2399 = vsub.f32 %v2397, %v2398
          %v2400 = vand.u32 %v2399, 4294901760
          %2401 = vmatprep.subr.mxu0 %v2400
          %v2402 = vand.u32 %v674, 4294901760
          %v2403 = vsub.f32 %v674, %v2402
          %v2404 = vand.u32 %v2403, 4294901760
          %v2405 = vsub.f32 %v2403, %v2404
          %v2406 = vand.u32 %v2405, 4294901760
          %2407 = vmatpush1.msra.mxu0 %v2406
          %v2408 = vand.u32 %v677, 4294901760
          %v2409 = vsub.f32 %v677, %v2408
          %v2410 = vand.u32 %v2409, 4294901760
          %v2411 = vsub.f32 %v2409, %v2410
          %v2412 = vand.u32 %v2411, 4294901760
          %2413 = vmatprep.subr.mxu0 %v2412
          %v2414 = vand.u32 %v676, 4294901760
          %v2415 = vsub.f32 %v676, %v2414
          %v2416 = vand.u32 %v2415, 4294901760
          %v2417 = vsub.f32 %v2415, %v2416
          %v2418 = vand.u32 %v2417, 4294901760
          %2419 = vmatpush1.msra.mxu0 %v2418
          %v2420 = vand.u32 %v679, 4294901760
          %v2421 = vsub.f32 %v679, %v2420
          %v2422 = vand.u32 %v2421, 4294901760
          %v2423 = vsub.f32 %v2421, %v2422
          %v2424 = vand.u32 %v2423, 4294901760
          %2425 = vmatprep.subr.mxu0 %v2424
          %v2426 = vand.u32 %v678, 4294901760
          %v2427 = vsub.f32 %v678, %v2426
          %v2428 = vand.u32 %v2427, 4294901760
          %v2429 = vsub.f32 %v2427, %v2428
          %v2430 = vand.u32 %v2429, 4294901760
          %2431 = vmatpush1.msra.mxu0 %v2430
          %v2432 = vand.u32 %v681, 4294901760
          %v2433 = vsub.f32 %v681, %v2432
          %v2434 = vand.u32 %v2433, 4294901760
          %v2435 = vsub.f32 %v2433, %v2434
          %v2436 = vand.u32 %v2435, 4294901760
          %2437 = vmatprep.subr.mxu0 %v2436
          %v2438 = vand.u32 %v680, 4294901760
          %v2439 = vsub.f32 %v680, %v2438
          %v2440 = vand.u32 %v2439, 4294901760
          %v2441 = vsub.f32 %v2439, %v2440
          %v2442 = vand.u32 %v2441, 4294901760
          %2443 = vmatpush1.msra.mxu0 %v2442
          %v2444 = vand.u32 %v683, 4294901760
          %v2445 = vsub.f32 %v683, %v2444
          %v2446 = vand.u32 %v2445, 4294901760
          %v2447 = vsub.f32 %v2445, %v2446
          %v2448 = vand.u32 %v2447, 4294901760
          %2449 = vmatprep.subr.mxu0 %v2448
          %v2450 = vand.u32 %v682, 4294901760
          %v2451 = vsub.f32 %v682, %v2450
          %v2452 = vand.u32 %v2451, 4294901760
          %v2453 = vsub.f32 %v2451, %v2452
          %v2454 = vand.u32 %v2453, 4294901760
          %2455 = vmatpush1.msra.mxu0 %v2454
          %v2456 = vand.u32 %v685, 4294901760
          %v2457 = vsub.f32 %v685, %v2456
          %v2458 = vand.u32 %v2457, 4294901760
          %v2459 = vsub.f32 %v2457, %v2458
          %v2460 = vand.u32 %v2459, 4294901760
          %2461 = vmatprep.subr.mxu0 %v2460
          %v2462 = vand.u32 %v684, 4294901760
          %v2463 = vsub.f32 %v684, %v2462
          %v2464 = vand.u32 %v2463, 4294901760
          %v2465 = vsub.f32 %v2463, %v2464
          %v2466 = vand.u32 %v2465, 4294901760
          %2467 = vmatpush1.msra.mxu0 %v2466
          %v2468 = vand.u32 %v687, 4294901760
          %v2469 = vsub.f32 %v687, %v2468
          %v2470 = vand.u32 %v2469, 4294901760
          %v2471 = vsub.f32 %v2469, %v2470
          %v2472 = vand.u32 %v2471, 4294901760
          %2473 = vmatprep.subr.mxu0 %v2472
          %v2474 = vand.u32 %v686, 4294901760
          %v2475 = vsub.f32 %v686, %v2474
          %v2476 = vand.u32 %v2475, 4294901760
          %v2477 = vsub.f32 %v2475, %v2476
          %v2478 = vand.u32 %v2477, 4294901760
          %2479 = vmatpush1.msra.mxu0 %v2478
          %v2480 = vand.u32 %v689, 4294901760
          %v2481 = vsub.f32 %v689, %v2480
          %v2482 = vand.u32 %v2481, 4294901760
          %v2483 = vsub.f32 %v2481, %v2482
          %v2484 = vand.u32 %v2483, 4294901760
          %2485 = vmatprep.subr.mxu0 %v2484
          %v2486 = vand.u32 %v688, 4294901760
          %v2487 = vsub.f32 %v688, %v2486
          %v2488 = vand.u32 %v2487, 4294901760
          %v2489 = vsub.f32 %v2487, %v2488
          %v2490 = vand.u32 %v2489, 4294901760
          %2491 = vmatpush1.msra.mxu0 %v2490
          %v2492 = vand.u32 %v691, 4294901760
          %v2493 = vsub.f32 %v691, %v2492
          %v2494 = vand.u32 %v2493, 4294901760
          %v2495 = vsub.f32 %v2493, %v2494
          %v2496 = vand.u32 %v2495, 4294901760
          %2497 = vmatprep.subr.mxu0 %v2496
          %v2498 = vand.u32 %v690, 4294901760
          %v2499 = vsub.f32 %v690, %v2498
          %v2500 = vand.u32 %v2499, 4294901760
          %v2501 = vsub.f32 %v2499, %v2500
          %v2502 = vand.u32 %v2501, 4294901760
          %2503 = vmatpush1.msra.mxu0 %v2502
          %v2504 = vand.u32 %v693, 4294901760
          %v2505 = vsub.f32 %v693, %v2504
          %v2506 = vand.u32 %v2505, 4294901760
          %v2507 = vsub.f32 %v2505, %v2506
          %v2508 = vand.u32 %v2507, 4294901760
          %2509 = vmatprep.subr.mxu0 %v2508
          %v2510 = vand.u32 %v692, 4294901760
          %v2511 = vsub.f32 %v692, %v2510
          %v2512 = vand.u32 %v2511, 4294901760
          %v2513 = vsub.f32 %v2511, %v2512
          %v2514 = vand.u32 %v2513, 4294901760
          %2515 = vmatpush1.msra.mxu0 %v2514
          %v2516 = vand.u32 %v695, 4294901760
          %v2517 = vsub.f32 %v695, %v2516
          %v2518 = vand.u32 %v2517, 4294901760
          %v2519 = vsub.f32 %v2517, %v2518
          %v2520 = vand.u32 %v2519, 4294901760
          %2521 = vmatprep.subr.mxu0 %v2520
          %v2522 = vand.u32 %v694, 4294901760
          %v2523 = vsub.f32 %v694, %v2522
          %v2524 = vand.u32 %v2523, 4294901760
          %v2525 = vsub.f32 %v2523, %v2524
          %v2526 = vand.u32 %v2525, 4294901760
          %2527 = vmatpush1.msra.mxu0 %v2526
          %v2528 = vand.u32 %v697, 4294901760
          %v2529 = vsub.f32 %v697, %v2528
          %v2530 = vand.u32 %v2529, 4294901760
          %v2531 = vsub.f32 %v2529, %v2530
          %v2532 = vand.u32 %v2531, 4294901760
          %2533 = vmatprep.subr.mxu0 %v2532
          %v2534 = vand.u32 %v696, 4294901760
          %v2535 = vsub.f32 %v696, %v2534
          %v2536 = vand.u32 %v2535, 4294901760
          %v2537 = vsub.f32 %v2535, %v2536
          %v2538 = vand.u32 %v2537, 4294901760
          %2539 = vmatpush1.msra.mxu0 %v2538
          %v2540 = vand.u32 %v724, 4294901760
          %2541 = vmatprep.mubr.f32.mxu0 %v2540
          %v2542 = vand.u32 %v723, 4294901760
          %2543 = vmatmul.mubr.f32.gmra.mrb[0].mxu0 %v2542
          %v2544 = vpop.f32.mrb[0].mxu0
          %v2545 = vadd.f32 %v2152, %v2544
          %v2546 = vpop.f32.mrb[0].mxu0
          %v2547 = vadd.f32 %v2154, %v2546
          %2548 = vdwg.mxu0
          %v2549 = vand.u32 %v635, 4294901760
          %v2550 = vsub.f32 %v635, %v2549
          %2551 = vmatprep.subr.mxu0 %v2550
          %v2552 = vand.u32 %v634, 4294901760
          %v2553 = vsub.f32 %v634, %v2552
          %2554 = vmatpush1.msra.mxu0 %v2553
          %v2555 = vand.u32 %v637, 4294901760
          %v2556 = vsub.f32 %v637, %v2555
          %2557 = vmatprep.subr.mxu0 %v2556
          %v2558 = vand.u32 %v636, 4294901760
          %v2559 = vsub.f32 %v636, %v2558
          %2560 = vmatpush1.msra.mxu0 %v2559
          %v2561 = vand.u32 %v639, 4294901760
          %v2562 = vsub.f32 %v639, %v2561
          %2563 = vmatprep.subr.mxu0 %v2562
          %v2564 = vand.u32 %v638, 4294901760
          %v2565 = vsub.f32 %v638, %v2564
          %2566 = vmatpush1.msra.mxu0 %v2565
          %v2567 = vand.u32 %v641, 4294901760
          %v2568 = vsub.f32 %v641, %v2567
          %2569 = vmatprep.subr.mxu0 %v2568
          %v2570 = vand.u32 %v640, 4294901760
          %v2571 = vsub.f32 %v640, %v2570
          %2572 = vmatpush1.msra.mxu0 %v2571
          %v2573 = vand.u32 %v643, 4294901760
          %v2574 = vsub.f32 %v643, %v2573
          %2575 = vmatprep.subr.mxu0 %v2574
          %v2576 = vand.u32 %v642, 4294901760
          %v2577 = vsub.f32 %v642, %v2576
          %2578 = vmatpush1.msra.mxu0 %v2577
          %v2579 = vand.u32 %v645, 4294901760
          %v2580 = vsub.f32 %v645, %v2579
          %2581 = vmatprep.subr.mxu0 %v2580
          %v2582 = vand.u32 %v644, 4294901760
          %v2583 = vsub.f32 %v644, %v2582
          %2584 = vmatpush1.msra.mxu0 %v2583
          %v2585 = vand.u32 %v647, 4294901760
          %v2586 = vsub.f32 %v647, %v2585
          %2587 = vmatprep.subr.mxu0 %v2586
          %v2588 = vand.u32 %v646, 4294901760
          %v2589 = vsub.f32 %v646, %v2588
          %2590 = vmatpush1.msra.mxu0 %v2589
          %v2591 = vand.u32 %v649, 4294901760
          %v2592 = vsub.f32 %v649, %v2591
          %2593 = vmatprep.subr.mxu0 %v2592
          %v2594 = vand.u32 %v648, 4294901760
          %v2595 = vsub.f32 %v648, %v2594
          %2596 = vmatpush1.msra.mxu0 %v2595
          %v2597 = vand.u32 %v651, 4294901760
          %v2598 = vsub.f32 %v651, %v2597
          %2599 = vmatprep.subr.mxu0 %v2598
          %v2600 = vand.u32 %v650, 4294901760
          %v2601 = vsub.f32 %v650, %v2600
          %2602 = vmatpush1.msra.mxu0 %v2601
          %v2603 = vand.u32 %v653, 4294901760
          %v2604 = vsub.f32 %v653, %v2603
          %2605 = vmatprep.subr.mxu0 %v2604
          %v2606 = vand.u32 %v652, 4294901760
          %v2607 = vsub.f32 %v652, %v2606
          %2608 = vmatpush1.msra.mxu0 %v2607
          %v2609 = vand.u32 %v655, 4294901760
          %v2610 = vsub.f32 %v655, %v2609
          %2611 = vmatprep.subr.mxu0 %v2610
          %v2612 = vand.u32 %v654, 4294901760
          %v2613 = vsub.f32 %v654, %v2612
          %2614 = vmatpush1.msra.mxu0 %v2613
          %v2615 = vand.u32 %v657, 4294901760
          %v2616 = vsub.f32 %v657, %v2615
          %2617 = vmatprep.subr.mxu0 %v2616
          %v2618 = vand.u32 %v656, 4294901760
          %v2619 = vsub.f32 %v656, %v2618
          %2620 = vmatpush1.msra.mxu0 %v2619
          %v2621 = vand.u32 %v659, 4294901760
          %v2622 = vsub.f32 %v659, %v2621
          %2623 = vmatprep.subr.mxu0 %v2622
          %v2624 = vand.u32 %v658, 4294901760
          %v2625 = vsub.f32 %v658, %v2624
          %2626 = vmatpush1.msra.mxu0 %v2625
          %v2627 = vand.u32 %v661, 4294901760
          %v2628 = vsub.f32 %v661, %v2627
          %2629 = vmatprep.subr.mxu0 %v2628
          %v2630 = vand.u32 %v660, 4294901760
          %v2631 = vsub.f32 %v660, %v2630
          %2632 = vmatpush1.msra.mxu0 %v2631
          %v2633 = vand.u32 %v663, 4294901760
          %v2634 = vsub.f32 %v663, %v2633
          %2635 = vmatprep.subr.mxu0 %v2634
          %v2636 = vand.u32 %v662, 4294901760
          %v2637 = vsub.f32 %v662, %v2636
          %2638 = vmatpush1.msra.mxu0 %v2637
          %v2639 = vand.u32 %v665, 4294901760
          %v2640 = vsub.f32 %v665, %v2639
          %2641 = vmatprep.subr.mxu0 %v2640
          %v2642 = vand.u32 %v664, 4294901760
          %v2643 = vsub.f32 %v664, %v2642
          %2644 = vmatpush1.msra.mxu0 %v2643
          %v2645 = vand.u32 %v667, 4294901760
          %v2646 = vsub.f32 %v667, %v2645
          %2647 = vmatprep.subr.mxu0 %v2646
          %v2648 = vand.u32 %v666, 4294901760
          %v2649 = vsub.f32 %v666, %v2648
          %2650 = vmatpush1.msra.mxu0 %v2649
          %v2651 = vand.u32 %v669, 4294901760
          %v2652 = vsub.f32 %v669, %v2651
          %2653 = vmatprep.subr.mxu0 %v2652
          %v2654 = vand.u32 %v668, 4294901760
          %v2655 = vsub.f32 %v668, %v2654
          %2656 = vmatpush1.msra.mxu0 %v2655
          %v2657 = vand.u32 %v671, 4294901760
          %v2658 = vsub.f32 %v671, %v2657
          %2659 = vmatprep.subr.mxu0 %v2658
          %v2660 = vand.u32 %v670, 4294901760
          %v2661 = vsub.f32 %v670, %v2660
          %2662 = vmatpush1.msra.mxu0 %v2661
          %v2663 = vand.u32 %v673, 4294901760
          %v2664 = vsub.f32 %v673, %v2663
          %2665 = vmatprep.subr.mxu0 %v2664
          %v2666 = vand.u32 %v672, 4294901760
          %v2667 = vsub.f32 %v672, %v2666
          %2668 = vmatpush1.msra.mxu0 %v2667
          %v2669 = vand.u32 %v675, 4294901760
          %v2670 = vsub.f32 %v675, %v2669
          %2671 = vmatprep.subr.mxu0 %v2670
          %v2672 = vand.u32 %v674, 4294901760
          %v2673 = vsub.f32 %v674, %v2672
          %2674 = vmatpush1.msra.mxu0 %v2673
          %v2675 = vand.u32 %v677, 4294901760
          %v2676 = vsub.f32 %v677, %v2675
          %2677 = vmatprep.subr.mxu0 %v2676
          %v2678 = vand.u32 %v676, 4294901760
          %v2679 = vsub.f32 %v676, %v2678
          %2680 = vmatpush1.msra.mxu0 %v2679
          %v2681 = vand.u32 %v679, 4294901760
          %v2682 = vsub.f32 %v679, %v2681
          %2683 = vmatprep.subr.mxu0 %v2682
          %v2684 = vand.u32 %v678, 4294901760
          %v2685 = vsub.f32 %v678, %v2684
          %2686 = vmatpush1.msra.mxu0 %v2685
          %v2687 = vand.u32 %v681, 4294901760
          %v2688 = vsub.f32 %v681, %v2687
          %2689 = vmatprep.subr.mxu0 %v2688
          %v2690 = vand.u32 %v680, 4294901760
          %v2691 = vsub.f32 %v680, %v2690
          %2692 = vmatpush1.msra.mxu0 %v2691
          %v2693 = vand.u32 %v683, 4294901760
          %v2694 = vsub.f32 %v683, %v2693
          %2695 = vmatprep.subr.mxu0 %v2694
          %v2696 = vand.u32 %v682, 4294901760
          %v2697 = vsub.f32 %v682, %v2696
          %2698 = vmatpush1.msra.mxu0 %v2697
          %v2699 = vand.u32 %v685, 4294901760
          %v2700 = vsub.f32 %v685, %v2699
          %2701 = vmatprep.subr.mxu0 %v2700
          %v2702 = vand.u32 %v684, 4294901760
          %v2703 = vsub.f32 %v684, %v2702
          %2704 = vmatpush1.msra.mxu0 %v2703
          %v2705 = vand.u32 %v687, 4294901760
          %v2706 = vsub.f32 %v687, %v2705
          %2707 = vmatprep.subr.mxu0 %v2706
          %v2708 = vand.u32 %v686, 4294901760
          %v2709 = vsub.f32 %v686, %v2708
          %2710 = vmatpush1.msra.mxu0 %v2709
          %v2711 = vand.u32 %v689, 4294901760
          %v2712 = vsub.f32 %v689, %v2711
          %2713 = vmatprep.subr.mxu0 %v2712
          %v2714 = vand.u32 %v688, 4294901760
          %v2715 = vsub.f32 %v688, %v2714
          %2716 = vmatpush1.msra.mxu0 %v2715
          %v2717 = vand.u32 %v691, 4294901760
          %v2718 = vsub.f32 %v691, %v2717
          %2719 = vmatprep.subr.mxu0 %v2718
          %v2720 = vand.u32 %v690, 4294901760
          %v2721 = vsub.f32 %v690, %v2720
          %2722 = vmatpush1.msra.mxu0 %v2721
          %v2723 = vand.u32 %v693, 4294901760
          %v2724 = vsub.f32 %v693, %v2723
          %2725 = vmatprep.subr.mxu0 %v2724
          %v2726 = vand.u32 %v692, 4294901760
          %v2727 = vsub.f32 %v692, %v2726
          %2728 = vmatpush1.msra.mxu0 %v2727
          %v2729 = vand.u32 %v695, 4294901760
          %v2730 = vsub.f32 %v695, %v2729
          %2731 = vmatprep.subr.mxu0 %v2730
          %v2732 = vand.u32 %v694, 4294901760
          %v2733 = vsub.f32 %v694, %v2732
          %2734 = vmatpush1.msra.mxu0 %v2733
          %v2735 = vand.u32 %v697, 4294901760
          %v2736 = vsub.f32 %v697, %v2735
          %2737 = vmatprep.subr.mxu0 %v2736
          %v2738 = vand.u32 %v696, 4294901760
          %v2739 = vsub.f32 %v696, %v2738
          %2740 = vmatpush1.msra.mxu0 %v2739
          %v2741 = vand.u32 %v724, 4294901760
          %v2742 = vsub.f32 %v724, %v2741
          %2743 = vmatprep.mubr.f32.mxu0 %v2742
          %v2744 = vand.u32 %v723, 4294901760
          %v2745 = vsub.f32 %v723, %v2744
          %2746 = vmatmul.mubr.f32.gmra.mrb[0].mxu0 %v2745
          %v2747 = vpop.f32.mrb[0].mxu0
          %v2748 = vadd.f32 %v2545, %v2747
          %v2749 = vpop.f32.mrb[0].mxu0
          %v2750 = vadd.f32 %v2547, %v2749
          %2751 = vdwg.mxu0
          %v2752 = vand.u32 %v635, 4294901760
          %2753 = vmatprep.subr.mxu0 %v2752
          %v2754 = vand.u32 %v634, 4294901760
          %2755 = vmatpush1.msra.mxu0 %v2754
          %v2756 = vand.u32 %v637, 4294901760
          %2757 = vmatprep.subr.mxu0 %v2756
          %v2758 = vand.u32 %v636, 4294901760
          %2759 = vmatpush1.msra.mxu0 %v2758
          %v2760 = vand.u32 %v639, 4294901760
          %2761 = vmatprep.subr.mxu0 %v2760
          %v2762 = vand.u32 %v638, 4294901760
          %2763 = vmatpush1.msra.mxu0 %v2762
          %v2764 = vand.u32 %v641, 4294901760
          %2765 = vmatprep.subr.mxu0 %v2764
          %v2766 = vand.u32 %v640, 4294901760
          %2767 = vmatpush1.msra.mxu0 %v2766
          %v2768 = vand.u32 %v643, 4294901760
          %2769 = vmatprep.subr.mxu0 %v2768
          %v2770 = vand.u32 %v642, 4294901760
          %2771 = vmatpush1.msra.mxu0 %v2770
          %v2772 = vand.u32 %v645, 4294901760
          %2773 = vmatprep.subr.mxu0 %v2772
          %v2774 = vand.u32 %v644, 4294901760
          %2775 = vmatpush1.msra.mxu0 %v2774
          %v2776 = vand.u32 %v647, 4294901760
          %2777 = vmatprep.subr.mxu0 %v2776
          %v2778 = vand.u32 %v646, 4294901760
          %2779 = vmatpush1.msra.mxu0 %v2778
          %v2780 = vand.u32 %v649, 4294901760
          %2781 = vmatprep.subr.mxu0 %v2780
          %v2782 = vand.u32 %v648, 4294901760
          %2783 = vmatpush1.msra.mxu0 %v2782
          %v2784 = vand.u32 %v651, 4294901760
          %2785 = vmatprep.subr.mxu0 %v2784
          %v2786 = vand.u32 %v650, 4294901760
          %2787 = vmatpush1.msra.mxu0 %v2786
          %v2788 = vand.u32 %v653, 4294901760
          %2789 = vmatprep.subr.mxu0 %v2788
          %v2790 = vand.u32 %v652, 4294901760
          %2791 = vmatpush1.msra.mxu0 %v2790
          %v2792 = vand.u32 %v655, 4294901760
          %2793 = vmatprep.subr.mxu0 %v2792
          %v2794 = vand.u32 %v654, 4294901760
          %2795 = vmatpush1.msra.mxu0 %v2794
          %v2796 = vand.u32 %v657, 4294901760
          %2797 = vmatprep.subr.mxu0 %v2796
          %v2798 = vand.u32 %v656, 4294901760
          %2799 = vmatpush1.msra.mxu0 %v2798
          %v2800 = vand.u32 %v659, 4294901760
          %2801 = vmatprep.subr.mxu0 %v2800
          %v2802 = vand.u32 %v658, 4294901760
          %2803 = vmatpush1.msra.mxu0 %v2802
          %v2804 = vand.u32 %v661, 4294901760
          %2805 = vmatprep.subr.mxu0 %v2804
          %v2806 = vand.u32 %v660, 4294901760
          %2807 = vmatpush1.msra.mxu0 %v2806
          %v2808 = vand.u32 %v663, 4294901760
          %2809 = vmatprep.subr.mxu0 %v2808
          %v2810 = vand.u32 %v662, 4294901760
          %2811 = vmatpush1.msra.mxu0 %v2810
          %v2812 = vand.u32 %v665, 4294901760
          %2813 = vmatprep.subr.mxu0 %v2812
          %v2814 = vand.u32 %v664, 4294901760
          %2815 = vmatpush1.msra.mxu0 %v2814
          %v2816 = vand.u32 %v667, 4294901760
          %2817 = vmatprep.subr.mxu0 %v2816
          %v2818 = vand.u32 %v666, 4294901760
          %2819 = vmatpush1.msra.mxu0 %v2818
          %v2820 = vand.u32 %v669, 4294901760
          %2821 = vmatprep.subr.mxu0 %v2820
          %v2822 = vand.u32 %v668, 4294901760
          %2823 = vmatpush1.msra.mxu0 %v2822
          %v2824 = vand.u32 %v671, 4294901760
          %2825 = vmatprep.subr.mxu0 %v2824
          %v2826 = vand.u32 %v670, 4294901760
          %2827 = vmatpush1.msra.mxu0 %v2826
          %v2828 = vand.u32 %v673, 4294901760
          %2829 = vmatprep.subr.mxu0 %v2828
          %v2830 = vand.u32 %v672, 4294901760
          %2831 = vmatpush1.msra.mxu0 %v2830
          %v2832 = vand.u32 %v675, 4294901760
          %2833 = vmatprep.subr.mxu0 %v2832
          %v2834 = vand.u32 %v674, 4294901760
          %2835 = vmatpush1.msra.mxu0 %v2834
          %v2836 = vand.u32 %v677, 4294901760
          %2837 = vmatprep.subr.mxu0 %v2836
          %v2838 = vand.u32 %v676, 4294901760
          %2839 = vmatpush1.msra.mxu0 %v2838
          %v2840 = vand.u32 %v679, 4294901760
          %2841 = vmatprep.subr.mxu0 %v2840
          %v2842 = vand.u32 %v678, 4294901760
          %2843 = vmatpush1.msra.mxu0 %v2842
          %v2844 = vand.u32 %v681, 4294901760
          %2845 = vmatprep.subr.mxu0 %v2844
          %v2846 = vand.u32 %v680, 4294901760
          %2847 = vmatpush1.msra.mxu0 %v2846
          %v2848 = vand.u32 %v683, 4294901760
          %2849 = vmatprep.subr.mxu0 %v2848
          %v2850 = vand.u32 %v682, 4294901760
          %2851 = vmatpush1.msra.mxu0 %v2850
          %v2852 = vand.u32 %v685, 4294901760
          %2853 = vmatprep.subr.mxu0 %v2852
          %v2854 = vand.u32 %v684, 4294901760
          %2855 = vmatpush1.msra.mxu0 %v2854
          %v2856 = vand.u32 %v687, 4294901760
          %2857 = vmatprep.subr.mxu0 %v2856
          %v2858 = vand.u32 %v686, 4294901760
          %2859 = vmatpush1.msra.mxu0 %v2858
          %v2860 = vand.u32 %v689, 4294901760
          %2861 = vmatprep.subr.mxu0 %v2860
          %v2862 = vand.u32 %v688, 4294901760
          %2863 = vmatpush1.msra.mxu0 %v2862
          %v2864 = vand.u32 %v691, 4294901760
          %2865 = vmatprep.subr.mxu0 %v2864
          %v2866 = vand.u32 %v690, 4294901760
          %2867 = vmatpush1.msra.mxu0 %v2866
          %v2868 = vand.u32 %v693, 4294901760
          %2869 = vmatprep.subr.mxu0 %v2868
          %v2870 = vand.u32 %v692, 4294901760
          %2871 = vmatpush1.msra.mxu0 %v2870
          %v2872 = vand.u32 %v695, 4294901760
          %2873 = vmatprep.subr.mxu0 %v2872
          %v2874 = vand.u32 %v694, 4294901760
          %2875 = vmatpush1.msra.mxu0 %v2874
          %v2876 = vand.u32 %v697, 4294901760
          %2877 = vmatprep.subr.mxu0 %v2876
          %v2878 = vand.u32 %v696, 4294901760
          %2879 = vmatpush1.msra.mxu0 %v2878
          %v2880 = vand.u32 %v724, 4294901760
          %v2881 = vsub.f32 %v724, %v2880
          %v2882 = vand.u32 %v2881, 4294901760
          %2883 = vmatprep.mubr.f32.mxu0 %v2882
          %v2884 = vand.u32 %v723, 4294901760
          %v2885 = vsub.f32 %v723, %v2884
          %v2886 = vand.u32 %v2885, 4294901760
          %2887 = vmatmul.mubr.f32.gmra.mrb[0].mxu0 %v2886
          %v2888 = vpop.f32.mrb[0].mxu0
          %v2889 = vadd.f32 %v2748, %v2888
          %v2890 = vpop.f32.mrb[0].mxu0
          %v2891 = vadd.f32 %v2750, %v2890
          %2892 = vdwg.mxu0
          %v2893 = vand.u32 %v635, 4294901760
          %v2894 = vsub.f32 %v635, %v2893
          %v2895 = vand.u32 %v2894, 4294901760
          %2896 = vmatprep.subr.mxu0 %v2895
          %v2897 = vand.u32 %v634, 4294901760
          %v2898 = vsub.f32 %v634, %v2897
          %v2899 = vand.u32 %v2898, 4294901760
          %2900 = vmatpush1.msra.mxu0 %v2899
          %v2901 = vand.u32 %v637, 4294901760
          %v2902 = vsub.f32 %v637, %v2901
          %v2903 = vand.u32 %v2902, 4294901760
          %2904 = vmatprep.subr.mxu0 %v2903
          %v2905 = vand.u32 %v636, 4294901760
          %v2906 = vsub.f32 %v636, %v2905
          %v2907 = vand.u32 %v2906, 4294901760
          %2908 = vmatpush1.msra.mxu0 %v2907
          %v2909 = vand.u32 %v639, 4294901760
          %v2910 = vsub.f32 %v639, %v2909
          %v2911 = vand.u32 %v2910, 4294901760
          %2912 = vmatprep.subr.mxu0 %v2911
          %v2913 = vand.u32 %v638, 4294901760
          %v2914 = vsub.f32 %v638, %v2913
          %v2915 = vand.u32 %v2914, 4294901760
          %2916 = vmatpush1.msra.mxu0 %v2915
          %v2917 = vand.u32 %v641, 4294901760
          %v2918 = vsub.f32 %v641, %v2917
          %v2919 = vand.u32 %v2918, 4294901760
          %2920 = vmatprep.subr.mxu0 %v2919
          %v2921 = vand.u32 %v640, 4294901760
          %v2922 = vsub.f32 %v640, %v2921
          %v2923 = vand.u32 %v2922, 4294901760
          %2924 = vmatpush1.msra.mxu0 %v2923
          %v2925 = vand.u32 %v643, 4294901760
          %v2926 = vsub.f32 %v643, %v2925
          %v2927 = vand.u32 %v2926, 4294901760
          %2928 = vmatprep.subr.mxu0 %v2927
          %v2929 = vand.u32 %v642, 4294901760
          %v2930 = vsub.f32 %v642, %v2929
          %v2931 = vand.u32 %v2930, 4294901760
          %2932 = vmatpush1.msra.mxu0 %v2931
          %v2933 = vand.u32 %v645, 4294901760
          %v2934 = vsub.f32 %v645, %v2933
          %v2935 = vand.u32 %v2934, 4294901760
          %2936 = vmatprep.subr.mxu0 %v2935
          %v2937 = vand.u32 %v644, 4294901760
          %v2938 = vsub.f32 %v644, %v2937
          %v2939 = vand.u32 %v2938, 4294901760
          %2940 = vmatpush1.msra.mxu0 %v2939
          %v2941 = vand.u32 %v647, 4294901760
          %v2942 = vsub.f32 %v647, %v2941
          %v2943 = vand.u32 %v2942, 4294901760
          %2944 = vmatprep.subr.mxu0 %v2943
          %v2945 = vand.u32 %v646, 4294901760
          %v2946 = vsub.f32 %v646, %v2945
          %v2947 = vand.u32 %v2946, 4294901760
          %2948 = vmatpush1.msra.mxu0 %v2947
          %v2949 = vand.u32 %v649, 4294901760
          %v2950 = vsub.f32 %v649, %v2949
          %v2951 = vand.u32 %v2950, 4294901760
          %2952 = vmatprep.subr.mxu0 %v2951
          %v2953 = vand.u32 %v648, 4294901760
          %v2954 = vsub.f32 %v648, %v2953
          %v2955 = vand.u32 %v2954, 4294901760
          %2956 = vmatpush1.msra.mxu0 %v2955
          %v2957 = vand.u32 %v651, 4294901760
          %v2958 = vsub.f32 %v651, %v2957
          %v2959 = vand.u32 %v2958, 4294901760
          %2960 = vmatprep.subr.mxu0 %v2959
          %v2961 = vand.u32 %v650, 4294901760
          %v2962 = vsub.f32 %v650, %v2961
          %v2963 = vand.u32 %v2962, 4294901760
          %2964 = vmatpush1.msra.mxu0 %v2963
          %v2965 = vand.u32 %v653, 4294901760
          %v2966 = vsub.f32 %v653, %v2965
          %v2967 = vand.u32 %v2966, 4294901760
          %2968 = vmatprep.subr.mxu0 %v2967
          %v2969 = vand.u32 %v652, 4294901760
          %v2970 = vsub.f32 %v652, %v2969
          %v2971 = vand.u32 %v2970, 4294901760
          %2972 = vmatpush1.msra.mxu0 %v2971
          %v2973 = vand.u32 %v655, 4294901760
          %v2974 = vsub.f32 %v655, %v2973
          %v2975 = vand.u32 %v2974, 4294901760
          %2976 = vmatprep.subr.mxu0 %v2975
          %v2977 = vand.u32 %v654, 4294901760
          %v2978 = vsub.f32 %v654, %v2977
          %v2979 = vand.u32 %v2978, 4294901760
          %2980 = vmatpush1.msra.mxu0 %v2979
          %v2981 = vand.u32 %v657, 4294901760
          %v2982 = vsub.f32 %v657, %v2981
          %v2983 = vand.u32 %v2982, 4294901760
          %2984 = vmatprep.subr.mxu0 %v2983
          %v2985 = vand.u32 %v656, 4294901760
          %v2986 = vsub.f32 %v656, %v2985
          %v2987 = vand.u32 %v2986, 4294901760
          %2988 = vmatpush1.msra.mxu0 %v2987
          %v2989 = vand.u32 %v659, 4294901760
          %v2990 = vsub.f32 %v659, %v2989
          %v2991 = vand.u32 %v2990, 4294901760
          %2992 = vmatprep.subr.mxu0 %v2991
          %v2993 = vand.u32 %v658, 4294901760
          %v2994 = vsub.f32 %v658, %v2993
          %v2995 = vand.u32 %v2994, 4294901760
          %2996 = vmatpush1.msra.mxu0 %v2995
          %v2997 = vand.u32 %v661, 4294901760
          %v2998 = vsub.f32 %v661, %v2997
          %v2999 = vand.u32 %v2998, 4294901760
          %3000 = vmatprep.subr.mxu0 %v2999
          %v3001 = vand.u32 %v660, 4294901760
          %v3002 = vsub.f32 %v660, %v3001
          %v3003 = vand.u32 %v3002, 4294901760
          %3004 = vmatpush1.msra.mxu0 %v3003
          %v3005 = vand.u32 %v663, 4294901760
          %v3006 = vsub.f32 %v663, %v3005
          %v3007 = vand.u32 %v3006, 4294901760
          %3008 = vmatprep.subr.mxu0 %v3007
          %v3009 = vand.u32 %v662, 4294901760
          %v3010 = vsub.f32 %v662, %v3009
          %v3011 = vand.u32 %v3010, 4294901760
          %3012 = vmatpush1.msra.mxu0 %v3011
          %v3013 = vand.u32 %v665, 4294901760
          %v3014 = vsub.f32 %v665, %v3013
          %v3015 = vand.u32 %v3014, 4294901760
          %3016 = vmatprep.subr.mxu0 %v3015
          %v3017 = vand.u32 %v664, 4294901760
          %v3018 = vsub.f32 %v664, %v3017
          %v3019 = vand.u32 %v3018, 4294901760
          %3020 = vmatpush1.msra.mxu0 %v3019
          %v3021 = vand.u32 %v667, 4294901760
          %v3022 = vsub.f32 %v667, %v3021
          %v3023 = vand.u32 %v3022, 4294901760
          %3024 = vmatprep.subr.mxu0 %v3023
          %v3025 = vand.u32 %v666, 4294901760
          %v3026 = vsub.f32 %v666, %v3025
          %v3027 = vand.u32 %v3026, 4294901760
          %3028 = vmatpush1.msra.mxu0 %v3027
          %v3029 = vand.u32 %v669, 4294901760
          %v3030 = vsub.f32 %v669, %v3029
          %v3031 = vand.u32 %v3030, 4294901760
          %3032 = vmatprep.subr.mxu0 %v3031
          %v3033 = vand.u32 %v668, 4294901760
          %v3034 = vsub.f32 %v668, %v3033
          %v3035 = vand.u32 %v3034, 4294901760
          %3036 = vmatpush1.msra.mxu0 %v3035
          %v3037 = vand.u32 %v671, 4294901760
          %v3038 = vsub.f32 %v671, %v3037
          %v3039 = vand.u32 %v3038, 4294901760
          %3040 = vmatprep.subr.mxu0 %v3039
          %v3041 = vand.u32 %v670, 4294901760
          %v3042 = vsub.f32 %v670, %v3041
          %v3043 = vand.u32 %v3042, 4294901760
          %3044 = vmatpush1.msra.mxu0 %v3043
          %v3045 = vand.u32 %v673, 4294901760
          %v3046 = vsub.f32 %v673, %v3045
          %v3047 = vand.u32 %v3046, 4294901760
          %3048 = vmatprep.subr.mxu0 %v3047
          %v3049 = vand.u32 %v672, 4294901760
          %v3050 = vsub.f32 %v672, %v3049
          %v3051 = vand.u32 %v3050, 4294901760
          %3052 = vmatpush1.msra.mxu0 %v3051
          %v3053 = vand.u32 %v675, 4294901760
          %v3054 = vsub.f32 %v675, %v3053
          %v3055 = vand.u32 %v3054, 4294901760
          %3056 = vmatprep.subr.mxu0 %v3055
          %v3057 = vand.u32 %v674, 4294901760
          %v3058 = vsub.f32 %v674, %v3057
          %v3059 = vand.u32 %v3058, 4294901760
          %3060 = vmatpush1.msra.mxu0 %v3059
          %v3061 = vand.u32 %v677, 4294901760
          %v3062 = vsub.f32 %v677, %v3061
          %v3063 = vand.u32 %v3062, 4294901760
          %3064 = vmatprep.subr.mxu0 %v3063
          %v3065 = vand.u32 %v676, 4294901760
          %v3066 = vsub.f32 %v676, %v3065
          %v3067 = vand.u32 %v3066, 4294901760
          %3068 = vmatpush1.msra.mxu0 %v3067
          %v3069 = vand.u32 %v679, 4294901760
          %v3070 = vsub.f32 %v679, %v3069
          %v3071 = vand.u32 %v3070, 4294901760
          %3072 = vmatprep.subr.mxu0 %v3071
          %v3073 = vand.u32 %v678, 4294901760
          %v3074 = vsub.f32 %v678, %v3073
          %v3075 = vand.u32 %v3074, 4294901760
          %3076 = vmatpush1.msra.mxu0 %v3075
          %v3077 = vand.u32 %v681, 4294901760
          %v3078 = vsub.f32 %v681, %v3077
          %v3079 = vand.u32 %v3078, 4294901760
          %3080 = vmatprep.subr.mxu0 %v3079
          %v3081 = vand.u32 %v680, 4294901760
          %v3082 = vsub.f32 %v680, %v3081
          %v3083 = vand.u32 %v3082, 4294901760
          %3084 = vmatpush1.msra.mxu0 %v3083
          %v3085 = vand.u32 %v683, 4294901760
          %v3086 = vsub.f32 %v683, %v3085
          %v3087 = vand.u32 %v3086, 4294901760
          %3088 = vmatprep.subr.mxu0 %v3087
          %v3089 = vand.u32 %v682, 4294901760
          %v3090 = vsub.f32 %v682, %v3089
          %v3091 = vand.u32 %v3090, 4294901760
          %3092 = vmatpush1.msra.mxu0 %v3091
          %v3093 = vand.u32 %v685, 4294901760
          %v3094 = vsub.f32 %v685, %v3093
          %v3095 = vand.u32 %v3094, 4294901760
          %3096 = vmatprep.subr.mxu0 %v3095
          %v3097 = vand.u32 %v684, 4294901760
          %v3098 = vsub.f32 %v684, %v3097
          %v3099 = vand.u32 %v3098, 4294901760
          %3100 = vmatpush1.msra.mxu0 %v3099
          %v3101 = vand.u32 %v687, 4294901760
          %v3102 = vsub.f32 %v687, %v3101
          %v3103 = vand.u32 %v3102, 4294901760
          %3104 = vmatprep.subr.mxu0 %v3103
          %v3105 = vand.u32 %v686, 4294901760
          %v3106 = vsub.f32 %v686, %v3105
          %v3107 = vand.u32 %v3106, 4294901760
          %3108 = vmatpush1.msra.mxu0 %v3107
          %v3109 = vand.u32 %v689, 4294901760
          %v3110 = vsub.f32 %v689, %v3109
          %v3111 = vand.u32 %v3110, 4294901760
          %3112 = vmatprep.subr.mxu0 %v3111
          %v3113 = vand.u32 %v688, 4294901760
          %v3114 = vsub.f32 %v688, %v3113
          %v3115 = vand.u32 %v3114, 4294901760
          %3116 = vmatpush1.msra.mxu0 %v3115
          %v3117 = vand.u32 %v691, 4294901760
          %v3118 = vsub.f32 %v691, %v3117
          %v3119 = vand.u32 %v3118, 4294901760
          %3120 = vmatprep.subr.mxu0 %v3119
          %v3121 = vand.u32 %v690, 4294901760
          %v3122 = vsub.f32 %v690, %v3121
          %v3123 = vand.u32 %v3122, 4294901760
          %3124 = vmatpush1.msra.mxu0 %v3123
          %v3125 = vand.u32 %v693, 4294901760
          %v3126 = vsub.f32 %v693, %v3125
          %v3127 = vand.u32 %v3126, 4294901760
          %3128 = vmatprep.subr.mxu0 %v3127
          %v3129 = vand.u32 %v692, 4294901760
          %v3130 = vsub.f32 %v692, %v3129
          %v3131 = vand.u32 %v3130, 4294901760
          %3132 = vmatpush1.msra.mxu0 %v3131
          %v3133 = vand.u32 %v695, 4294901760
          %v3134 = vsub.f32 %v695, %v3133
          %v3135 = vand.u32 %v3134, 4294901760
          %3136 = vmatprep.subr.mxu0 %v3135
          %v3137 = vand.u32 %v694, 4294901760
          %v3138 = vsub.f32 %v694, %v3137
          %v3139 = vand.u32 %v3138, 4294901760
          %3140 = vmatpush1.msra.mxu0 %v3139
          %v3141 = vand.u32 %v697, 4294901760
          %v3142 = vsub.f32 %v697, %v3141
          %v3143 = vand.u32 %v3142, 4294901760
          %3144 = vmatprep.subr.mxu0 %v3143
          %v3145 = vand.u32 %v696, 4294901760
          %v3146 = vsub.f32 %v696, %v3145
          %v3147 = vand.u32 %v3146, 4294901760
          %3148 = vmatpush1.msra.mxu0 %v3147
          %v3149 = vand.u32 %v724, 4294901760
          %3150 = vmatprep.mubr.f32.mxu0 %v3149
          %v3151 = vand.u32 %v723, 4294901760
          %3152 = vmatmul.mubr.f32.gmra.mrb[0].mxu0 %v3151
          %v3153 = vpop.f32.mrb[0].mxu0
          %v3154 = vadd.f32 %v2889, %v3153
          %v3155 = vpop.f32.mrb[0].mxu0
          %v3156 = vadd.f32 %v2891, %v3155
          %3157 = vdwg.mxu0
          %v3158 = vand.u32 %v635, 4294901760
          %3159 = vmatprep.subr.mxu0 %v3158
          %v3160 = vand.u32 %v634, 4294901760
          %3161 = vmatpush1.msra.mxu0 %v3160
          %v3162 = vand.u32 %v637, 4294901760
          %3163 = vmatprep.subr.mxu0 %v3162
          %v3164 = vand.u32 %v636, 4294901760
          %3165 = vmatpush1.msra.mxu0 %v3164
          %v3166 = vand.u32 %v639, 4294901760
          %3167 = vmatprep.subr.mxu0 %v3166
          %v3168 = vand.u32 %v638, 4294901760
          %3169 = vmatpush1.msra.mxu0 %v3168
          %v3170 = vand.u32 %v641, 4294901760
          %3171 = vmatprep.subr.mxu0 %v3170
          %v3172 = vand.u32 %v640, 4294901760
          %3173 = vmatpush1.msra.mxu0 %v3172
          %v3174 = vand.u32 %v643, 4294901760
          %3175 = vmatprep.subr.mxu0 %v3174
          %v3176 = vand.u32 %v642, 4294901760
          %3177 = vmatpush1.msra.mxu0 %v3176
          %v3178 = vand.u32 %v645, 4294901760
          %3179 = vmatprep.subr.mxu0 %v3178
          %v3180 = vand.u32 %v644, 4294901760
          %3181 = vmatpush1.msra.mxu0 %v3180
          %v3182 = vand.u32 %v647, 4294901760
          %3183 = vmatprep.subr.mxu0 %v3182
          %v3184 = vand.u32 %v646, 4294901760
          %3185 = vmatpush1.msra.mxu0 %v3184
          %v3186 = vand.u32 %v649, 4294901760
          %3187 = vmatprep.subr.mxu0 %v3186
          %v3188 = vand.u32 %v648, 4294901760
          %3189 = vmatpush1.msra.mxu0 %v3188
          %v3190 = vand.u32 %v651, 4294901760
          %3191 = vmatprep.subr.mxu0 %v3190
          %v3192 = vand.u32 %v650, 4294901760
          %3193 = vmatpush1.msra.mxu0 %v3192
          %v3194 = vand.u32 %v653, 4294901760
          %3195 = vmatprep.subr.mxu0 %v3194
          %v3196 = vand.u32 %v652, 4294901760
          %3197 = vmatpush1.msra.mxu0 %v3196
          %v3198 = vand.u32 %v655, 4294901760
          %3199 = vmatprep.subr.mxu0 %v3198
          %v3200 = vand.u32 %v654, 4294901760
          %3201 = vmatpush1.msra.mxu0 %v3200
          %v3202 = vand.u32 %v657, 4294901760
          %3203 = vmatprep.subr.mxu0 %v3202
          %v3204 = vand.u32 %v656, 4294901760
          %3205 = vmatpush1.msra.mxu0 %v3204
          %v3206 = vand.u32 %v659, 4294901760
          %3207 = vmatprep.subr.mxu0 %v3206
          %v3208 = vand.u32 %v658, 4294901760
          %3209 = vmatpush1.msra.mxu0 %v3208
          %v3210 = vand.u32 %v661, 4294901760
          %3211 = vmatprep.subr.mxu0 %v3210
          %v3212 = vand.u32 %v660, 4294901760
          %3213 = vmatpush1.msra.mxu0 %v3212
          %v3214 = vand.u32 %v663, 4294901760
          %3215 = vmatprep.subr.mxu0 %v3214
          %v3216 = vand.u32 %v662, 4294901760
          %3217 = vmatpush1.msra.mxu0 %v3216
          %v3218 = vand.u32 %v665, 4294901760
          %3219 = vmatprep.subr.mxu0 %v3218
          %v3220 = vand.u32 %v664, 4294901760
          %3221 = vmatpush1.msra.mxu0 %v3220
          %v3222 = vand.u32 %v667, 4294901760
          %3223 = vmatprep.subr.mxu0 %v3222
          %v3224 = vand.u32 %v666, 4294901760
          %3225 = vmatpush1.msra.mxu0 %v3224
          %v3226 = vand.u32 %v669, 4294901760
          %3227 = vmatprep.subr.mxu0 %v3226
          %v3228 = vand.u32 %v668, 4294901760
          %3229 = vmatpush1.msra.mxu0 %v3228
          %v3230 = vand.u32 %v671, 4294901760
          %3231 = vmatprep.subr.mxu0 %v3230
          %v3232 = vand.u32 %v670, 4294901760
          %3233 = vmatpush1.msra.mxu0 %v3232
          %v3234 = vand.u32 %v673, 4294901760
          %3235 = vmatprep.subr.mxu0 %v3234
          %v3236 = vand.u32 %v672, 4294901760
          %3237 = vmatpush1.msra.mxu0 %v3236
          %v3238 = vand.u32 %v675, 4294901760
          %3239 = vmatprep.subr.mxu0 %v3238
          %v3240 = vand.u32 %v674, 4294901760
          %3241 = vmatpush1.msra.mxu0 %v3240
          %v3242 = vand.u32 %v677, 4294901760
          %3243 = vmatprep.subr.mxu0 %v3242
          %v3244 = vand.u32 %v676, 4294901760
          %3245 = vmatpush1.msra.mxu0 %v3244
          %v3246 = vand.u32 %v679, 4294901760
          %3247 = vmatprep.subr.mxu0 %v3246
          %v3248 = vand.u32 %v678, 4294901760
          %3249 = vmatpush1.msra.mxu0 %v3248
          %v3250 = vand.u32 %v681, 4294901760
          %3251 = vmatprep.subr.mxu0 %v3250
          %v3252 = vand.u32 %v680, 4294901760
          %3253 = vmatpush1.msra.mxu0 %v3252
          %v3254 = vand.u32 %v683, 4294901760
          %3255 = vmatprep.subr.mxu0 %v3254
          %v3256 = vand.u32 %v682, 4294901760
          %3257 = vmatpush1.msra.mxu0 %v3256
          %v3258 = vand.u32 %v685, 4294901760
          %3259 = vmatprep.subr.mxu0 %v3258
          %v3260 = vand.u32 %v684, 4294901760
          %3261 = vmatpush1.msra.mxu0 %v3260
          %v3262 = vand.u32 %v687, 4294901760
          %3263 = vmatprep.subr.mxu0 %v3262
          %v3264 = vand.u32 %v686, 4294901760
          %3265 = vmatpush1.msra.mxu0 %v3264
          %v3266 = vand.u32 %v689, 4294901760
          %3267 = vmatprep.subr.mxu0 %v3266
          %v3268 = vand.u32 %v688, 4294901760
          %3269 = vmatpush1.msra.mxu0 %v3268
          %v3270 = vand.u32 %v691, 4294901760
          %3271 = vmatprep.subr.mxu0 %v3270
          %v3272 = vand.u32 %v690, 4294901760
          %3273 = vmatpush1.msra.mxu0 %v3272
          %v3274 = vand.u32 %v693, 4294901760
          %3275 = vmatprep.subr.mxu0 %v3274
          %v3276 = vand.u32 %v692, 4294901760
          %3277 = vmatpush1.msra.mxu0 %v3276
          %v3278 = vand.u32 %v695, 4294901760
          %3279 = vmatprep.subr.mxu0 %v3278
          %v3280 = vand.u32 %v694, 4294901760
          %3281 = vmatpush1.msra.mxu0 %v3280
          %v3282 = vand.u32 %v697, 4294901760
          %3283 = vmatprep.subr.mxu0 %v3282
          %v3284 = vand.u32 %v696, 4294901760
          %3285 = vmatpush1.msra.mxu0 %v3284
          %v3286 = vand.u32 %v724, 4294901760
          %3287 = vmatprep.mubr.f32.mxu0 %v3286
          %v3288 = vand.u32 %v723, 4294901760
          %3289 = vmatmul.mubr.f32.gmra.mrb[0].mxu0 %v3288
          %v3290 = vpop.f32.mrb[0].mxu0
          %v3291 = vadd.f32 %v3154, %v3290
          %v3292 = vpop.f32.mrb[0].mxu0
          %v3293 = vadd.f32 %v3156, %v3292
          %3294 = vdwg.mxu0
          %v3295 = vadd.f32 %v725, %v3291
          %v3296 = vadd.f32 %v726, %v3293
          %3297 = vst [vmem:[#allocation2] sm:$0xff] %v3295
          %3298 = vst [vmem:[#allocation2 + $0x8] sm:$0xff] %v3296
        $region40: #{tpu_custom_call.1} parent=27 // pred_fallthru
          _
        %p3299 = scmp.eq.s32.totalorder %s26, 1
        // Predicated region
        $region41: #{tpu_custom_call.1} parent=27 // pred_check
          %p3300 = pneg %p3299
        $region42: #{tpu_custom_call.1} parent=27 // pred_check_branch
          %3302 = sbr.rel (%p3300) target = $region44
        $region43: #{tpu_custom_call.1} parent=27 // pred_region
          %v3303 = vld [vmem:[#allocation2] sm:$0xff]
          %v3304 = vld [vmem:[#allocation2 + $0x8] sm:$0xff]
          %3305 = vst [vmem:[#allocation9] sm:$0xff] %v3303
          %3306 = vst [vmem:[#allocation9 + $0x8] sm:$0xff] %v3304
        $region44: #{tpu_custom_call.1} parent=27 // pred_fallthru
          _
        // Predicated region
        $region45: #{tpu_custom_call.1} parent=27 // pred_check
          %p3307 = pneg %p115
        $region46: #{tpu_custom_call.1} parent=27 // pred_check_branch
          %3309 = sbr.rel (%p3307) target = $region48
        $region47: #{tpu_custom_call.1} parent=27 // pred_region
          %s3310 = smul.u32 2, %s25
          %s3312 = ssub.s32 256, 256
          %3313 = vsyncadd [#allocation8], %s3312
          %s3314 = smul.addr %s3310, 128
          %s3315 = scalar_lea.hbm %s4, %s3314
          %s3317 = sshll.u32 [#allocation9], 4
          %s3318 = int_to_ptr.vmem [resolvable:$true] %s3317
          %3320 = dma.vmem_to_hbm [thread:$0]  %s3318, 256, %s3315, [#allocation8]
        $region48: #{tpu_custom_call.1} parent=27 // pred_fallthru
          _
        // Predicated region
        $region49: #{tpu_custom_call.1} parent=27 // pred_check
          %p3321 = pneg %p115
        $region50: #{tpu_custom_call.1} parent=27 // pred_check_branch
          %3323 = sbr.rel (%p3321) target = $region52
        $region51: #{tpu_custom_call.1} parent=27 // pred_region
          %3324 = dma.done [#allocation8], 256
        $region52: #{tpu_custom_call.1} parent=27 // pred_fallthru
          _
      $region28: #{tpu_custom_call.1} parent=5 // pred_fallthru
        _
      %p3325 = scmp.le.s32.totalorder 2, %s16
      // Predicated region
      $region53: #{tpu_custom_call.1} parent=5 // pred_check
        %p3326 = pneg %p3325
      $region54: #{tpu_custom_call.1} parent=5 // pred_check_branch
        %3328 = sbr.rel (%p3326) target = $region56
      $region55: #{tpu_custom_call.1} parent=5 // pred_region
        %s3329 = ssub.s32 %s16, 2
      $region56: #{tpu_custom_call.1} parent=5 // pred_fallthru
        _
    $region6: #{tpu_custom_call.1} parent=1 // loop_footer
      %s20 = sadd.s32 1, %s16
    $region7: #{tpu_custom_call.1} parent=1 // loop_footer_branch
      %15 = sbr.rel target = $region3
    $region8: #{tpu_custom_call.1} parent=1 // loop_exit
      _
    %3330 = vsyncpa [#allocation7], 1
    %s3331 = scalar_lea.sflag [#allocation7], 1
    %3332 = vsyncpa %s3331, 1
    %3333 = vsyncpa [#allocation8], 1
    %s3334 = scalar_lea.sflag [#allocation8], 1
    %3335 = vsyncpa %s3334, 1

</llo_original>
